<compile_context>
chip_gen: v6e
topology: v6e:2x2x1
jax: 0.10.0
libtpu: 0.0.40
codegen_flags: <defaults>
</compile_context>

<pallas_src>
import functools
import math

import jax
import jax.numpy as jnp
from jax.experimental import pallas as pl
from jax.experimental.pallas import tpu as pltpu


PARAM_ORDER = (
    "w_in", "w_sq", "w_skip", "b_hidden",
    "w_bot", "b_bot",
    "w_sigma", "b_sigma",
    "w_rgb_a", "w_rgb_b", "b_rgb0",
    "w_out", "b_out",
)


def _round_up(n, m):
    return ((n + m - 1) // m) * m


def _skip_consumer_layers(net_depth, skip_layer):
    """Layers whose input is concat([prev_activation, inputs]) in the reference."""
    if skip_layer is None:
        return ()
    return tuple(
        i + 1 for i in range(net_depth)
        if (i % skip_layer == 0) and (i > 0) and (i + 1 < net_depth)
    )


# ----------------------------------------------------------------------------
# Kernel
# ----------------------------------------------------------------------------
def nerf_mlp_kernel(
    xc_ref,
    win_ref, wsq_ref, wskip_ref, bh_ref,
    wbot_ref, bbot_ref,
    wsig_ref, bsig_ref,
    wra_ref, wrb_ref, br0_ref,
    wo_ref, bo_ref,
    out_ref,
    *, net_depth, skip_consumers,
):
    """Full NerfMLP forward for one batch tile (everything resident in VMEM)."""
    f32 = jnp.float32
    xc = xc_ref[...]                    # (tm, d_in + d_cond) bf16, packed [x | cond]
    act_dtype = xc.dtype

    # --- base MLP; skip connection realized as a split matmul (no lane concat).
    # w_in / w_skip have exact-zero rows for the condition half of the packed
    # input, so dotting with the full packed tile is identical to dotting x only.
    acc = jnp.dot(xc, win_ref[...], preferred_element_type=f32) + bh_ref[0]
    x = jnp.maximum(acc, 0.0).astype(act_dtype)

    sk = 0
    for i in range(1, net_depth):
        acc = jnp.dot(x, wsq_ref[i - 1], preferred_element_type=f32)
        if i in skip_consumers:
            acc = acc + jnp.dot(xc, wskip_ref[sk], preferred_element_type=f32)
            sk += 1
        acc = acc + bh_ref[i]
        # bias + ReLU on the f32 accumulator, then cast back for the next matmul
        x = jnp.maximum(acc, 0.0).astype(act_dtype)

    # --- sigma head off the MXU: VPU multiply + cross-lane (XLU) sum ---
    raw_sigma = (
        jnp.sum(x.astype(f32) * wsig_ref[...], axis=-1, keepdims=True)
        + bsig_ref[...]
    )                                                    # (tm, 1) f32

    # --- bottleneck (no activation; DenseLayer output_activation = Identity) ---
    bottleneck = (
        jnp.dot(x, wbot_ref[...], preferred_element_type=f32) + bbot_ref[...]
    ).astype(act_dtype)                                  # (tm, net_width)

    # --- rgb MLP; [bottleneck | condition] concat realized as a split matmul.
    # w_rgb_b has zero rows for the x half of the packed input.
    acc = (jnp.dot(bottleneck, wra_ref[...], preferred_element_type=f32)
           + jnp.dot(xc, wrb_ref[...], preferred_element_type=f32)
           + br0_ref[...])
    h = jnp.maximum(acc, 0.0).astype(act_dtype)

    rgb4 = jnp.dot(h, wo_ref[...], preferred_element_type=f32) + bo_ref[...]  # (tm, 4)

    # single lane-packed output: lanes 0..2 = raw_rgb, lane 3 = raw_sigma
    # (VPU lane-select instead of a lane-axis concatenate)
    lane = jax.lax.broadcasted_iota(jnp.int32, rgb4.shape, 1)
    out_ref[...] = jnp.where(lane == 3, raw_sigma, rgb4).astype(out_ref.dtype)


# ----------------------------------------------------------------------------
# Parameter construction (xavier_uniform weights, zero biases)
# ----------------------------------------------------------------------------
def _xavier_uniform(key, fan_in, fan_out, dtype=jnp.float32):
    bound = math.sqrt(6.0 / (fan_in + fan_out))
    return jax.random.uniform(key, (fan_in, fan_out), dtype, -bound, bound)


def init_nerf_mlp_params(
    key,
    input_dim,
    condition_dim,
    *,
    net_depth=8,
    net_width=256,
    skip_layer=4,
    net_width_condition=128,
    weight_dtype=jnp.bfloat16,
):
    assert net_depth >= 2, "kernel assumes at least two base-MLP layers"
    assert condition_dim > 0, "kernel implements the conditioned (rgb MLP) branch"
    # heads must see a plain net_width feature vector (no concat after last layer)
    if skip_layer is not None:
        assert not ((net_depth - 1) > 0 and (net_depth - 1) % skip_layer == 0), (
            "trailing skip (concat after the final base layer) not supported"
        )  # TODO(synk): split the head weights too if this config is ever needed

    f32 = jnp.float32
    d_pack = input_dim + condition_dim
    skip_consumers = _skip_consumer_layers(net_depth, skip_layer)
    keys = jax.random.split(key, net_depth + 4)

    def pad_cond_rows(w):      # zero rows for the condition half of the packed input
        return jnp.concatenate([w, jnp.zeros((condition_dim, w.shape[1]), f32)], 0)

    # layer 0: input_dim -> net_width, embedded into packed-input rows
    w_in = pad_cond_rows(_xavier_uniform(keys[0], input_dim, net_width)).astype(weight_dtype)

    # layers 1..net_depth-1: square block (for x) + optional skip block (for inputs)
    w_sq, w_skip = [], []
    for i in range(1, net_depth):
        if i in skip_consumers:
            w_full = _xavier_uniform(keys[i], net_width + input_dim, net_width)
            w_sq.append(w_full[:net_width])
            w_skip.append(pad_cond_rows(w_full[net_width:]))
        else:
            w_sq.append(_xavier_uniform(keys[i], net_width, net_width))
    w_sq = jnp.stack(w_sq).astype(weight_dtype)
    if w_skip:
        w_skip = jnp.stack(w_skip).astype(weight_dtype)
    else:
        # dummy (never indexed when there are no skip-consumer layers)
        w_skip = jnp.zeros((1, d_pack, net_width), weight_dtype)

    b_hidden = jnp.zeros((net_depth, 1, net_width), f32)

    # bottleneck (no sigma padding anymore)
    w_bot = _xavier_uniform(keys[net_depth + 0], net_width, net_width).astype(weight_dtype)
    b_bot = jnp.zeros((1, net_width), f32)

    # sigma head kept in f32 as a broadcastable row vector (VPU/XLU path)
    w_sigma = _xavier_uniform(keys[net_depth + 1], net_width, 1).T.astype(f32)  # (1, net_width)
    b_sigma = jnp.zeros((1, 1), f32)

    # rgb hidden layer, split over [bottleneck | condition]; the condition part
    # is embedded into packed-input rows (zero rows for the x half)
    w_rgb0 = _xavier_uniform(
        keys[net_depth + 2], net_width + condition_dim, net_width_condition
    )
    w_rgb_a = w_rgb0[:net_width].astype(weight_dtype)
    w_rgb_b = jnp.concatenate(
        [jnp.zeros((input_dim, net_width_condition), f32), w_rgb0[net_width:]], axis=0
    ).astype(weight_dtype)
    b_rgb0 = jnp.zeros((1, net_width_condition), f32)

    # rgb output layer, padded to 4 lanes (column 3 is zero; overwritten by sigma)
    w_out3 = _xavier_uniform(keys[net_depth + 3], net_width_condition, 3)
    w_out = jnp.concatenate(
        [w_out3, jnp.zeros((net_width_condition, 1), f32)], axis=1
    ).astype(weight_dtype)
    b_out = jnp.zeros((1, 4), f32)

    return dict(
        w_in=w_in, w_sq=w_sq, w_skip=w_skip, b_hidden=b_hidden,
        w_bot=w_bot, b_bot=b_bot,
        w_sigma=w_sigma, b_sigma=b_sigma,
        w_rgb_a=w_rgb_a, w_rgb_b=w_rgb_b, b_rgb0=b_rgb0,
        w_out=w_out, b_out=b_out,
    )


# ----------------------------------------------------------------------------
# Wrapper
# ----------------------------------------------------------------------------
def nerf_mlp_forward(x, condition, params, *, net_depth=8, skip_layer=4, tm=2048):
    """x: (N, input_dim), condition: (N, condition_dim). Returns (raw_rgb, raw_sigma)."""
    N, d_in = x.shape
    n2, d_cond = condition.shape
    assert n2 == N
    d_pack = d_in + d_cond
    assert params["w_in"].shape[0] == d_pack
    skip_consumers = _skip_consumer_layers(net_depth, skip_layer)
    act_dtype = params["w_in"].dtype

    # pack [x | condition] once (bf16 MXU operands; f32 accumulation inside)
    xc = jnp.concatenate([x.astype(act_dtype), condition.astype(act_dtype)], axis=-1)

    # --- batch tile selection ---
    tm = _round_up(max(16, tm), 16)            # sublane granularity (bf16 tile = 16)
    tm = min(tm, _round_up(N, 16))             # don't exceed the (rounded) batch
    if _round_up(N, tm) // tm < 2:             # keep >=2 grid steps (v7x: 2 TensorCores)
        tm = max(16, _round_up((N + 1) // 2, 16))
    n_pad = _round_up(N, tm)
    if n_pad != N:
        xc = jnp.pad(xc, ((0, n_pad - N), (0, 0)))   # padded tail rows are discarded

    kernel = functools.partial(
        nerf_mlp_kernel,
        net_depth=net_depth,
        skip_consumers=skip_consumers,
    )

    ordered = [params[k] for k in PARAM_ORDER]
    in_specs = [pl.BlockSpec((tm, d_pack), lambda i: (i, 0))]   # packed input, tiled
    for p in ordered:
        # weights: replicated, resident, single-buffered (constant index_map)
        in_specs.append(
            pl.BlockSpec(
                p.shape,
                (lambda i, r=p.ndim: (0,) * r),
                pipeline_mode=pl.Buffered(1),
            )
        )

    out_specs = pl.BlockSpec((tm, 4), lambda i: (i, 0))          # [rgb(3) | sigma(1)]
    out_shape = jax.ShapeDtypeStruct((n_pad, 4), jnp.float32)

    out = pl.pallas_call(
        kernel,
        grid=(n_pad // tm,),
        in_specs=in_specs,
        out_specs=out_specs,
        out_shape=out_shape,
        compiler_params=pltpu.CompilerParams(
            # batch tiles are independent -> shard across TensorCores (v7x megacore)
            dimension_semantics=("parallel",),
            # headroom for (tm, net_width) f32 scratch at large tm
            vmem_limit_bytes=48 * 1024 * 1024,
        ),
    )(xc, *ordered)

    return out[:N, 0:3], out[:N, 3:4]


# ----------------------------------------------------------------------------
# Pure-JAX reference (original concat-based structure, same bf16 cast points)
# ----------------------------------------------------------------------------
def nerf_mlp_reference(x, condition, params, *, net_depth=8, skip_layer=4):
    f32 = jnp.float32
    act_dtype = params["w_in"].dtype
    net_width = params["w_sq"].shape[-1]
    d_in = x.shape[-1]
    skip_consumers = _skip_consumer_layers(net_depth, skip_layer)

    inputs = x.astype(act_dtype)
    cond = condition.astype(act_dtype)

    w_in = params["w_in"][:d_in]             # strip zero condition rows
    w_skip = params["w_skip"][:, :d_in]      # strip zero condition rows
    w_rgb_b = params["w_rgb_b"][d_in:]       # strip zero x rows

    h = inputs
    sk = 0
    for i in range(net_depth):
        if i == 0:
            w = w_in
        elif i in skip_consumers:
            w = jnp.concatenate([params["w_sq"][i - 1], w_skip[sk]], axis=0)
            sk += 1
        else:
            w = params["w_sq"][i - 1]
        acc = jnp.dot(h, w, preferred_element_type=f32) + params["b_hidden"][i]
        h = jnp.maximum(acc, 0.0).astype(act_dtype)
        if skip_layer is not None and i % skip_layer == 0 and i > 0:
            h = jnp.concatenate([h, inputs], axis=-1)

    raw_sigma = (jnp.dot(h.astype(f32), params["w_sigma"].reshape(net_width, 1))
                 + params["b_sigma"])
    bottleneck = (jnp.dot(h, params["w_bot"], preferred_element_type=f32)
                  + params["b_bot"]).astype(act_dtype)

    z = jnp.concatenate([bottleneck, cond], axis=-1)
    w_rgb0 = jnp.concatenate([params["w_rgb_a"], w_rgb_b], axis=0)
    z = jnp.maximum(
        jnp.dot(z, w_rgb0, preferred_element_type=f32) + params["b_rgb0"], 0.0
    ).astype(act_dtype)
    raw_rgb = (jnp.dot(z, params["w_out"][:, :3], preferred_element_type=f32)
               + params["b_out"][:, :3])
    return raw_rgb, raw_sigma


# ----------------------------------------------------------------------------
if __name__ == "__main__":
    # Small, lane-friendly shapes consistent with NerfMLP (scaled-down width).
    # NOTE: production should use net_width=256 (full MXU depth on v6e/v7x);
    # 128 here is only to keep the demo small.
    INPUT_DIM = 16
    CONDITION_DIM = 8
    NET_DEPTH = 8
    NET_WIDTH = 128
    SKIP_LAYER = 4
    NET_WIDTH_CONDITION = 128
    N = 300   # ragged; default tm=2048 clamps to 160 -> 2 grid steps + padded tail

    key = jax.random.PRNGKey(0)
    kp, kx, kc = jax.random.split(key, 3)

    params = init_nerf_mlp_params(
        kp, INPUT_DIM, CONDITION_DIM,
        net_depth=NET_DEPTH, net_width=NET_WIDTH, skip_layer=SKIP_LAYER,
        net_width_condition=NET_WIDTH_CONDITION,
    )

    x = jax.random.normal(kx, (N, INPUT_DIM), jnp.float32)
    # TODO(synk): PyTorch forward also broadcasts a (num_rays, d) condition over
    # per-ray samples via view/expand; here condition is already per-sample.
    condition = jax.random.normal(kc, (N, CONDITION_DIM), jnp.float32)

    rgb, sigma = nerf_mlp_forward(
        x, condition, params, net_depth=NET_DEPTH, skip_layer=SKIP_LAYER
    )
    rgb, sigma = jax.block_until_ready((rgb, sigma))

    rgb_ref, sigma_ref = nerf_mlp_reference(
        x, condition, params, net_depth=NET_DEPTH, skip_layer=SKIP_LAYER
    )
    assert rgb.shape == (N, 3) and sigma.shape == (N, 1)
    assert jnp.allclose(rgb, rgb_ref, rtol=2e-2, atol=2e-2), \
        float(jnp.max(jnp.abs(rgb - rgb_ref)))
    assert jnp.allclose(sigma, sigma_ref, rtol=2e-2, atol=2e-2), \
        float(jnp.max(jnp.abs(sigma - sigma_ref)))

    print("KERNEL_OK")
</pallas_src>

<mosaic_0001>
module attributes {stable_mosaic.version = 11 : i64} {
  func.func @nerf_mlp_kernel(%arg0: i32, %arg1: memref<160x24xbf16, #tpu.memory_space<vmem>>, %arg2: memref<24x128xbf16, #tpu.memory_space<vmem>>, %arg3: memref<7x128x128xbf16, #tpu.memory_space<vmem>>, %arg4: memref<1x24x128xbf16, #tpu.memory_space<vmem>>, %arg5: memref<8x1x128xf32, #tpu.memory_space<vmem>>, %arg6: memref<128x128xbf16, #tpu.memory_space<vmem>>, %arg7: memref<1x128xf32, #tpu.memory_space<vmem>>, %arg8: memref<1x128xf32, #tpu.memory_space<vmem>>, %arg9: memref<1x1xf32, #tpu.memory_space<vmem>>, %arg10: memref<128x128xbf16, #tpu.memory_space<vmem>>, %arg11: memref<24x128xbf16, #tpu.memory_space<vmem>>, %arg12: memref<1x128xf32, #tpu.memory_space<vmem>>, %arg13: memref<128x4xbf16, #tpu.memory_space<vmem>>, %arg14: memref<1x4xf32, #tpu.memory_space<vmem>>, %arg15: memref<160x4xf32, #tpu.memory_space<vmem>>) attributes {dimension_semantics = [#tpu.dimension_semantics<parallel>], iteration_bounds = array<i64: 2>, scalar_prefetch = 0 : i64, scratch_operands = 0 : i64, tpu.core_type = #tpu.core_type<tc>, window_params = [{transform_indices = @transform_0, window_bounds = array<i64: 160, 24>}, {pipeline_mode = #tpu.pipeline_mode<synchronous>, transform_indices = @transform_1, window_bounds = array<i64: 24, 128>}, {pipeline_mode = #tpu.pipeline_mode<synchronous>, transform_indices = @transform_2, window_bounds = array<i64: 7, 128, 128>}, {pipeline_mode = #tpu.pipeline_mode<synchronous>, transform_indices = @transform_3, window_bounds = array<i64: 1, 24, 128>}, {pipeline_mode = #tpu.pipeline_mode<synchronous>, transform_indices = @transform_4, window_bounds = array<i64: 8, 1, 128>}, {pipeline_mode = #tpu.pipeline_mode<synchronous>, transform_indices = @transform_5, window_bounds = array<i64: 128, 128>}, {pipeline_mode = #tpu.pipeline_mode<synchronous>, transform_indices = @transform_6, window_bounds = array<i64: 1, 128>}, {pipeline_mode = #tpu.pipeline_mode<synchronous>, transform_indices = @transform_7, window_bounds = array<i64: 1, 128>}, {pipeline_mode = #tpu.pipeline_mode<synchronous>, transform_indices = @transform_8, window_bounds = array<i64: 1, 1>}, {pipeline_mode = #tpu.pipeline_mode<synchronous>, transform_indices = @transform_9, window_bounds = array<i64: 128, 128>}, {pipeline_mode = #tpu.pipeline_mode<synchronous>, transform_indices = @transform_10, window_bounds = array<i64: 24, 128>}, {pipeline_mode = #tpu.pipeline_mode<synchronous>, transform_indices = @transform_11, window_bounds = array<i64: 1, 128>}, {pipeline_mode = #tpu.pipeline_mode<synchronous>, transform_indices = @transform_12, window_bounds = array<i64: 128, 4>}, {pipeline_mode = #tpu.pipeline_mode<synchronous>, transform_indices = @transform_13, window_bounds = array<i64: 1, 4>}, {transform_indices = @transform_14, window_bounds = array<i64: 160, 4>}]} {
    %c0 = arith.constant 0 : index
    %c0_0 = arith.constant 0 : index
    %0 = vector.load %arg1[%c0, %c0_0] : memref<160x24xbf16, #tpu.memory_space<vmem>>, vector<160x24xbf16>
    %c0_1 = arith.constant 0 : index
    %c0_2 = arith.constant 0 : index
    %1 = vector.load %arg2[%c0_1, %c0_2] : memref<24x128xbf16, #tpu.memory_space<vmem>>, vector<24x128xbf16>
    %cst = arith.constant dense<0.000000e+00> : vector<160x128xf32>
    %2 = tpu.matmul %0, %1, %cst {dimension_numbers = #tpu.dot_dimension_numbers<[1], [0], [0], [1], [0, 0, 1, 1], [], []>} : vector<160x24xbf16>, vector<24x128xbf16>, vector<160x128xf32> -> vector<160x128xf32>
    %c0_3 = arith.constant 0 : index
    %c0_4 = arith.constant 0 : index
    %c0_5 = arith.constant 0 : index
    %3 = vector.load %arg5[%c0_3, %c0_4, %c0_5] : memref<8x1x128xf32, #tpu.memory_space<vmem>>, vector<1x1x128xf32>
    %4 = vector.shape_cast %3 : vector<1x1x128xf32> to vector<1x128xf32>
    %5 = vector.broadcast %4 : vector<1x128xf32> to vector<160x128xf32>
    %6 = arith.addf %2, %5 : vector<160x128xf32>
    %cst_6 = arith.constant 0.000000e+00 : f32
    %7 = vector.broadcast %cst_6 : f32 to vector<160x128xf32>
    %8 = arith.maximumf %6, %7 : vector<160x128xf32>
    %9 = arith.truncf %8 : vector<160x128xf32> to vector<160x128xbf16>
    %c0_7 = arith.constant 0 : index
    %c0_8 = arith.constant 0 : index
    %c0_9 = arith.constant 0 : index
    %10 = vector.load %arg3[%c0_7, %c0_8, %c0_9] : memref<7x128x128xbf16, #tpu.memory_space<vmem>>, vector<1x128x128xbf16>
    %11 = vector.shape_cast %10 : vector<1x128x128xbf16> to vector<128x128xbf16>
    %cst_10 = arith.constant dense<0.000000e+00> : vector<160x128xf32>
    %12 = tpu.matmul %9, %11, %cst_10 {dimension_numbers = #tpu.dot_dimension_numbers<[1], [0], [0], [1], [0, 0, 1, 1], [], []>} : vector<160x128xbf16>, vector<128x128xbf16>, vector<160x128xf32> -> vector<160x128xf32>
    %c1 = arith.constant 1 : index
    %c0_11 = arith.constant 0 : index
    %c0_12 = arith.constant 0 : index
    %13 = vector.load %arg5[%c1, %c0_11, %c0_12] : memref<8x1x128xf32, #tpu.memory_space<vmem>>, vector<1x1x128xf32>
    %14 = vector.shape_cast %13 : vector<1x1x128xf32> to vector<1x128xf32>
    %15 = vector.broadcast %14 : vector<1x128xf32> to vector<160x128xf32>
    %16 = arith.addf %12, %15 : vector<160x128xf32>
    %cst_13 = arith.constant 0.000000e+00 : f32
    %17 = vector.broadcast %cst_13 : f32 to vector<160x128xf32>
    %18 = arith.maximumf %16, %17 : vector<160x128xf32>
    %19 = arith.truncf %18 : vector<160x128xf32> to vector<160x128xbf16>
    %c1_14 = arith.constant 1 : index
    %c0_15 = arith.constant 0 : index
    %c0_16 = arith.constant 0 : index
    %20 = vector.load %arg3[%c1_14, %c0_15, %c0_16] : memref<7x128x128xbf16, #tpu.memory_space<vmem>>, vector<1x128x128xbf16>
    %21 = vector.shape_cast %20 : vector<1x128x128xbf16> to vector<128x128xbf16>
    %cst_17 = arith.constant dense<0.000000e+00> : vector<160x128xf32>
    %22 = tpu.matmul %19, %21, %cst_17 {dimension_numbers = #tpu.dot_dimension_numbers<[1], [0], [0], [1], [0, 0, 1, 1], [], []>} : vector<160x128xbf16>, vector<128x128xbf16>, vector<160x128xf32> -> vector<160x128xf32>
    %c2 = arith.constant 2 : index
    %c0_18 = arith.constant 0 : index
    %c0_19 = arith.constant 0 : index
    %23 = vector.load %arg5[%c2, %c0_18, %c0_19] : memref<8x1x128xf32, #tpu.memory_space<vmem>>, vector<1x1x128xf32>
    %24 = vector.shape_cast %23 : vector<1x1x128xf32> to vector<1x128xf32>
    %25 = vector.broadcast %24 : vector<1x128xf32> to vector<160x128xf32>
    %26 = arith.addf %22, %25 : vector<160x128xf32>
    %cst_20 = arith.constant 0.000000e+00 : f32
    %27 = vector.broadcast %cst_20 : f32 to vector<160x128xf32>
    %28 = arith.maximumf %26, %27 : vector<160x128xf32>
    %29 = arith.truncf %28 : vector<160x128xf32> to vector<160x128xbf16>
    %c2_21 = arith.constant 2 : index
    %c0_22 = arith.constant 0 : index
    %c0_23 = arith.constant 0 : index
    %30 = vector.load %arg3[%c2_21, %c0_22, %c0_23] : memref<7x128x128xbf16, #tpu.memory_space<vmem>>, vector<1x128x128xbf16>
    %31 = vector.shape_cast %30 : vector<1x128x128xbf16> to vector<128x128xbf16>
    %cst_24 = arith.constant dense<0.000000e+00> : vector<160x128xf32>
    %32 = tpu.matmul %29, %31, %cst_24 {dimension_numbers = #tpu.dot_dimension_numbers<[1], [0], [0], [1], [0, 0, 1, 1], [], []>} : vector<160x128xbf16>, vector<128x128xbf16>, vector<160x128xf32> -> vector<160x128xf32>
    %c3 = arith.constant 3 : index
    %c0_25 = arith.constant 0 : index
    %c0_26 = arith.constant 0 : index
    %33 = vector.load %arg5[%c3, %c0_25, %c0_26] : memref<8x1x128xf32, #tpu.memory_space<vmem>>, vector<1x1x128xf32>
    %34 = vector.shape_cast %33 : vector<1x1x128xf32> to vector<1x128xf32>
    %35 = vector.broadcast %34 : vector<1x128xf32> to vector<160x128xf32>
    %36 = arith.addf %32, %35 : vector<160x128xf32>
    %cst_27 = arith.constant 0.000000e+00 : f32
    %37 = vector.broadcast %cst_27 : f32 to vector<160x128xf32>
    %38 = arith.maximumf %36, %37 : vector<160x128xf32>
    %39 = arith.truncf %38 : vector<160x128xf32> to vector<160x128xbf16>
    %c3_28 = arith.constant 3 : index
    %c0_29 = arith.constant 0 : index
    %c0_30 = arith.constant 0 : index
    %40 = vector.load %arg3[%c3_28, %c0_29, %c0_30] : memref<7x128x128xbf16, #tpu.memory_space<vmem>>, vector<1x128x128xbf16>
    %41 = vector.shape_cast %40 : vector<1x128x128xbf16> to vector<128x128xbf16>
    %cst_31 = arith.constant dense<0.000000e+00> : vector<160x128xf32>
    %42 = tpu.matmul %39, %41, %cst_31 {dimension_numbers = #tpu.dot_dimension_numbers<[1], [0], [0], [1], [0, 0, 1, 1], [], []>} : vector<160x128xbf16>, vector<128x128xbf16>, vector<160x128xf32> -> vector<160x128xf32>
    %c4 = arith.constant 4 : index
    %c0_32 = arith.constant 0 : index
    %c0_33 = arith.constant 0 : index
    %43 = vector.load %arg5[%c4, %c0_32, %c0_33] : memref<8x1x128xf32, #tpu.memory_space<vmem>>, vector<1x1x128xf32>
    %44 = vector.shape_cast %43 : vector<1x1x128xf32> to vector<1x128xf32>
    %45 = vector.broadcast %44 : vector<1x128xf32> to vector<160x128xf32>
    %46 = arith.addf %42, %45 : vector<160x128xf32>
    %cst_34 = arith.constant 0.000000e+00 : f32
    %47 = vector.broadcast %cst_34 : f32 to vector<160x128xf32>
    %48 = arith.maximumf %46, %47 : vector<160x128xf32>
    %49 = arith.truncf %48 : vector<160x128xf32> to vector<160x128xbf16>
    %c4_35 = arith.constant 4 : index
    %c0_36 = arith.constant 0 : index
    %c0_37 = arith.constant 0 : index
    %50 = vector.load %arg3[%c4_35, %c0_36, %c0_37] : memref<7x128x128xbf16, #tpu.memory_space<vmem>>, vector<1x128x128xbf16>
    %51 = vector.shape_cast %50 : vector<1x128x128xbf16> to vector<128x128xbf16>
    %cst_38 = arith.constant dense<0.000000e+00> : vector<160x128xf32>
    %52 = tpu.matmul %49, %51, %cst_38 {dimension_numbers = #tpu.dot_dimension_numbers<[1], [0], [0], [1], [0, 0, 1, 1], [], []>} : vector<160x128xbf16>, vector<128x128xbf16>, vector<160x128xf32> -> vector<160x128xf32>
    %c0_39 = arith.constant 0 : index
    %c0_40 = arith.constant 0 : index
    %c0_41 = arith.constant 0 : index
    %53 = vector.load %arg4[%c0_39, %c0_40, %c0_41] : memref<1x24x128xbf16, #tpu.memory_space<vmem>>, vector<1x24x128xbf16>
    %54 = vector.shape_cast %53 : vector<1x24x128xbf16> to vector<24x128xbf16>
    %cst_42 = arith.constant dense<0.000000e+00> : vector<160x128xf32>
    %55 = tpu.matmul %0, %54, %cst_42 {dimension_numbers = #tpu.dot_dimension_numbers<[1], [0], [0], [1], [0, 0, 1, 1], [], []>} : vector<160x24xbf16>, vector<24x128xbf16>, vector<160x128xf32> -> vector<160x128xf32>
    %56 = arith.addf %52, %55 : vector<160x128xf32>
    %c5 = arith.constant 5 : index
    %c0_43 = arith.constant 0 : index
    %c0_44 = arith.constant 0 : index
    %57 = vector.load %arg5[%c5, %c0_43, %c0_44] : memref<8x1x128xf32, #tpu.memory_space<vmem>>, vector<1x1x128xf32>
    %58 = vector.shape_cast %57 : vector<1x1x128xf32> to vector<1x128xf32>
    %59 = vector.broadcast %58 : vector<1x128xf32> to vector<160x128xf32>
    %60 = arith.addf %56, %59 : vector<160x128xf32>
    %cst_45 = arith.constant 0.000000e+00 : f32
    %61 = vector.broadcast %cst_45 : f32 to vector<160x128xf32>
    %62 = arith.maximumf %60, %61 : vector<160x128xf32>
    %63 = arith.truncf %62 : vector<160x128xf32> to vector<160x128xbf16>
    %c5_46 = arith.constant 5 : index
    %c0_47 = arith.constant 0 : index
    %c0_48 = arith.constant 0 : index
    %64 = vector.load %arg3[%c5_46, %c0_47, %c0_48] : memref<7x128x128xbf16, #tpu.memory_space<vmem>>, vector<1x128x128xbf16>
    %65 = vector.shape_cast %64 : vector<1x128x128xbf16> to vector<128x128xbf16>
    %cst_49 = arith.constant dense<0.000000e+00> : vector<160x128xf32>
    %66 = tpu.matmul %63, %65, %cst_49 {dimension_numbers = #tpu.dot_dimension_numbers<[1], [0], [0], [1], [0, 0, 1, 1], [], []>} : vector<160x128xbf16>, vector<128x128xbf16>, vector<160x128xf32> -> vector<160x128xf32>
    %c6 = arith.constant 6 : index
    %c0_50 = arith.constant 0 : index
    %c0_51 = arith.constant 0 : index
    %67 = vector.load %arg5[%c6, %c0_50, %c0_51] : memref<8x1x128xf32, #tpu.memory_space<vmem>>, vector<1x1x128xf32>
    %68 = vector.shape_cast %67 : vector<1x1x128xf32> to vector<1x128xf32>
    %69 = vector.broadcast %68 : vector<1x128xf32> to vector<160x128xf32>
    %70 = arith.addf %66, %69 : vector<160x128xf32>
    %cst_52 = arith.constant 0.000000e+00 : f32
    %71 = vector.broadcast %cst_52 : f32 to vector<160x128xf32>
    %72 = arith.maximumf %70, %71 : vector<160x128xf32>
    %73 = arith.truncf %72 : vector<160x128xf32> to vector<160x128xbf16>
    %c6_53 = arith.constant 6 : index
    %c0_54 = arith.constant 0 : index
    %c0_55 = arith.constant 0 : index
    %74 = vector.load %arg3[%c6_53, %c0_54, %c0_55] : memref<7x128x128xbf16, #tpu.memory_space<vmem>>, vector<1x128x128xbf16>
    %75 = vector.shape_cast %74 : vector<1x128x128xbf16> to vector<128x128xbf16>
    %cst_56 = arith.constant dense<0.000000e+00> : vector<160x128xf32>
    %76 = tpu.matmul %73, %75, %cst_56 {dimension_numbers = #tpu.dot_dimension_numbers<[1], [0], [0], [1], [0, 0, 1, 1], [], []>} : vector<160x128xbf16>, vector<128x128xbf16>, vector<160x128xf32> -> vector<160x128xf32>
    %c7 = arith.constant 7 : index
    %c0_57 = arith.constant 0 : index
    %c0_58 = arith.constant 0 : index
    %77 = vector.load %arg5[%c7, %c0_57, %c0_58] : memref<8x1x128xf32, #tpu.memory_space<vmem>>, vector<1x1x128xf32>
    %78 = vector.shape_cast %77 : vector<1x1x128xf32> to vector<1x128xf32>
    %79 = vector.broadcast %78 : vector<1x128xf32> to vector<160x128xf32>
    %80 = arith.addf %76, %79 : vector<160x128xf32>
    %cst_59 = arith.constant 0.000000e+00 : f32
    %81 = vector.broadcast %cst_59 : f32 to vector<160x128xf32>
    %82 = arith.maximumf %80, %81 : vector<160x128xf32>
    %83 = arith.truncf %82 : vector<160x128xf32> to vector<160x128xbf16>
    %84 = arith.extf %83 : vector<160x128xbf16> to vector<160x128xf32>
    %c0_60 = arith.constant 0 : index
    %c0_61 = arith.constant 0 : index
    %85 = vector.load %arg8[%c0_60, %c0_61] : memref<1x128xf32, #tpu.memory_space<vmem>>, vector<1x128xf32>
    %86 = vector.broadcast %85 : vector<1x128xf32> to vector<160x128xf32>
    %87 = arith.mulf %84, %86 : vector<160x128xf32>
    %cst_62 = arith.constant dense<0.000000e+00> : vector<160xf32>
    %88 = vector.multi_reduction <add>, %87, %cst_62 [1] : vector<160x128xf32> to vector<160xf32>
    %89 = vector.shape_cast %88 : vector<160xf32> to vector<160x1xf32>
    %c0_63 = arith.constant 0 : index
    %c0_64 = arith.constant 0 : index
    %90 = vector.load %arg9[%c0_63, %c0_64] : memref<1x1xf32, #tpu.memory_space<vmem>>, vector<1x1xf32>
    %91 = vector.broadcast %90 : vector<1x1xf32> to vector<160x1xf32>
    %92 = arith.addf %89, %91 : vector<160x1xf32>
    %c0_65 = arith.constant 0 : index
    %c0_66 = arith.constant 0 : index
    %93 = vector.load %arg6[%c0_65, %c0_66] : memref<128x128xbf16, #tpu.memory_space<vmem>>, vector<128x128xbf16>
    %cst_67 = arith.constant dense<0.000000e+00> : vector<160x128xf32>
    %94 = tpu.matmul %83, %93, %cst_67 {dimension_numbers = #tpu.dot_dimension_numbers<[1], [0], [0], [1], [0, 0, 1, 1], [], []>} : vector<160x128xbf16>, vector<128x128xbf16>, vector<160x128xf32> -> vector<160x128xf32>
    %c0_68 = arith.constant 0 : index
    %c0_69 = arith.constant 0 : index
    %95 = vector.load %arg7[%c0_68, %c0_69] : memref<1x128xf32, #tpu.memory_space<vmem>>, vector<1x128xf32>
    %96 = vector.broadcast %95 : vector<1x128xf32> to vector<160x128xf32>
    %97 = arith.addf %94, %96 : vector<160x128xf32>
    %98 = arith.truncf %97 : vector<160x128xf32> to vector<160x128xbf16>
    %c0_70 = arith.constant 0 : index
    %c0_71 = arith.constant 0 : index
    %99 = vector.load %arg10[%c0_70, %c0_71] : memref<128x128xbf16, #tpu.memory_space<vmem>>, vector<128x128xbf16>
    %cst_72 = arith.constant dense<0.000000e+00> : vector<160x128xf32>
    %100 = tpu.matmul %98, %99, %cst_72 {dimension_numbers = #tpu.dot_dimension_numbers<[1], [0], [0], [1], [0, 0, 1, 1], [], []>} : vector<160x128xbf16>, vector<128x128xbf16>, vector<160x128xf32> -> vector<160x128xf32>
    %c0_73 = arith.constant 0 : index
    %c0_74 = arith.constant 0 : index
    %101 = vector.load %arg11[%c0_73, %c0_74] : memref<24x128xbf16, #tpu.memory_space<vmem>>, vector<24x128xbf16>
    %cst_75 = arith.constant dense<0.000000e+00> : vector<160x128xf32>
    %102 = tpu.matmul %0, %101, %cst_75 {dimension_numbers = #tpu.dot_dimension_numbers<[1], [0], [0], [1], [0, 0, 1, 1], [], []>} : vector<160x24xbf16>, vector<24x128xbf16>, vector<160x128xf32> -> vector<160x128xf32>
    %103 = arith.addf %100, %102 : vector<160x128xf32>
    %c0_76 = arith.constant 0 : index
    %c0_77 = arith.constant 0 : index
    %104 = vector.load %arg12[%c0_76, %c0_77] : memref<1x128xf32, #tpu.memory_space<vmem>>, vector<1x128xf32>
    %105 = vector.broadcast %104 : vector<1x128xf32> to vector<160x128xf32>
    %106 = arith.addf %103, %105 : vector<160x128xf32>
    %cst_78 = arith.constant 0.000000e+00 : f32
    %107 = vector.broadcast %cst_78 : f32 to vector<160x128xf32>
    %108 = arith.maximumf %106, %107 : vector<160x128xf32>
    %109 = arith.truncf %108 : vector<160x128xf32> to vector<160x128xbf16>
    %c0_79 = arith.constant 0 : index
    %c0_80 = arith.constant 0 : index
    %110 = vector.load %arg13[%c0_79, %c0_80] : memref<128x4xbf16, #tpu.memory_space<vmem>>, vector<128x4xbf16>
    %cst_81 = arith.constant dense<0.000000e+00> : vector<160x4xf32>
    %111 = tpu.matmul %109, %110, %cst_81 {dimension_numbers = #tpu.dot_dimension_numbers<[1], [0], [0], [1], [0, 0, 1, 1], [], []>} : vector<160x128xbf16>, vector<128x4xbf16>, vector<160x4xf32> -> vector<160x4xf32>
    %c0_82 = arith.constant 0 : index
    %c0_83 = arith.constant 0 : index
    %112 = vector.load %arg14[%c0_82, %c0_83] : memref<1x4xf32, #tpu.memory_space<vmem>>, vector<1x4xf32>
    %113 = vector.broadcast %112 : vector<1x4xf32> to vector<160x4xf32>
    %114 = arith.addf %111, %113 : vector<160x4xf32>
    %115 = tpu.iota {dimensions = array<i32: 1>} : vector<160x4xi32>
    %c3_i32 = arith.constant 3 : i32
    %116 = vector.broadcast %c3_i32 : i32 to vector<160x4xi32>
    %117 = arith.cmpi eq, %115, %116 : vector<160x4xi32>
    %118 = vector.shape_cast %92 : vector<160x1xf32> to vector<160x1xf32>
    %119 = vector.broadcast %118 : vector<160x1xf32> to vector<160x4xf32>
    %120 = arith.select %117, %119, %114 : vector<160x4xi1>, vector<160x4xf32>
    %c0_84 = arith.constant 0 : index
    %c0_85 = arith.constant 0 : index
    %121 = vector.load %arg15[%c0_84, %c0_85] : memref<160x4xf32, #tpu.memory_space<vmem>>, vector<160x4xf32>
    tpu.vector_store %arg15[%c0_84, %c0_85], %120 {strides = array<i32>} : memref<160x4xf32, #tpu.memory_space<vmem>>, vector<160x4xf32>,
    return
  }
  func.func @transform_0(%arg0: i32) -> (i32, i32) {
    %c0_i32 = arith.constant 0 : i32
    %c0_i32_0 = arith.constant 0 : i32
    return %arg0, %c0_i32 : i32, i32
  }
  func.func @transform_1(%arg0: i32) -> (i32, i32) {
    %c0_i32 = arith.constant 0 : i32
    %c0_i32_0 = arith.constant 0 : i32
    %c0_i32_1 = arith.constant 0 : i32
    return %c0_i32, %c0_i32_0 : i32, i32
  }
  func.func @transform_2(%arg0: i32) -> (i32, i32, i32) {
    %c0_i32 = arith.constant 0 : i32
    %c0_i32_0 = arith.constant 0 : i32
    %c0_i32_1 = arith.constant 0 : i32
    %c0_i32_2 = arith.constant 0 : i32
    return %c0_i32, %c0_i32_0, %c0_i32_1 : i32, i32, i32
  }
  func.func @transform_3(%arg0: i32) -> (i32, i32, i32) {
    %c0_i32 = arith.constant 0 : i32
    %c0_i32_0 = arith.constant 0 : i32
    %c0_i32_1 = arith.constant 0 : i32
    %c0_i32_2 = arith.constant 0 : i32
    return %c0_i32, %c0_i32_0, %c0_i32_1 : i32, i32, i32
  }
  func.func @transform_4(%arg0: i32) -> (i32, i32, i32) {
    %c0_i32 = arith.constant 0 : i32
    %c0_i32_0 = arith.constant 0 : i32
    %c0_i32_1 = arith.constant 0 : i32
    %c0_i32_2 = arith.constant 0 : i32
    return %c0_i32, %c0_i32_0, %c0_i32_1 : i32, i32, i32
  }
  func.func @transform_5(%arg0: i32) -> (i32, i32) {
    %c0_i32 = arith.constant 0 : i32
    %c0_i32_0 = arith.constant 0 : i32
    %c0_i32_1 = arith.constant 0 : i32
    return %c0_i32, %c0_i32_0 : i32, i32
  }
  func.func @transform_6(%arg0: i32) -> (i32, i32) {
    %c0_i32 = arith.constant 0 : i32
    %c0_i32_0 = arith.constant 0 : i32
    %c0_i32_1 = arith.constant 0 : i32
    return %c0_i32, %c0_i32_0 : i32, i32
  }
  func.func @transform_7(%arg0: i32) -> (i32, i32) {
    %c0_i32 = arith.constant 0 : i32
    %c0_i32_0 = arith.constant 0 : i32
    %c0_i32_1 = arith.constant 0 : i32
    return %c0_i32, %c0_i32_0 : i32, i32
  }
  func.func @transform_8(%arg0: i32) -> (i32, i32) {
    %c0_i32 = arith.constant 0 : i32
    %c0_i32_0 = arith.constant 0 : i32
    %c0_i32_1 = arith.constant 0 : i32
    return %c0_i32, %c0_i32_0 : i32, i32
  }
  func.func @transform_9(%arg0: i32) -> (i32, i32) {
    %c0_i32 = arith.constant 0 : i32
    %c0_i32_0 = arith.constant 0 : i32
    %c0_i32_1 = arith.constant 0 : i32
    return %c0_i32, %c0_i32_0 : i32, i32
  }
  func.func @transform_10(%arg0: i32) -> (i32, i32) {
    %c0_i32 = arith.constant 0 : i32
    %c0_i32_0 = arith.constant 0 : i32
    %c0_i32_1 = arith.constant 0 : i32
    return %c0_i32, %c0_i32_0 : i32, i32
  }
  func.func @transform_11(%arg0: i32) -> (i32, i32) {
    %c0_i32 = arith.constant 0 : i32
    %c0_i32_0 = arith.constant 0 : i32
    %c0_i32_1 = arith.constant 0 : i32
    return %c0_i32, %c0_i32_0 : i32, i32
  }
  func.func @transform_12(%arg0: i32) -> (i32, i32) {
    %c0_i32 = arith.constant 0 : i32
    %c0_i32_0 = arith.constant 0 : i32
    %c0_i32_1 = arith.constant 0 : i32
    return %c0_i32, %c0_i32_0 : i32, i32
  }
  func.func @transform_13(%arg0: i32) -> (i32, i32) {
    %c0_i32 = arith.constant 0 : i32
    %c0_i32_0 = arith.constant 0 : i32
    %c0_i32_1 = arith.constant 0 : i32
    return %c0_i32, %c0_i32_0 : i32, i32
  }
  func.func @transform_14(%arg0: i32) -> (i32, i32) {
    %c0_i32 = arith.constant 0 : i32
    %c0_i32_0 = arith.constant 0 : i32
    return %arg0, %c0_i32 : i32, i32
  }
}

</mosaic_0001>

<llo_original>
// kernel: tpu_custom_call.1
$region0: #{tpu_custom_call.1}
  #allocation0 [shape = 'u32[]', space=smem, size = 0x4, offset = 0x4, fixed_abs, tag = 'smem constant byte address 0x4 - core index']
  #allocation1 [shape = 'u32[144,128]{1,0:T(1,128)}', space=vmem, size = 0x12000, scoped, tag = 'internal scratch']
  #allocation2 [shape = 'f32[1,1]{1,0:T(1,128)S(1)}', space=vmem, size = 0x200, scoped, tag = 'scoped memory for tpu_custom_call.1']
  %s0 = inlined_call_operand.vmem [shape: bf16[320,24], index: 0, kind: input, shape index: {}]
  %s1 = inlined_call_operand.vmem [shape: bf16[24,128], index: 1, kind: input, shape index: {}]
  %s2 = inlined_call_operand.hbm [shape: bf16[7,128,128], index: 2, kind: input, shape index: {}]
  %s3 = inlined_call_operand.vmem [shape: bf16[1,24,128], index: 3, kind: input, shape index: {}]
  %s4 = inlined_call_operand.vmem [shape: f32[8,1,128], index: 4, kind: input, shape index: {}]
  %s5 = inlined_call_operand.vmem [shape: bf16[128,128], index: 5, kind: input, shape index: {}]
  %s6 = inlined_call_operand.vmem [shape: f32[1,128], index: 6, kind: input, shape index: {}]
  %s7 = inlined_call_operand.vmem [shape: f32[1,128], index: 7, kind: input, shape index: {}]
  %s8 = inlined_call_operand.<no memory space> [shape: f32[1,1], index: 8, kind: input, shape index: {}]
  %s9 = inlined_call_operand.vmem [shape: bf16[128,128], index: 9, kind: input, shape index: {}]
  %s10 = inlined_call_operand.vmem [shape: bf16[24,128], index: 10, kind: input, shape index: {}]
  %s11 = inlined_call_operand.vmem [shape: f32[1,128], index: 11, kind: input, shape index: {}]
  %s12 = inlined_call_operand.vmem [shape: bf16[128,4], index: 12, kind: input, shape index: {}]
  %s13 = inlined_call_operand.vmem [shape: f32[1,4], index: 13, kind: input, shape index: {}]
  %s14 = inlined_call_operand.vmem [shape: f32[320,4], index: 14, kind: output, shape index: {}]
  %s15 = sld [smem:[#allocation0]]
  $region93: #{tpu_custom_call.1} parent=0
    _
  %s17 = ssub.s32 1, %s15
  %s18 = scalar_select 0, %s17, %s15
  %v19 = vstv %s8
  %20 = vst [vmem:[#allocation2] sm:$0x1] %v19
  $region1: #{tpu_custom_call.1} parent=0
    #allocation3 [shape = 'u8[229376]{0}', space=vmem, size = 0x38000, scoped, tag = 'input window, operand 2, single buffered']
    #allocation4 [shape = 's32[2]{0}', space=sflag, size = 0x8, scoped, tag = 'scoped memory for tpu_custom_call.1']
    %21 = vsyncpa [#allocation4], 0
    loop: start=0, step=1, limit=4
    $region2: #{tpu_custom_call.1} parent=1 // loop_pre_header
      _
    $region3: #{tpu_custom_call.1} parent=1 // loop_header
      %s23 = sphi 0, %s27
      %p24 = scmp.ge.s32.totalorder %s23, 4
      %s33 = sphi 0, %s35
      %s36 = sphi 0, %s33
      %s37 = sphi 0, %s36
      %s53 = sphi 0, %s37
      %s57 = sphi 0, %s57
      %s59 = sphi 0, %s57
      %s60 = sphi 0, %s59
      %s74 = sphi 0, %s60
      %s78 = sphi 0, %s78
      %s80 = sphi 0, %s78
      %s81 = sphi 0, %s80
      %s95 = sphi 0, %s81
      %s99 = sphi 0, %s99
      %s101 = sphi 0, %s99
      %s102 = sphi 0, %s101
      %s116 = sphi 0, %s102
      %s120 = sphi 0, %s120
      %s122 = sphi 0, %s120
      %s123 = sphi 0, %s122
      %s137 = sphi 0, %s123
      %s141 = sphi 0, %s141
      %s143 = sphi 0, %s141
      %s144 = sphi 0, %s143
      %s158 = sphi 0, %s144
      %s162 = sphi 0, %s162
      %s164 = sphi 0, %s162
      %s165 = sphi 0, %s164
      %s179 = sphi 0, %s165
      %s183 = sphi 0, %s183
      %s185 = sphi 0, %s183
      %s186 = sphi 0, %s185
      %s200 = sphi 0, %s186
      %s204 = sphi 0, %s204
      %s206 = sphi 0, %s204
      %s207 = sphi 0, %s206
      %s221 = sphi 0, %s207
      %s225 = sphi 0, %s225
      %s227 = sphi 0, %s225
      %s228 = sphi 0, %s227
      %s242 = sphi 0, %s228
      %s246 = sphi 0, %s246
      %s248 = sphi 0, %s246
      %s249 = sphi 0, %s248
      %s263 = sphi 0, %s249
      %s267 = sphi 0, %s267
      %s269 = sphi 0, %s267
      %s270 = sphi 0, %s269
      %s284 = sphi 0, %s270
      %s288 = sphi 0, %s288
      %s290 = sphi 0, %s288
      %s291 = sphi 0, %s290
      %s305 = sphi 0, %s291
      %s309 = sphi 0, %s309
      %s311 = sphi 0, %s309
      %s312 = sphi 0, %s311
      %s326 = sphi 0, %s312
      %s332 = sphi 0, %s334
      %s335 = sphi 0, %s332
      %s336 = sphi 0, %s335
      %s352 = sphi 0, %s336
    $region4: #{tpu_custom_call.1} parent=1 // loop_header_branch
      %26 = sbr.rel (%p24) target = $region8
    $region5: #{tpu_custom_call.1} parent=1 // loop_body
      %s28 = ssub.s32 %s23, 1
      %s29 = ssub.s32 %s23, 2
      %s30 = sadd.s32 %s23, 1
      %s31 = ssub.s32 %s23, %s30
      %p32 = scmp.eq.s32.totalorder %s31, 0
      %s34 = sadd.s32 %s33, 1
      %s35 = scalar_select %p32, %s33, %s34
      %p38 = pneg %p32
      %p39 = scmp.eq.s32.totalorder %s23, 1
      %p40 = por %p38, %p39
      %p41 = scmp.ne.s32.totalorder %s33, %s36
      %p42 = scmp.eq.s32.totalorder %s23, 0
      %p43 = por %p41, %p42
      %p44 = scmp.ne.s32.totalorder %s33, %s36
      %p45 = scmp.eq.s32.totalorder %s28, 1
      %p46 = por %p44, %p45
      %p47 = scmp.ne.s32.totalorder %s36, %s37
      %p48 = scmp.eq.s32.totalorder %s28, 0
      %p49 = por %p47, %p48
      %p50 = scmp.ne.s32.totalorder %s36, %s37
      %p51 = scmp.eq.s32.totalorder %s29, 1
      %p52 = por %p50, %p51
      %p54 = scmp.ne.s32.totalorder %s37, %s53
      %p55 = scmp.eq.s32.totalorder %s29, 0
      %p56 = por %p54, %p55
      %s58 = sadd.s32 %s57, 1
      %p61 = scmp.eq.s32.totalorder %s23, 1
      %p62 = scmp.ne.s32.totalorder %s57, %s59
      %p63 = scmp.eq.s32.totalorder %s23, 0
      %p64 = por %p62, %p63
      %p65 = scmp.ne.s32.totalorder %s57, %s59
      %p66 = scmp.eq.s32.totalorder %s28, 1
      %p67 = por %p65, %p66
      %p68 = scmp.ne.s32.totalorder %s59, %s60
      %p69 = scmp.eq.s32.totalorder %s28, 0
      %p70 = por %p68, %p69
      %p71 = scmp.ne.s32.totalorder %s59, %s60
      %p72 = scmp.eq.s32.totalorder %s29, 1
      %p73 = por %p71, %p72
      %p75 = scmp.ne.s32.totalorder %s60, %s74
      %p76 = scmp.eq.s32.totalorder %s29, 0
      %p77 = por %p75, %p76
      %s79 = sadd.s32 %s78, 1
      %p82 = scmp.eq.s32.totalorder %s23, 1
      %p83 = scmp.ne.s32.totalorder %s78, %s80
      %p84 = scmp.eq.s32.totalorder %s23, 0
      %p85 = por %p83, %p84
      %p86 = scmp.ne.s32.totalorder %s78, %s80
      %p87 = scmp.eq.s32.totalorder %s28, 1
      %p88 = por %p86, %p87
      %p89 = scmp.ne.s32.totalorder %s80, %s81
      %p90 = scmp.eq.s32.totalorder %s28, 0
      %p91 = por %p89, %p90
      %p92 = scmp.ne.s32.totalorder %s80, %s81
      %p93 = scmp.eq.s32.totalorder %s29, 1
      %p94 = por %p92, %p93
      %p96 = scmp.ne.s32.totalorder %s81, %s95
      %p97 = scmp.eq.s32.totalorder %s29, 0
      %p98 = por %p96, %p97
      %s100 = sadd.s32 %s99, 1
      %p103 = scmp.eq.s32.totalorder %s23, 1
      %p104 = scmp.ne.s32.totalorder %s99, %s101
      %p105 = scmp.eq.s32.totalorder %s23, 0
      %p106 = por %p104, %p105
      %p107 = scmp.ne.s32.totalorder %s99, %s101
      %p108 = scmp.eq.s32.totalorder %s28, 1
      %p109 = por %p107, %p108
      %p110 = scmp.ne.s32.totalorder %s101, %s102
      %p111 = scmp.eq.s32.totalorder %s28, 0
      %p112 = por %p110, %p111
      %p113 = scmp.ne.s32.totalorder %s101, %s102
      %p114 = scmp.eq.s32.totalorder %s29, 1
      %p115 = por %p113, %p114
      %p117 = scmp.ne.s32.totalorder %s102, %s116
      %p118 = scmp.eq.s32.totalorder %s29, 0
      %p119 = por %p117, %p118
      %s121 = sadd.s32 %s120, 1
      %p124 = scmp.eq.s32.totalorder %s23, 1
      %p125 = scmp.ne.s32.totalorder %s120, %s122
      %p126 = scmp.eq.s32.totalorder %s23, 0
      %p127 = por %p125, %p126
      %p128 = scmp.ne.s32.totalorder %s120, %s122
      %p129 = scmp.eq.s32.totalorder %s28, 1
      %p130 = por %p128, %p129
      %p131 = scmp.ne.s32.totalorder %s122, %s123
      %p132 = scmp.eq.s32.totalorder %s28, 0
      %p133 = por %p131, %p132
      %p134 = scmp.ne.s32.totalorder %s122, %s123
      %p135 = scmp.eq.s32.totalorder %s29, 1
      %p136 = por %p134, %p135
      %p138 = scmp.ne.s32.totalorder %s123, %s137
      %p139 = scmp.eq.s32.totalorder %s29, 0
      %p140 = por %p138, %p139
      %s142 = sadd.s32 %s141, 1
      %p145 = scmp.eq.s32.totalorder %s23, 1
      %p146 = scmp.ne.s32.totalorder %s141, %s143
      %p147 = scmp.eq.s32.totalorder %s23, 0
      %p148 = por %p146, %p147
      %p149 = scmp.ne.s32.totalorder %s141, %s143
      %p150 = scmp.eq.s32.totalorder %s28, 1
      %p151 = por %p149, %p150
      %p152 = scmp.ne.s32.totalorder %s143, %s144
      %p153 = scmp.eq.s32.totalorder %s28, 0
      %p154 = por %p152, %p153
      %p155 = scmp.ne.s32.totalorder %s143, %s144
      %p156 = scmp.eq.s32.totalorder %s29, 1
      %p157 = por %p155, %p156
      %p159 = scmp.ne.s32.totalorder %s144, %s158
      %p160 = scmp.eq.s32.totalorder %s29, 0
      %p161 = por %p159, %p160
      %s163 = sadd.s32 %s162, 1
      %p166 = scmp.eq.s32.totalorder %s23, 1
      %p167 = scmp.ne.s32.totalorder %s162, %s164
      %p168 = scmp.eq.s32.totalorder %s23, 0
      %p169 = por %p167, %p168
      %p170 = scmp.ne.s32.totalorder %s162, %s164
      %p171 = scmp.eq.s32.totalorder %s28, 1
      %p172 = por %p170, %p171
      %p173 = scmp.ne.s32.totalorder %s164, %s165
      %p174 = scmp.eq.s32.totalorder %s28, 0
      %p175 = por %p173, %p174
      %p176 = scmp.ne.s32.totalorder %s164, %s165
      %p177 = scmp.eq.s32.totalorder %s29, 1
      %p178 = por %p176, %p177
      %p180 = scmp.ne.s32.totalorder %s165, %s179
      %p181 = scmp.eq.s32.totalorder %s29, 0
      %p182 = por %p180, %p181
      %s184 = sadd.s32 %s183, 1
      %p187 = scmp.eq.s32.totalorder %s23, 1
      %p188 = scmp.ne.s32.totalorder %s183, %s185
      %p189 = scmp.eq.s32.totalorder %s23, 0
      %p190 = por %p188, %p189
      %p191 = scmp.ne.s32.totalorder %s183, %s185
      %p192 = scmp.eq.s32.totalorder %s28, 1
      %p193 = por %p191, %p192
      %p194 = scmp.ne.s32.totalorder %s185, %s186
      %p195 = scmp.eq.s32.totalorder %s28, 0
      %p196 = por %p194, %p195
      %p197 = scmp.ne.s32.totalorder %s185, %s186
      %p198 = scmp.eq.s32.totalorder %s29, 1
      %p199 = por %p197, %p198
      %p201 = scmp.ne.s32.totalorder %s186, %s200
      %p202 = scmp.eq.s32.totalorder %s29, 0
      %p203 = por %p201, %p202
      %s205 = sadd.s32 %s204, 1
      %p208 = scmp.eq.s32.totalorder %s23, 1
      %p209 = scmp.ne.s32.totalorder %s204, %s206
      %p210 = scmp.eq.s32.totalorder %s23, 0
      %p211 = por %p209, %p210
      %p212 = scmp.ne.s32.totalorder %s204, %s206
      %p213 = scmp.eq.s32.totalorder %s28, 1
      %p214 = por %p212, %p213
      %p215 = scmp.ne.s32.totalorder %s206, %s207
      %p216 = scmp.eq.s32.totalorder %s28, 0
      %p217 = por %p215, %p216
      %p218 = scmp.ne.s32.totalorder %s206, %s207
      %p219 = scmp.eq.s32.totalorder %s29, 1
      %p220 = por %p218, %p219
      %p222 = scmp.ne.s32.totalorder %s207, %s221
      %p223 = scmp.eq.s32.totalorder %s29, 0
      %p224 = por %p222, %p223
      %s226 = sadd.s32 %s225, 1
      %p229 = scmp.eq.s32.totalorder %s23, 1
      %p230 = scmp.ne.s32.totalorder %s225, %s227
      %p231 = scmp.eq.s32.totalorder %s23, 0
      %p232 = por %p230, %p231
      %p233 = scmp.ne.s32.totalorder %s225, %s227
      %p234 = scmp.eq.s32.totalorder %s28, 1
      %p235 = por %p233, %p234
      %p236 = scmp.ne.s32.totalorder %s227, %s228
      %p237 = scmp.eq.s32.totalorder %s28, 0
      %p238 = por %p236, %p237
      %p239 = scmp.ne.s32.totalorder %s227, %s228
      %p240 = scmp.eq.s32.totalorder %s29, 1
      %p241 = por %p239, %p240
      %p243 = scmp.ne.s32.totalorder %s228, %s242
      %p244 = scmp.eq.s32.totalorder %s29, 0
      %p245 = por %p243, %p244
      %s247 = sadd.s32 %s246, 1
      %p250 = scmp.eq.s32.totalorder %s23, 1
      %p251 = scmp.ne.s32.totalorder %s246, %s248
      %p252 = scmp.eq.s32.totalorder %s23, 0
      %p253 = por %p251, %p252
      %p254 = scmp.ne.s32.totalorder %s246, %s248
      %p255 = scmp.eq.s32.totalorder %s28, 1
      %p256 = por %p254, %p255
      %p257 = scmp.ne.s32.totalorder %s248, %s249
      %p258 = scmp.eq.s32.totalorder %s28, 0
      %p259 = por %p257, %p258
      %p260 = scmp.ne.s32.totalorder %s248, %s249
      %p261 = scmp.eq.s32.totalorder %s29, 1
      %p262 = por %p260, %p261
      %p264 = scmp.ne.s32.totalorder %s249, %s263
      %p265 = scmp.eq.s32.totalorder %s29, 0
      %p266 = por %p264, %p265
      %s268 = sadd.s32 %s267, 1
      %p271 = scmp.eq.s32.totalorder %s23, 1
      %p272 = scmp.ne.s32.totalorder %s267, %s269
      %p273 = scmp.eq.s32.totalorder %s23, 0
      %p274 = por %p272, %p273
      %p275 = scmp.ne.s32.totalorder %s267, %s269
      %p276 = scmp.eq.s32.totalorder %s28, 1
      %p277 = por %p275, %p276
      %p278 = scmp.ne.s32.totalorder %s269, %s270
      %p279 = scmp.eq.s32.totalorder %s28, 0
      %p280 = por %p278, %p279
      %p281 = scmp.ne.s32.totalorder %s269, %s270
      %p282 = scmp.eq.s32.totalorder %s29, 1
      %p283 = por %p281, %p282
      %p285 = scmp.ne.s32.totalorder %s270, %s284
      %p286 = scmp.eq.s32.totalorder %s29, 0
      %p287 = por %p285, %p286
      %s289 = sadd.s32 %s288, 1
      %p292 = scmp.eq.s32.totalorder %s23, 1
      %p293 = scmp.ne.s32.totalorder %s288, %s290
      %p294 = scmp.eq.s32.totalorder %s23, 0
      %p295 = por %p293, %p294
      %p296 = scmp.ne.s32.totalorder %s288, %s290
      %p297 = scmp.eq.s32.totalorder %s28, 1
      %p298 = por %p296, %p297
      %p299 = scmp.ne.s32.totalorder %s290, %s291
      %p300 = scmp.eq.s32.totalorder %s28, 0
      %p301 = por %p299, %p300
      %p302 = scmp.ne.s32.totalorder %s290, %s291
      %p303 = scmp.eq.s32.totalorder %s29, 1
      %p304 = por %p302, %p303
      %p306 = scmp.ne.s32.totalorder %s291, %s305
      %p307 = scmp.eq.s32.totalorder %s29, 0
      %p308 = por %p306, %p307
      %s310 = sadd.s32 %s309, 1
      %p313 = scmp.eq.s32.totalorder %s23, 1
      %p314 = scmp.ne.s32.totalorder %s309, %s311
      %p315 = scmp.eq.s32.totalorder %s23, 0
      %p316 = por %p314, %p315
      %p317 = scmp.ne.s32.totalorder %s309, %s311
      %p318 = scmp.eq.s32.totalorder %s28, 1
      %p319 = por %p317, %p318
      %p320 = scmp.ne.s32.totalorder %s311, %s312
      %p321 = scmp.eq.s32.totalorder %s28, 0
      %p322 = por %p320, %p321
      %p323 = scmp.ne.s32.totalorder %s311, %s312
      %p324 = scmp.eq.s32.totalorder %s29, 1
      %p325 = por %p323, %p324
      %p327 = scmp.ne.s32.totalorder %s312, %s326
      %p328 = scmp.eq.s32.totalorder %s29, 0
      %p329 = por %p327, %p328
      %s330 = ssub.s32 %s23, %s30
      %p331 = scmp.eq.s32.totalorder %s330, 0
      %s333 = sadd.s32 %s332, 1
      %s334 = scalar_select %p331, %s332, %s333
      %p337 = pneg %p331
      %p338 = scmp.eq.s32.totalorder %s23, 1
      %p339 = por %p337, %p338
      %p340 = scmp.ne.s32.totalorder %s332, %s335
      %p341 = scmp.eq.s32.totalorder %s23, 0
      %p342 = por %p340, %p341
      %p343 = scmp.ne.s32.totalorder %s332, %s335
      %p344 = scmp.eq.s32.totalorder %s28, 1
      %p345 = por %p343, %p344
      %p346 = scmp.ne.s32.totalorder %s335, %s336
      %p347 = scmp.eq.s32.totalorder %s28, 0
      %p348 = por %p346, %p347
      %p349 = scmp.ne.s32.totalorder %s335, %s336
      %p350 = scmp.eq.s32.totalorder %s29, 1
      %p351 = por %p349, %p350
      %p353 = scmp.ne.s32.totalorder %s336, %s352
      %p354 = scmp.eq.s32.totalorder %s29, 0
      %p355 = por %p353, %p354
      %p356 = scmp.le.s32.totalorder 1, %s23
      %p357 = scmp.lt.s32.totalorder %s23, 3
      %p358 = pnand %p356, %p357
      %p359 = pneg %p358
      // Predicated region
      $region9: #{tpu_custom_call.1} parent=5 // pred_check
        _
      $region10: #{tpu_custom_call.1} parent=5 // pred_check_branch
        %361 = sbr.rel (%p358) target = $region12
      $region11: #{tpu_custom_call.1} parent=5 // pred_region
        %s362 = ssub.s32 %s23, 1
        // Predicated region
        $region13: #{tpu_custom_call.1} parent=11 // pred_check
          %p363 = pneg %p70
        $region14: #{tpu_custom_call.1} parent=11 // pred_check_branch
          %365 = sbr.rel (%p363) target = $region16
        $region15: #{tpu_custom_call.1} parent=11 // pred_region
          _
        $region16: #{tpu_custom_call.1} parent=11 // pred_fallthru
          _
        // Predicated region
        $region17: #{tpu_custom_call.1} parent=11 // pred_check
          %p366 = pneg %p91
        $region18: #{tpu_custom_call.1} parent=11 // pred_check_branch
          %368 = sbr.rel (%p366) target = $region20
        $region19: #{tpu_custom_call.1} parent=11 // pred_region
          %s370 = ssub.s32 7168, 7168
          %371 = vsyncadd [#allocation4], %s370
          %s372 = sshll.u32 [#allocation3], 4
          %s373 = int_to_ptr.vmem [resolvable:$true] %s372
          %378 = dma.hbm_to_vmem [thread:$0]  %s2, 7168, %s373, [#allocation4], 64, 64, 4
        $region20: #{tpu_custom_call.1} parent=11 // pred_fallthru
          _
        // Predicated region
        $region21: #{tpu_custom_call.1} parent=11 // pred_check
          %p379 = pneg %p112
        $region22: #{tpu_custom_call.1} parent=11 // pred_check_branch
          %381 = sbr.rel (%p379) target = $region24
        $region23: #{tpu_custom_call.1} parent=11 // pred_region
          _
        $region24: #{tpu_custom_call.1} parent=11 // pred_fallthru
          _
        // Predicated region
        $region25: #{tpu_custom_call.1} parent=11 // pred_check
          %p382 = pneg %p133
        $region26: #{tpu_custom_call.1} parent=11 // pred_check_branch
          %384 = sbr.rel (%p382) target = $region28
        $region27: #{tpu_custom_call.1} parent=11 // pred_region
          _
        $region28: #{tpu_custom_call.1} parent=11 // pred_fallthru
          _
        // Predicated region
        $region29: #{tpu_custom_call.1} parent=11 // pred_check
          %p385 = pneg %p154
        $region30: #{tpu_custom_call.1} parent=11 // pred_check_branch
          %387 = sbr.rel (%p385) target = $region32
        $region31: #{tpu_custom_call.1} parent=11 // pred_region
          _
        $region32: #{tpu_custom_call.1} parent=11 // pred_fallthru
          _
        // Predicated region
        $region33: #{tpu_custom_call.1} parent=11 // pred_check
          %p388 = pneg %p175
        $region34: #{tpu_custom_call.1} parent=11 // pred_check_branch
          %390 = sbr.rel (%p388) target = $region36
        $region35: #{tpu_custom_call.1} parent=11 // pred_region
          _
        $region36: #{tpu_custom_call.1} parent=11 // pred_fallthru
          _
        // Predicated region
        $region37: #{tpu_custom_call.1} parent=11 // pred_check
          %p391 = pneg %p196
        $region38: #{tpu_custom_call.1} parent=11 // pred_check_branch
          %393 = sbr.rel (%p391) target = $region40
        $region39: #{tpu_custom_call.1} parent=11 // pred_region
          _
        $region40: #{tpu_custom_call.1} parent=11 // pred_fallthru
          _
        // Predicated region
        $region41: #{tpu_custom_call.1} parent=11 // pred_check
          %p394 = pneg %p217
        $region42: #{tpu_custom_call.1} parent=11 // pred_check_branch
          %396 = sbr.rel (%p394) target = $region44
        $region43: #{tpu_custom_call.1} parent=11 // pred_region
          _
        $region44: #{tpu_custom_call.1} parent=11 // pred_fallthru
          _
        // Predicated region
        $region45: #{tpu_custom_call.1} parent=11 // pred_check
          %p397 = pneg %p238
        $region46: #{tpu_custom_call.1} parent=11 // pred_check_branch
          %399 = sbr.rel (%p397) target = $region48
        $region47: #{tpu_custom_call.1} parent=11 // pred_region
          _
        $region48: #{tpu_custom_call.1} parent=11 // pred_fallthru
          _
        // Predicated region
        $region49: #{tpu_custom_call.1} parent=11 // pred_check
          %p400 = pneg %p259
        $region50: #{tpu_custom_call.1} parent=11 // pred_check_branch
          %402 = sbr.rel (%p400) target = $region52
        $region51: #{tpu_custom_call.1} parent=11 // pred_region
          _
        $region52: #{tpu_custom_call.1} parent=11 // pred_fallthru
          _
        // Predicated region
        $region53: #{tpu_custom_call.1} parent=11 // pred_check
          %p403 = pneg %p280
        $region54: #{tpu_custom_call.1} parent=11 // pred_check_branch
          %405 = sbr.rel (%p403) target = $region56
        $region55: #{tpu_custom_call.1} parent=11 // pred_region
          _
        $region56: #{tpu_custom_call.1} parent=11 // pred_fallthru
          _
        // Predicated region
        $region57: #{tpu_custom_call.1} parent=11 // pred_check
          %p406 = pneg %p301
        $region58: #{tpu_custom_call.1} parent=11 // pred_check_branch
          %408 = sbr.rel (%p406) target = $region60
        $region59: #{tpu_custom_call.1} parent=11 // pred_region
          _
        $region60: #{tpu_custom_call.1} parent=11 // pred_fallthru
          _
        // Predicated region
        $region61: #{tpu_custom_call.1} parent=11 // pred_check
          %p409 = pneg %p322
        $region62: #{tpu_custom_call.1} parent=11 // pred_check_branch
          %411 = sbr.rel (%p409) target = $region64
        $region63: #{tpu_custom_call.1} parent=11 // pred_region
          _
        $region64: #{tpu_custom_call.1} parent=11 // pred_fallthru
          _
      $region12: #{tpu_custom_call.1} parent=5 // pred_fallthru
        _
      %p412 = scmp.lt.s32.totalorder %s23, 2
      // Predicated region
      $region65: #{tpu_custom_call.1} parent=5 // pred_check
        %p413 = pneg %p412
      $region66: #{tpu_custom_call.1} parent=5 // pred_check_branch
        %415 = sbr.rel (%p413) target = $region68
      $region67: #{tpu_custom_call.1} parent=5 // pred_region
        // Predicated region
        $region69: #{tpu_custom_call.1} parent=67 // pred_check
          %p416 = pneg %p43
        $region70: #{tpu_custom_call.1} parent=67 // pred_check_branch
          %418 = sbr.rel (%p416) target = $region72
        $region71: #{tpu_custom_call.1} parent=67 // pred_region
          %s419 = smul.u32 20, %s23
          %p420 = scmp.lt.s32.totalorder %s419, 39
          %s421 = scalar_select %p420, %s419, 39
          %s422 = smul.addr %s421, 4
          %s423 = scalar_lea.vmem %s0, %s422
          %s424 = smul.u32 20, %s23
        $region72: #{tpu_custom_call.1} parent=67 // pred_fallthru
          _
      $region68: #{tpu_custom_call.1} parent=5 // pred_fallthru
        _
      %p425 = scmp.le.s32.totalorder 1, %s23
      %p426 = scmp.lt.s32.totalorder %s23, 3
      %p427 = pnand %p425, %p426
      %p428 = pneg %p427
      // Predicated region
      $region73: #{tpu_custom_call.1} parent=5 // pred_check
        _
      $region74: #{tpu_custom_call.1} parent=5 // pred_check_branch
        %430 = sbr.rel (%p427) target = $region76
      $region75: #{tpu_custom_call.1} parent=5 // pred_region
        %s431 = ssub.s32 %s23, 1
        // Predicated region
        $region77: #{tpu_custom_call.1} parent=75 // pred_check
          %p432 = pneg %p91
        $region78: #{tpu_custom_call.1} parent=75 // pred_check_branch
          %434 = sbr.rel (%p432) target = $region80
        $region79: #{tpu_custom_call.1} parent=75 // pred_region
          %435 = dma.done [#allocation4], 7168
        $region80: #{tpu_custom_call.1} parent=75 // pred_fallthru
          _
        %s436 = smul.u32 20, %s28
        %p437 = scmp.lt.s32.totalorder %s436, 39
        %s438 = scalar_select %p437, %s436, 39
        %s439 = smul.addr %s438, 4
        %s440 = scalar_lea.vmem %s0, %s439
        %p441 = pneg %p49
        %p442 = pneg %p46
        %p443 = pneg %p70
        %p444 = pneg %p67
        %p445 = pneg %p91
        %p446 = pneg %p88
        %p447 = pneg %p112
        %p448 = pneg %p109
        %p449 = pneg %p133
        %p450 = pneg %p130
        %p451 = pneg %p154
        %p452 = pneg %p151
        %p453 = pneg %p175
        %p454 = pneg %p172
        %p455 = pneg %p196
        %p456 = pneg %p193
        %p457 = pneg %p217
        %p458 = pneg %p214
        %p459 = pneg %p238
        %p460 = pneg %p235
        %p461 = pneg %p259
        %p462 = pneg %p256
        %p463 = pneg %p280
        %p464 = pneg %p277
        %p465 = pneg %p301
        %p466 = pneg %p298
        %p467 = pneg %p322
        %p468 = pneg %p319
        %p469 = pneg %p348
        %p470 = pneg %p345
        %s471 = smul.u32 20, %s28
        %p472 = scmp.lt.s32.totalorder %s471, 39
        %s473 = scalar_select %p472, %s471, 39
        %s474 = smul.addr %s473, 8
        %s475 = scalar_lea.vmem %s14, %s474
        %s476 = smul.u32 20, %s28
        %p477 = scmp.lt.s32.totalorder %s476, 39
        %s478 = scalar_select %p477, %s476, 39
        %s479 = smul.addr %s478, 4
        %s480 = scalar_lea.vmem %s0, %s479
        %s481 = smul.u32 20, %s28
        %s482 = smul.u32 20, %s28
        %p483 = scmp.lt.s32.totalorder %s482, 39
        %s484 = scalar_select %p483, %s482, 39
        %s485 = smul.addr %s484, 8
        %s486 = scalar_lea.vmem %s14, %s485
        %s487 = smul.u32 20, %s28
        %v489 = vld [vmem:[%s480] sm:$0xf]
        %v490 = vld [vmem:[%s480 + $0x4] sm:$0xf]
        %v491 = vld [vmem:[%s480 + $0x8] sm:$0xf]
        %v492 = vld [vmem:[%s480 + $0xc] sm:$0xf]
        %v493 = vld [vmem:[%s480 + $0x10] sm:$0xf]
        %v494 = vld [vmem:[%s480 + $0x14] sm:$0xf]
        %v495 = vld [vmem:[%s480 + $0x18] sm:$0xf]
        %v496 = vld [vmem:[%s480 + $0x1c] sm:$0xf]
        %v497 = vld [vmem:[%s480 + $0x20] sm:$0xf]
        %v498 = vld [vmem:[%s480 + $0x24] sm:$0xf]
        %v499 = vld [vmem:[%s480 + $0x28] sm:$0xf]
        %v500 = vld [vmem:[%s480 + $0x2c] sm:$0xf]
        %v501 = vld [vmem:[%s480 + $0x30] sm:$0xf]
        %v502 = vld [vmem:[%s480 + $0x34] sm:$0xf]
        %v503 = vld [vmem:[%s480 + $0x38] sm:$0xf]
        %v504 = vld [vmem:[%s480 + $0x3c] sm:$0xf]
        %v505 = vld [vmem:[%s480 + $0x40] sm:$0xf]
        %v506 = vld [vmem:[%s480 + $0x44] sm:$0xf]
        %v507 = vld [vmem:[%s480 + $0x48] sm:$0xf]
        %v508 = vld [vmem:[%s480 + $0x4c] sm:$0xf]
        %v509 = vld [vmem:[%s1] sm:$0xf]
        %v510 = vld [vmem:[%s1 + $0x4] sm:$0xf]
        %v511 = vld [vmem:[%s1 + $0x8] sm:$0xf]
        %v512 = vld [vmem:[%s4] sm:$0x1]
        %v514 = vlaneseq
        %v515 = vshrl.u32 %v514, 7
        %v516 = vsub.s32 0, %v515
        %v517 = vrot.slane %v512, %v516
        %v539 = vunpack.c.l.b16 %v489
        %v540 = vunpack.c.l.b16 %v490
        %v541 = vunpack.c.l.b16 %v491
        %v542 = vunpack.c.l.b16 %v492
        %v543 = vunpack.c.l.b16 %v493
        %v544 = vunpack.c.l.b16 %v494
        %v545 = vunpack.c.l.b16 %v495
        %v546 = vunpack.c.l.b16 %v496
        %v547 = vunpack.c.l.b16 %v497
        %v548 = vunpack.c.l.b16 %v498
        %v549 = vunpack.c.l.b16 %v499
        %v550 = vunpack.c.l.b16 %v500
        %v551 = vunpack.c.l.b16 %v501
        %v552 = vunpack.c.l.b16 %v502
        %v553 = vunpack.c.l.b16 %v503
        %v554 = vunpack.c.l.b16 %v504
        %v555 = vunpack.c.l.b16 %v505
        %v556 = vunpack.c.l.b16 %v506
        %v557 = vunpack.c.l.b16 %v507
        %v558 = vunpack.c.l.b16 %v508
        %v559 = vpack.c.b16 %v540, %v539
        %v560 = vpack.c.b16 %v542, %v541
        %v561 = vpack.c.b16 %v544, %v543
        %v562 = vpack.c.b16 %v546, %v545
        %v563 = vpack.c.b16 %v548, %v547
        %v564 = vpack.c.b16 %v550, %v549
        %v565 = vpack.c.b16 %v552, %v551
        %v566 = vpack.c.b16 %v554, %v553
        %v567 = vpack.c.b16 %v556, %v555
        %v568 = vpack.c.b16 %v558, %v557
        %v572 = vunpack.c.l.b16 %v509
        %v573 = vunpack.c.l.b16 %v510
        %v574 = vunpack.c.l.b16 %v511
        %v575 = vpack.c.b16 %v573, %v572
        %v576 = vpack.c.b16 %v574, %v574
        %vm578 = vcmask 195584
        %v580 = vsel %vm578, %v559, 0
        %v583 = vsel %vm578, %v560, 0
        %v586 = vsel %vm578, %v561, 0
        %v589 = vsel %vm578, %v562, 0
        %v592 = vsel %vm578, %v563, 0
        %v595 = vsel %vm578, %v564, 0
        %v598 = vsel %vm578, %v565, 0
        %v601 = vsel %vm578, %v566, 0
        %v604 = vsel %vm578, %v567, 0
        %v607 = vsel %vm578, %v568, 0
        %vm609 = vcmask 1043456
        %v611 = vsel %vm609, %v576, 0
        %613 = vmatprep.subr.bf16.mxu0 0
        %614 = vmatpush1.bf16.msra.mxu0 0
        %615 = vmatprep.subr.bf16.mxu0 0
        %616 = vmatpush1.bf16.msra.mxu0 0
        %617 = vmatprep.subr.bf16.mxu0 0
        %618 = vmatpush1.bf16.msra.mxu0 0
        %619 = vmatprep.subr.bf16.mxu0 0
        %620 = vmatpush1.bf16.msra.mxu0 0
        %621 = vmatprep.subr.bf16.mxu0 0
        %622 = vmatpush1.bf16.msra.mxu0 0
        %623 = vmatprep.subr.bf16.mxu0 0
        %624 = vmatpush1.bf16.msra.mxu0 0
        %625 = vmatprep.subr.bf16.mxu0 0
        %626 = vmatpush1.bf16.msra.mxu0 %v611
        %627 = vmatprep.subr.bf16.mxu0 0
        %628 = vmatpush1.bf16.msra.mxu0 %v575
        %629 = vmatprep.subr.bf16.mxu0 0
        %630 = vmatpush2.bf16.msra.mxu0 0
        %631 = vmatprep.subr.bf16.mxu0 0
        %632 = vmatpush2.bf16.msra.mxu0 0
        %633 = vmatprep.subr.bf16.mxu0 0
        %634 = vmatpush2.bf16.msra.mxu0 0
        %635 = vmatprep.subr.bf16.mxu0 0
        %636 = vmatpush2.bf16.msra.mxu0 0
        %637 = vmatprep.subr.bf16.mxu0 0
        %638 = vmatpush2.bf16.msra.mxu0 0
        %639 = vmatprep.subr.bf16.mxu0 0
        %640 = vmatpush2.bf16.msra.mxu0 0
        %641 = vmatprep.subr.bf16.mxu0 0
        %642 = vmatpush2.bf16.msra.mxu0 0
        %643 = vmatprep.subr.bf16.mxu0 0
        %644 = vmatpush2.bf16.msra.mxu0 0
        %645 = vmatprep.mubr.bf16.mxu0 0
        %646 = vmatmul.mubr.bf16.gmra.mxu0 %v580
        %v647 = vpop.f32.mrf.mxu0
        %v648 = vadd.f32 %v517, %v647
        %v649 = vpop.f32.mrf.mxu0
        %v650 = vpop.f32.mrf.mxu0
        %v651 = vadd.f32 %v517, %v650
        %v652 = vpop.f32.mrf.mxu0
        %653 = vmatprep.mubr.bf16.mxu0 0
        %654 = vmatmul.mubr.bf16.gmra.mxu0 %v583
        %v655 = vpop.f32.mrf.mxu0
        %v656 = vadd.f32 %v517, %v655
        %v657 = vpop.f32.mrf.mxu0
        %v658 = vpop.f32.mrf.mxu0
        %v659 = vadd.f32 %v517, %v658
        %v660 = vpop.f32.mrf.mxu0
        %661 = vmatprep.mubr.bf16.mxu0 0
        %662 = vmatmul.mubr.bf16.gmra.mxu0 %v586
        %v663 = vpop.f32.mrf.mxu0
        %v664 = vadd.f32 %v517, %v663
        %v665 = vpop.f32.mrf.mxu0
        %v666 = vpop.f32.mrf.mxu0
        %v667 = vadd.f32 %v517, %v666
        %v668 = vpop.f32.mrf.mxu0
        %669 = vmatprep.mubr.bf16.mxu0 0
        %670 = vmatmul.mubr.bf16.gmra.mxu0 %v589
        %v671 = vpop.f32.mrf.mxu0
        %v672 = vadd.f32 %v517, %v671
        %v673 = vpop.f32.mrf.mxu0
        %v674 = vpop.f32.mrf.mxu0
        %v675 = vadd.f32 %v517, %v674
        %v676 = vpop.f32.mrf.mxu0
        %677 = vmatprep.mubr.bf16.mxu0 0
        %678 = vmatmul.mubr.bf16.gmra.mxu0 %v592
        %v679 = vpop.f32.mrf.mxu0
        %v680 = vadd.f32 %v517, %v679
        %v681 = vpop.f32.mrf.mxu0
        %v682 = vpop.f32.mrf.mxu0
        %v683 = vadd.f32 %v517, %v682
        %v684 = vpop.f32.mrf.mxu0
        %685 = vmatprep.mubr.bf16.mxu0 0
        %686 = vmatmul.mubr.bf16.gmra.mxu0 %v595
        %v687 = vpop.f32.mrf.mxu0
        %v688 = vadd.f32 %v517, %v687
        %v689 = vpop.f32.mrf.mxu0
        %v690 = vpop.f32.mrf.mxu0
        %v691 = vadd.f32 %v517, %v690
        %v692 = vpop.f32.mrf.mxu0
        %693 = vmatprep.mubr.bf16.mxu0 0
        %694 = vmatmul.mubr.bf16.gmra.mxu0 %v598
        %v695 = vpop.f32.mrf.mxu0
        %v696 = vadd.f32 %v517, %v695
        %v697 = vpop.f32.mrf.mxu0
        %v698 = vpop.f32.mrf.mxu0
        %v699 = vadd.f32 %v517, %v698
        %v700 = vpop.f32.mrf.mxu0
        %701 = vmatprep.mubr.bf16.mxu0 0
        %702 = vmatmul.mubr.bf16.gmra.mxu0 %v601
        %v703 = vpop.f32.mrf.mxu0
        %v704 = vadd.f32 %v517, %v703
        %v705 = vpop.f32.mrf.mxu0
        %v706 = vpop.f32.mrf.mxu0
        %v707 = vadd.f32 %v517, %v706
        %v708 = vpop.f32.mrf.mxu0
        %709 = vmatprep.mubr.bf16.mxu0 0
        %710 = vmatmul.mubr.bf16.gmra.mxu0 %v604
        %v711 = vpop.f32.mrf.mxu0
        %v712 = vadd.f32 %v517, %v711
        %v713 = vpop.f32.mrf.mxu0
        %v714 = vpop.f32.mrf.mxu0
        %v715 = vadd.f32 %v517, %v714
        %v716 = vpop.f32.mrf.mxu0
        %717 = vmatprep.mubr.bf16.mxu0 0
        %718 = vmatmul.mubr.bf16.gmra.mxu0 %v607
        %v719 = vpop.f32.mrf.mxu0
        %v720 = vadd.f32 %v517, %v719
        %v721 = vpop.f32.mrf.mxu0
        %v722 = vpop.f32.mrf.mxu0
        %v723 = vadd.f32 %v517, %v722
        %v724 = vpop.f32.mrf.mxu0
        %725 = vdwg.mxu0
        %v726 = vmax.f32 %v648, 0.0
        %v727 = vmax.f32 %v651, 0.0
        %v728 = vmax.f32 %v656, 0.0
        %v729 = vmax.f32 %v659, 0.0
        %v730 = vmax.f32 %v664, 0.0
        %v731 = vmax.f32 %v667, 0.0
        %v732 = vmax.f32 %v672, 0.0
        %v733 = vmax.f32 %v675, 0.0
        %v734 = vmax.f32 %v680, 0.0
        %v735 = vmax.f32 %v683, 0.0
        %v736 = vmax.f32 %v688, 0.0
        %v737 = vmax.f32 %v691, 0.0
        %v738 = vmax.f32 %v696, 0.0
        %v739 = vmax.f32 %v699, 0.0
        %v740 = vmax.f32 %v704, 0.0
        %v741 = vmax.f32 %v707, 0.0
        %v742 = vmax.f32 %v712, 0.0
        %v743 = vmax.f32 %v715, 0.0
        %v744 = vmax.f32 %v720, 0.0
        %v745 = vmax.f32 %v723, 0.0
        %v746 = vpack.c.bf16 %v727, %v726
        %v747 = vpack.c.bf16 %v729, %v728
        %v748 = vpack.c.bf16 %v731, %v730
        %v749 = vpack.c.bf16 %v733, %v732
        %v750 = vpack.c.bf16 %v735, %v734
        %v751 = vpack.c.bf16 %v737, %v736
        %v752 = vpack.c.bf16 %v739, %v738
        %v753 = vpack.c.bf16 %v741, %v740
        %v754 = vpack.c.bf16 %v743, %v742
        %v755 = vpack.c.bf16 %v745, %v744
        %v756 = vld [vmem:[#allocation3] sm:$0xf]
        %v757 = vld [vmem:[#allocation3 + $0x4] sm:$0xf]
        %v758 = vld [vmem:[#allocation3 + $0x8] sm:$0xf]
        %v759 = vld [vmem:[#allocation3 + $0xc] sm:$0xf]
        %v760 = vld [vmem:[#allocation3 + $0x10] sm:$0xf]
        %v761 = vld [vmem:[#allocation3 + $0x14] sm:$0xf]
        %v762 = vld [vmem:[#allocation3 + $0x18] sm:$0xf]
        %v763 = vld [vmem:[#allocation3 + $0x1c] sm:$0xf]
        %v764 = vld [vmem:[#allocation3 + $0x20] sm:$0xf]
        %v765 = vld [vmem:[#allocation3 + $0x24] sm:$0xf]
        %v766 = vld [vmem:[#allocation3 + $0x28] sm:$0xf]
        %v767 = vld [vmem:[#allocation3 + $0x2c] sm:$0xf]
        %v768 = vld [vmem:[#allocation3 + $0x30] sm:$0xf]
        %v769 = vld [vmem:[#allocation3 + $0x34] sm:$0xf]
        %v770 = vld [vmem:[#allocation3 + $0x38] sm:$0xf]
        %v771 = vld [vmem:[#allocation3 + $0x3c] sm:$0xf]
        %s772 = scalar_lea.vmem %s4, 1
        %v773 = vld [vmem:[%s772] sm:$0x1]
        %v775 = vlaneseq
        %v776 = vshrl.u32 %v775, 7
        %v777 = vsub.s32 0, %v776
        %v778 = vrot.slane %v773, %v777
        %v796 = vunpack.c.l.b16 %v756
        %v797 = vunpack.c.l.b16 %v757
        %v798 = vunpack.c.l.b16 %v758
        %v799 = vunpack.c.l.b16 %v759
        %v800 = vunpack.c.l.b16 %v760
        %v801 = vunpack.c.l.b16 %v761
        %v802 = vunpack.c.l.b16 %v762
        %v803 = vunpack.c.l.b16 %v763
        %v804 = vunpack.c.l.b16 %v764
        %v805 = vunpack.c.l.b16 %v765
        %v806 = vunpack.c.l.b16 %v766
        %v807 = vunpack.c.l.b16 %v767
        %v808 = vunpack.c.l.b16 %v768
        %v809 = vunpack.c.l.b16 %v769
        %v810 = vunpack.c.l.b16 %v770
        %v811 = vunpack.c.l.b16 %v771
        %v812 = vpack.c.b16 %v797, %v796
        %v813 = vpack.c.b16 %v799, %v798
        %v814 = vpack.c.b16 %v801, %v800
        %v815 = vpack.c.b16 %v803, %v802
        %v816 = vpack.c.b16 %v805, %v804
        %v817 = vpack.c.b16 %v807, %v806
        %v818 = vpack.c.b16 %v809, %v808
        %v819 = vpack.c.b16 %v811, %v810
        %828 = vmatprep.subr.bf16.mxu0 0
        %829 = vmatpush1.bf16.msra.mxu0 %v819
        %830 = vmatprep.subr.bf16.mxu0 0
        %831 = vmatpush1.bf16.msra.mxu0 %v818
        %832 = vmatprep.subr.bf16.mxu0 0
        %833 = vmatpush1.bf16.msra.mxu0 %v817
        %834 = vmatprep.subr.bf16.mxu0 0
        %835 = vmatpush1.bf16.msra.mxu0 %v816
        %836 = vmatprep.subr.bf16.mxu0 0
        %837 = vmatpush1.bf16.msra.mxu0 %v815
        %838 = vmatprep.subr.bf16.mxu0 0
        %839 = vmatpush1.bf16.msra.mxu0 %v814
        %840 = vmatprep.subr.bf16.mxu0 0
        %841 = vmatpush1.bf16.msra.mxu0 %v813
        %842 = vmatprep.subr.bf16.mxu0 0
        %843 = vmatpush1.bf16.msra.mxu0 %v812
        %844 = vmatprep.subr.bf16.mxu0 0
        %845 = vmatpush2.bf16.msra.mxu0 0
        %846 = vmatprep.subr.bf16.mxu0 0
        %847 = vmatpush2.bf16.msra.mxu0 0
        %848 = vmatprep.subr.bf16.mxu0 0
        %849 = vmatpush2.bf16.msra.mxu0 0
        %850 = vmatprep.subr.bf16.mxu0 0
        %851 = vmatpush2.bf16.msra.mxu0 0
        %852 = vmatprep.subr.bf16.mxu0 0
        %853 = vmatpush2.bf16.msra.mxu0 0
        %854 = vmatprep.subr.bf16.mxu0 0
        %855 = vmatpush2.bf16.msra.mxu0 0
        %856 = vmatprep.subr.bf16.mxu0 0
        %857 = vmatpush2.bf16.msra.mxu0 0
        %858 = vmatprep.subr.bf16.mxu0 0
        %859 = vmatpush2.bf16.msra.mxu0 0
        %860 = vmatprep.mubr.bf16.mxu0 0
        %861 = vmatmul.mubr.bf16.gmra.mxu0 %v746
        %v862 = vpop.f32.mrf.mxu0
        %v863 = vadd.f32 %v778, %v862
        %v864 = vpop.f32.mrf.mxu0
        %v865 = vpop.f32.mrf.mxu0
        %v866 = vadd.f32 %v778, %v865
        %v867 = vpop.f32.mrf.mxu0
        %868 = vmatprep.mubr.bf16.mxu0 0
        %869 = vmatmul.mubr.bf16.gmra.mxu0 %v747
        %v870 = vpop.f32.mrf.mxu0
        %v871 = vadd.f32 %v778, %v870
        %v872 = vpop.f32.mrf.mxu0
        %v873 = vpop.f32.mrf.mxu0
        %v874 = vadd.f32 %v778, %v873
        %v875 = vpop.f32.mrf.mxu0
        %876 = vmatprep.mubr.bf16.mxu0 0
        %877 = vmatmul.mubr.bf16.gmra.mxu0 %v748
        %v878 = vpop.f32.mrf.mxu0
        %v879 = vadd.f32 %v778, %v878
        %v880 = vpop.f32.mrf.mxu0
        %v881 = vpop.f32.mrf.mxu0
        %v882 = vadd.f32 %v778, %v881
        %v883 = vpop.f32.mrf.mxu0
        %884 = vmatprep.mubr.bf16.mxu0 0
        %885 = vmatmul.mubr.bf16.gmra.mxu0 %v749
        %v886 = vpop.f32.mrf.mxu0
        %v887 = vadd.f32 %v778, %v886
        %v888 = vpop.f32.mrf.mxu0
        %v889 = vpop.f32.mrf.mxu0
        %v890 = vadd.f32 %v778, %v889
        %v891 = vpop.f32.mrf.mxu0
        %892 = vmatprep.mubr.bf16.mxu0 0
        %893 = vmatmul.mubr.bf16.gmra.mxu0 %v750
        %v894 = vpop.f32.mrf.mxu0
        %v895 = vadd.f32 %v778, %v894
        %v896 = vpop.f32.mrf.mxu0
        %v897 = vpop.f32.mrf.mxu0
        %v898 = vadd.f32 %v778, %v897
        %v899 = vpop.f32.mrf.mxu0
        %900 = vmatprep.mubr.bf16.mxu0 0
        %901 = vmatmul.mubr.bf16.gmra.mxu0 %v751
        %v902 = vpop.f32.mrf.mxu0
        %v903 = vadd.f32 %v778, %v902
        %v904 = vpop.f32.mrf.mxu0
        %v905 = vpop.f32.mrf.mxu0
        %v906 = vadd.f32 %v778, %v905
        %v907 = vpop.f32.mrf.mxu0
        %908 = vmatprep.mubr.bf16.mxu0 0
        %909 = vmatmul.mubr.bf16.gmra.mxu0 %v752
        %v910 = vpop.f32.mrf.mxu0
        %v911 = vadd.f32 %v778, %v910
        %v912 = vpop.f32.mrf.mxu0
        %v913 = vpop.f32.mrf.mxu0
        %v914 = vadd.f32 %v778, %v913
        %v915 = vpop.f32.mrf.mxu0
        %916 = vmatprep.mubr.bf16.mxu0 0
        %917 = vmatmul.mubr.bf16.gmra.mxu0 %v753
        %v918 = vpop.f32.mrf.mxu0
        %v919 = vadd.f32 %v778, %v918
        %v920 = vpop.f32.mrf.mxu0
        %v921 = vpop.f32.mrf.mxu0
        %v922 = vadd.f32 %v778, %v921
        %v923 = vpop.f32.mrf.mxu0
        %924 = vmatprep.mubr.bf16.mxu0 0
        %925 = vmatmul.mubr.bf16.gmra.mxu0 %v754
        %v926 = vpop.f32.mrf.mxu0
        %v927 = vadd.f32 %v778, %v926
        %v928 = vpop.f32.mrf.mxu0
        %v929 = vpop.f32.mrf.mxu0
        %v930 = vadd.f32 %v778, %v929
        %v931 = vpop.f32.mrf.mxu0
        %932 = vmatprep.mubr.bf16.mxu0 0
        %933 = vmatmul.mubr.bf16.gmra.mxu0 %v755
        %v934 = vpop.f32.mrf.mxu0
        %v935 = vadd.f32 %v778, %v934
        %v936 = vpop.f32.mrf.mxu0
        %v937 = vpop.f32.mrf.mxu0
        %v938 = vadd.f32 %v778, %v937
        %v939 = vpop.f32.mrf.mxu0
        %940 = vdwg.mxu0
        %v941 = vmax.f32 %v863, 0.0
        %v942 = vmax.f32 %v866, 0.0
        %v943 = vmax.f32 %v871, 0.0
        %v944 = vmax.f32 %v874, 0.0
        %v945 = vmax.f32 %v879, 0.0
        %v946 = vmax.f32 %v882, 0.0
        %v947 = vmax.f32 %v887, 0.0
        %v948 = vmax.f32 %v890, 0.0
        %v949 = vmax.f32 %v895, 0.0
        %v950 = vmax.f32 %v898, 0.0
        %v951 = vmax.f32 %v903, 0.0
        %v952 = vmax.f32 %v906, 0.0
        %v953 = vmax.f32 %v911, 0.0
        %v954 = vmax.f32 %v914, 0.0
        %v955 = vmax.f32 %v919, 0.0
        %v956 = vmax.f32 %v922, 0.0
        %v957 = vmax.f32 %v927, 0.0
        %v958 = vmax.f32 %v930, 0.0
        %v959 = vmax.f32 %v935, 0.0
        %v960 = vmax.f32 %v938, 0.0
        %v961 = vpack.c.bf16 %v942, %v941
        %v962 = vpack.c.bf16 %v944, %v943
        %v963 = vpack.c.bf16 %v946, %v945
        %v964 = vpack.c.bf16 %v948, %v947
        %v965 = vpack.c.bf16 %v950, %v949
        %v966 = vpack.c.bf16 %v952, %v951
        %v967 = vpack.c.bf16 %v954, %v953
        %v968 = vpack.c.bf16 %v956, %v955
        %v969 = vpack.c.bf16 %v958, %v957
        %v970 = vpack.c.bf16 %v960, %v959
        %s971 = scalar_lea.vmem [#allocation3], 64
        %v972 = vld [vmem:[%s971] sm:$0xf]
        %v973 = vld [vmem:[%s971 + $0x4] sm:$0xf]
        %v974 = vld [vmem:[%s971 + $0x8] sm:$0xf]
        %v975 = vld [vmem:[%s971 + $0xc] sm:$0xf]
        %v976 = vld [vmem:[%s971 + $0x10] sm:$0xf]
        %v977 = vld [vmem:[%s971 + $0x14] sm:$0xf]
        %v978 = vld [vmem:[%s971 + $0x18] sm:$0xf]
        %v979 = vld [vmem:[%s971 + $0x1c] sm:$0xf]
        %v980 = vld [vmem:[%s971 + $0x20] sm:$0xf]
        %v981 = vld [vmem:[%s971 + $0x24] sm:$0xf]
        %v982 = vld [vmem:[%s971 + $0x28] sm:$0xf]
        %v983 = vld [vmem:[%s971 + $0x2c] sm:$0xf]
        %v984 = vld [vmem:[%s971 + $0x30] sm:$0xf]
        %v985 = vld [vmem:[%s971 + $0x34] sm:$0xf]
        %v986 = vld [vmem:[%s971 + $0x38] sm:$0xf]
        %v987 = vld [vmem:[%s971 + $0x3c] sm:$0xf]
        %s988 = scalar_lea.vmem %s4, 2
        %v989 = vld [vmem:[%s988] sm:$0x1]
        %v991 = vlaneseq
        %v992 = vshrl.u32 %v991, 7
        %v993 = vsub.s32 0, %v992
        %v994 = vrot.slane %v989, %v993
        %v1012 = vunpack.c.l.b16 %v972
        %v1013 = vunpack.c.l.b16 %v973
        %v1014 = vunpack.c.l.b16 %v974
        %v1015 = vunpack.c.l.b16 %v975
        %v1016 = vunpack.c.l.b16 %v976
        %v1017 = vunpack.c.l.b16 %v977
        %v1018 = vunpack.c.l.b16 %v978
        %v1019 = vunpack.c.l.b16 %v979
        %v1020 = vunpack.c.l.b16 %v980
        %v1021 = vunpack.c.l.b16 %v981
        %v1022 = vunpack.c.l.b16 %v982
        %v1023 = vunpack.c.l.b16 %v983
        %v1024 = vunpack.c.l.b16 %v984
        %v1025 = vunpack.c.l.b16 %v985
        %v1026 = vunpack.c.l.b16 %v986
        %v1027 = vunpack.c.l.b16 %v987
        %v1028 = vpack.c.b16 %v1013, %v1012
        %v1029 = vpack.c.b16 %v1015, %v1014
        %v1030 = vpack.c.b16 %v1017, %v1016
        %v1031 = vpack.c.b16 %v1019, %v1018
        %v1032 = vpack.c.b16 %v1021, %v1020
        %v1033 = vpack.c.b16 %v1023, %v1022
        %v1034 = vpack.c.b16 %v1025, %v1024
        %v1035 = vpack.c.b16 %v1027, %v1026
        %1044 = vmatprep.subr.bf16.mxu0 0
        %1045 = vmatpush1.bf16.msra.mxu0 %v1035
        %1046 = vmatprep.subr.bf16.mxu0 0
        %1047 = vmatpush1.bf16.msra.mxu0 %v1034
        %1048 = vmatprep.subr.bf16.mxu0 0
        %1049 = vmatpush1.bf16.msra.mxu0 %v1033
        %1050 = vmatprep.subr.bf16.mxu0 0
        %1051 = vmatpush1.bf16.msra.mxu0 %v1032
        %1052 = vmatprep.subr.bf16.mxu0 0
        %1053 = vmatpush1.bf16.msra.mxu0 %v1031
        %1054 = vmatprep.subr.bf16.mxu0 0
        %1055 = vmatpush1.bf16.msra.mxu0 %v1030
        %1056 = vmatprep.subr.bf16.mxu0 0
        %1057 = vmatpush1.bf16.msra.mxu0 %v1029
        %1058 = vmatprep.subr.bf16.mxu0 0
        %1059 = vmatpush1.bf16.msra.mxu0 %v1028
        %1060 = vmatprep.subr.bf16.mxu0 0
        %1061 = vmatpush2.bf16.msra.mxu0 0
        %1062 = vmatprep.subr.bf16.mxu0 0
        %1063 = vmatpush2.bf16.msra.mxu0 0
        %1064 = vmatprep.subr.bf16.mxu0 0
        %1065 = vmatpush2.bf16.msra.mxu0 0
        %1066 = vmatprep.subr.bf16.mxu0 0
        %1067 = vmatpush2.bf16.msra.mxu0 0
        %1068 = vmatprep.subr.bf16.mxu0 0
        %1069 = vmatpush2.bf16.msra.mxu0 0
        %1070 = vmatprep.subr.bf16.mxu0 0
        %1071 = vmatpush2.bf16.msra.mxu0 0
        %1072 = vmatprep.subr.bf16.mxu0 0
        %1073 = vmatpush2.bf16.msra.mxu0 0
        %1074 = vmatprep.subr.bf16.mxu0 0
        %1075 = vmatpush2.bf16.msra.mxu0 0
        %1076 = vmatprep.mubr.bf16.mxu0 0
        %1077 = vmatmul.mubr.bf16.gmra.mxu0 %v961
        %v1078 = vpop.f32.mrf.mxu0
        %v1079 = vadd.f32 %v994, %v1078
        %v1080 = vpop.f32.mrf.mxu0
        %v1081 = vpop.f32.mrf.mxu0
        %v1082 = vadd.f32 %v994, %v1081
        %v1083 = vpop.f32.mrf.mxu0
        %1084 = vmatprep.mubr.bf16.mxu0 0
        %1085 = vmatmul.mubr.bf16.gmra.mxu0 %v962
        %v1086 = vpop.f32.mrf.mxu0
        %v1087 = vadd.f32 %v994, %v1086
        %v1088 = vpop.f32.mrf.mxu0
        %v1089 = vpop.f32.mrf.mxu0
        %v1090 = vadd.f32 %v994, %v1089
        %v1091 = vpop.f32.mrf.mxu0
        %1092 = vmatprep.mubr.bf16.mxu0 0
        %1093 = vmatmul.mubr.bf16.gmra.mxu0 %v963
        %v1094 = vpop.f32.mrf.mxu0
        %v1095 = vadd.f32 %v994, %v1094
        %v1096 = vpop.f32.mrf.mxu0
        %v1097 = vpop.f32.mrf.mxu0
        %v1098 = vadd.f32 %v994, %v1097
        %v1099 = vpop.f32.mrf.mxu0
        %1100 = vmatprep.mubr.bf16.mxu0 0
        %1101 = vmatmul.mubr.bf16.gmra.mxu0 %v964
        %v1102 = vpop.f32.mrf.mxu0
        %v1103 = vadd.f32 %v994, %v1102
        %v1104 = vpop.f32.mrf.mxu0
        %v1105 = vpop.f32.mrf.mxu0
        %v1106 = vadd.f32 %v994, %v1105
        %v1107 = vpop.f32.mrf.mxu0
        %1108 = vmatprep.mubr.bf16.mxu0 0
        %1109 = vmatmul.mubr.bf16.gmra.mxu0 %v965
        %v1110 = vpop.f32.mrf.mxu0
        %v1111 = vadd.f32 %v994, %v1110
        %v1112 = vpop.f32.mrf.mxu0
        %v1113 = vpop.f32.mrf.mxu0
        %v1114 = vadd.f32 %v994, %v1113
        %v1115 = vpop.f32.mrf.mxu0
        %1116 = vmatprep.mubr.bf16.mxu0 0
        %1117 = vmatmul.mubr.bf16.gmra.mxu0 %v966
        %v1118 = vpop.f32.mrf.mxu0
        %v1119 = vadd.f32 %v994, %v1118
        %v1120 = vpop.f32.mrf.mxu0
        %v1121 = vpop.f32.mrf.mxu0
        %v1122 = vadd.f32 %v994, %v1121
        %v1123 = vpop.f32.mrf.mxu0
        %1124 = vmatprep.mubr.bf16.mxu0 0
        %1125 = vmatmul.mubr.bf16.gmra.mxu0 %v967
        %v1126 = vpop.f32.mrf.mxu0
        %v1127 = vadd.f32 %v994, %v1126
        %v1128 = vpop.f32.mrf.mxu0
        %v1129 = vpop.f32.mrf.mxu0
        %v1130 = vadd.f32 %v994, %v1129
        %v1131 = vpop.f32.mrf.mxu0
        %1132 = vmatprep.mubr.bf16.mxu0 0
        %1133 = vmatmul.mubr.bf16.gmra.mxu0 %v968
        %v1134 = vpop.f32.mrf.mxu0
        %v1135 = vadd.f32 %v994, %v1134
        %v1136 = vpop.f32.mrf.mxu0
        %v1137 = vpop.f32.mrf.mxu0
        %v1138 = vadd.f32 %v994, %v1137
        %v1139 = vpop.f32.mrf.mxu0
        %1140 = vmatprep.mubr.bf16.mxu0 0
        %1141 = vmatmul.mubr.bf16.gmra.mxu0 %v969
        %v1142 = vpop.f32.mrf.mxu0
        %v1143 = vadd.f32 %v994, %v1142
        %v1144 = vpop.f32.mrf.mxu0
        %v1145 = vpop.f32.mrf.mxu0
        %v1146 = vadd.f32 %v994, %v1145
        %v1147 = vpop.f32.mrf.mxu0
        %1148 = vmatprep.mubr.bf16.mxu0 0
        %1149 = vmatmul.mubr.bf16.gmra.mxu0 %v970
        %v1150 = vpop.f32.mrf.mxu0
        %v1151 = vadd.f32 %v994, %v1150
        %v1152 = vpop.f32.mrf.mxu0
        %v1153 = vpop.f32.mrf.mxu0
        %v1154 = vadd.f32 %v994, %v1153
        %v1155 = vpop.f32.mrf.mxu0
        %1156 = vdwg.mxu0
        %v1157 = vmax.f32 %v1079, 0.0
        %v1158 = vmax.f32 %v1082, 0.0
        %v1159 = vmax.f32 %v1087, 0.0
        %v1160 = vmax.f32 %v1090, 0.0
        %v1161 = vmax.f32 %v1095, 0.0
        %v1162 = vmax.f32 %v1098, 0.0
        %v1163 = vmax.f32 %v1103, 0.0
        %v1164 = vmax.f32 %v1106, 0.0
        %v1165 = vmax.f32 %v1111, 0.0
        %v1166 = vmax.f32 %v1114, 0.0
        %v1167 = vmax.f32 %v1119, 0.0
        %v1168 = vmax.f32 %v1122, 0.0
        %v1169 = vmax.f32 %v1127, 0.0
        %v1170 = vmax.f32 %v1130, 0.0
        %v1171 = vmax.f32 %v1135, 0.0
        %v1172 = vmax.f32 %v1138, 0.0
        %v1173 = vmax.f32 %v1143, 0.0
        %v1174 = vmax.f32 %v1146, 0.0
        %v1175 = vmax.f32 %v1151, 0.0
        %v1176 = vmax.f32 %v1154, 0.0
        %v1177 = vpack.c.bf16 %v1158, %v1157
        %v1178 = vpack.c.bf16 %v1160, %v1159
        %v1179 = vpack.c.bf16 %v1162, %v1161
        %v1180 = vpack.c.bf16 %v1164, %v1163
        %v1181 = vpack.c.bf16 %v1166, %v1165
        %v1182 = vpack.c.bf16 %v1168, %v1167
        %v1183 = vpack.c.bf16 %v1170, %v1169
        %v1184 = vpack.c.bf16 %v1172, %v1171
        %v1185 = vpack.c.bf16 %v1174, %v1173
        %v1186 = vpack.c.bf16 %v1176, %v1175
        %s1187 = scalar_lea.vmem [#allocation3], 128
        %v1188 = vld [vmem:[%s1187] sm:$0xf]
        %v1189 = vld [vmem:[%s1187 + $0x4] sm:$0xf]
        %v1190 = vld [vmem:[%s1187 + $0x8] sm:$0xf]
        %v1191 = vld [vmem:[%s1187 + $0xc] sm:$0xf]
        %v1192 = vld [vmem:[%s1187 + $0x10] sm:$0xf]
        %v1193 = vld [vmem:[%s1187 + $0x14] sm:$0xf]
        %v1194 = vld [vmem:[%s1187 + $0x18] sm:$0xf]
        %v1195 = vld [vmem:[%s1187 + $0x1c] sm:$0xf]
        %v1196 = vld [vmem:[%s1187 + $0x20] sm:$0xf]
        %v1197 = vld [vmem:[%s1187 + $0x24] sm:$0xf]
        %v1198 = vld [vmem:[%s1187 + $0x28] sm:$0xf]
        %v1199 = vld [vmem:[%s1187 + $0x2c] sm:$0xf]
        %v1200 = vld [vmem:[%s1187 + $0x30] sm:$0xf]
        %v1201 = vld [vmem:[%s1187 + $0x34] sm:$0xf]
        %v1202 = vld [vmem:[%s1187 + $0x38] sm:$0xf]
        %v1203 = vld [vmem:[%s1187 + $0x3c] sm:$0xf]
        %s1204 = scalar_lea.vmem %s4, 3
        %v1205 = vld [vmem:[%s1204] sm:$0x1]
        %v1207 = vlaneseq
        %v1208 = vshrl.u32 %v1207, 7
        %v1209 = vsub.s32 0, %v1208
        %v1210 = vrot.slane %v1205, %v1209
        %v1228 = vunpack.c.l.b16 %v1188
        %v1229 = vunpack.c.l.b16 %v1189
        %v1230 = vunpack.c.l.b16 %v1190
        %v1231 = vunpack.c.l.b16 %v1191
        %v1232 = vunpack.c.l.b16 %v1192
        %v1233 = vunpack.c.l.b16 %v1193
        %v1234 = vunpack.c.l.b16 %v1194
        %v1235 = vunpack.c.l.b16 %v1195
        %v1236 = vunpack.c.l.b16 %v1196
        %v1237 = vunpack.c.l.b16 %v1197
        %v1238 = vunpack.c.l.b16 %v1198
        %v1239 = vunpack.c.l.b16 %v1199
        %v1240 = vunpack.c.l.b16 %v1200
        %v1241 = vunpack.c.l.b16 %v1201
        %v1242 = vunpack.c.l.b16 %v1202
        %v1243 = vunpack.c.l.b16 %v1203
        %v1244 = vpack.c.b16 %v1229, %v1228
        %v1245 = vpack.c.b16 %v1231, %v1230
        %v1246 = vpack.c.b16 %v1233, %v1232
        %v1247 = vpack.c.b16 %v1235, %v1234
        %v1248 = vpack.c.b16 %v1237, %v1236
        %v1249 = vpack.c.b16 %v1239, %v1238
        %v1250 = vpack.c.b16 %v1241, %v1240
        %v1251 = vpack.c.b16 %v1243, %v1242
        %1260 = vmatprep.subr.bf16.mxu0 0
        %1261 = vmatpush1.bf16.msra.mxu0 %v1251
        %1262 = vmatprep.subr.bf16.mxu0 0
        %1263 = vmatpush1.bf16.msra.mxu0 %v1250
        %1264 = vmatprep.subr.bf16.mxu0 0
        %1265 = vmatpush1.bf16.msra.mxu0 %v1249
        %1266 = vmatprep.subr.bf16.mxu0 0
        %1267 = vmatpush1.bf16.msra.mxu0 %v1248
        %1268 = vmatprep.subr.bf16.mxu0 0
        %1269 = vmatpush1.bf16.msra.mxu0 %v1247
        %1270 = vmatprep.subr.bf16.mxu0 0
        %1271 = vmatpush1.bf16.msra.mxu0 %v1246
        %1272 = vmatprep.subr.bf16.mxu0 0
        %1273 = vmatpush1.bf16.msra.mxu0 %v1245
        %1274 = vmatprep.subr.bf16.mxu0 0
        %1275 = vmatpush1.bf16.msra.mxu0 %v1244
        %1276 = vmatprep.subr.bf16.mxu0 0
        %1277 = vmatpush2.bf16.msra.mxu0 0
        %1278 = vmatprep.subr.bf16.mxu0 0
        %1279 = vmatpush2.bf16.msra.mxu0 0
        %1280 = vmatprep.subr.bf16.mxu0 0
        %1281 = vmatpush2.bf16.msra.mxu0 0
        %1282 = vmatprep.subr.bf16.mxu0 0
        %1283 = vmatpush2.bf16.msra.mxu0 0
        %1284 = vmatprep.subr.bf16.mxu0 0
        %1285 = vmatpush2.bf16.msra.mxu0 0
        %1286 = vmatprep.subr.bf16.mxu0 0
        %1287 = vmatpush2.bf16.msra.mxu0 0
        %1288 = vmatprep.subr.bf16.mxu0 0
        %1289 = vmatpush2.bf16.msra.mxu0 0
        %1290 = vmatprep.subr.bf16.mxu0 0
        %1291 = vmatpush2.bf16.msra.mxu0 0
        %1292 = vmatprep.mubr.bf16.mxu0 0
        %1293 = vmatmul.mubr.bf16.gmra.mxu0 %v1177
        %v1294 = vpop.f32.mrf.mxu0
        %v1295 = vadd.f32 %v1210, %v1294
        %v1296 = vpop.f32.mrf.mxu0
        %v1297 = vpop.f32.mrf.mxu0
        %v1298 = vadd.f32 %v1210, %v1297
        %v1299 = vpop.f32.mrf.mxu0
        %1300 = vmatprep.mubr.bf16.mxu0 0
        %1301 = vmatmul.mubr.bf16.gmra.mxu0 %v1178
        %v1302 = vpop.f32.mrf.mxu0
        %v1303 = vadd.f32 %v1210, %v1302
        %v1304 = vpop.f32.mrf.mxu0
        %v1305 = vpop.f32.mrf.mxu0
        %v1306 = vadd.f32 %v1210, %v1305
        %v1307 = vpop.f32.mrf.mxu0
        %1308 = vmatprep.mubr.bf16.mxu0 0
        %1309 = vmatmul.mubr.bf16.gmra.mxu0 %v1179
        %v1310 = vpop.f32.mrf.mxu0
        %v1311 = vadd.f32 %v1210, %v1310
        %v1312 = vpop.f32.mrf.mxu0
        %v1313 = vpop.f32.mrf.mxu0
        %v1314 = vadd.f32 %v1210, %v1313
        %v1315 = vpop.f32.mrf.mxu0
        %1316 = vmatprep.mubr.bf16.mxu0 0
        %1317 = vmatmul.mubr.bf16.gmra.mxu0 %v1180
        %v1318 = vpop.f32.mrf.mxu0
        %v1319 = vadd.f32 %v1210, %v1318
        %v1320 = vpop.f32.mrf.mxu0
        %v1321 = vpop.f32.mrf.mxu0
        %v1322 = vadd.f32 %v1210, %v1321
        %v1323 = vpop.f32.mrf.mxu0
        %1324 = vmatprep.mubr.bf16.mxu0 0
        %1325 = vmatmul.mubr.bf16.gmra.mxu0 %v1181
        %v1326 = vpop.f32.mrf.mxu0
        %v1327 = vadd.f32 %v1210, %v1326
        %v1328 = vpop.f32.mrf.mxu0
        %v1329 = vpop.f32.mrf.mxu0
        %v1330 = vadd.f32 %v1210, %v1329
        %v1331 = vpop.f32.mrf.mxu0
        %1332 = vmatprep.mubr.bf16.mxu0 0
        %1333 = vmatmul.mubr.bf16.gmra.mxu0 %v1182
        %v1334 = vpop.f32.mrf.mxu0
        %v1335 = vadd.f32 %v1210, %v1334
        %v1336 = vpop.f32.mrf.mxu0
        %v1337 = vpop.f32.mrf.mxu0
        %v1338 = vadd.f32 %v1210, %v1337
        %v1339 = vpop.f32.mrf.mxu0
        %1340 = vmatprep.mubr.bf16.mxu0 0
        %1341 = vmatmul.mubr.bf16.gmra.mxu0 %v1183
        %v1342 = vpop.f32.mrf.mxu0
        %v1343 = vadd.f32 %v1210, %v1342
        %v1344 = vpop.f32.mrf.mxu0
        %v1345 = vpop.f32.mrf.mxu0
        %v1346 = vadd.f32 %v1210, %v1345
        %v1347 = vpop.f32.mrf.mxu0
        %1348 = vmatprep.mubr.bf16.mxu0 0
        %1349 = vmatmul.mubr.bf16.gmra.mxu0 %v1184
        %v1350 = vpop.f32.mrf.mxu0
        %v1351 = vadd.f32 %v1210, %v1350
        %v1352 = vpop.f32.mrf.mxu0
        %v1353 = vpop.f32.mrf.mxu0
        %v1354 = vadd.f32 %v1210, %v1353
        %v1355 = vpop.f32.mrf.mxu0
        %1356 = vmatprep.mubr.bf16.mxu0 0
        %1357 = vmatmul.mubr.bf16.gmra.mxu0 %v1185
        %v1358 = vpop.f32.mrf.mxu0
        %v1359 = vadd.f32 %v1210, %v1358
        %v1360 = vpop.f32.mrf.mxu0
        %v1361 = vpop.f32.mrf.mxu0
        %v1362 = vadd.f32 %v1210, %v1361
        %v1363 = vpop.f32.mrf.mxu0
        %1364 = vmatprep.mubr.bf16.mxu0 0
        %1365 = vmatmul.mubr.bf16.gmra.mxu0 %v1186
        %v1366 = vpop.f32.mrf.mxu0
        %v1367 = vadd.f32 %v1210, %v1366
        %v1368 = vpop.f32.mrf.mxu0
        %v1369 = vpop.f32.mrf.mxu0
        %v1370 = vadd.f32 %v1210, %v1369
        %v1371 = vpop.f32.mrf.mxu0
        %1372 = vdwg.mxu0
        %v1373 = vmax.f32 %v1295, 0.0
        %v1374 = vmax.f32 %v1298, 0.0
        %v1375 = vmax.f32 %v1303, 0.0
        %v1376 = vmax.f32 %v1306, 0.0
        %v1377 = vmax.f32 %v1311, 0.0
        %v1378 = vmax.f32 %v1314, 0.0
        %v1379 = vmax.f32 %v1319, 0.0
        %v1380 = vmax.f32 %v1322, 0.0
        %v1381 = vmax.f32 %v1327, 0.0
        %v1382 = vmax.f32 %v1330, 0.0
        %v1383 = vmax.f32 %v1335, 0.0
        %v1384 = vmax.f32 %v1338, 0.0
        %v1385 = vmax.f32 %v1343, 0.0
        %v1386 = vmax.f32 %v1346, 0.0
        %v1387 = vmax.f32 %v1351, 0.0
        %v1388 = vmax.f32 %v1354, 0.0
        %v1389 = vmax.f32 %v1359, 0.0
        %v1390 = vmax.f32 %v1362, 0.0
        %v1391 = vmax.f32 %v1367, 0.0
        %v1392 = vmax.f32 %v1370, 0.0
        %v1393 = vpack.c.bf16 %v1374, %v1373
        %v1394 = vpack.c.bf16 %v1376, %v1375
        %v1395 = vpack.c.bf16 %v1378, %v1377
        %v1396 = vpack.c.bf16 %v1380, %v1379
        %v1397 = vpack.c.bf16 %v1382, %v1381
        %v1398 = vpack.c.bf16 %v1384, %v1383
        %v1399 = vpack.c.bf16 %v1386, %v1385
        %v1400 = vpack.c.bf16 %v1388, %v1387
        %v1401 = vpack.c.bf16 %v1390, %v1389
        %v1402 = vpack.c.bf16 %v1392, %v1391
        %s1403 = scalar_lea.vmem [#allocation3], 192
        %v1404 = vld [vmem:[%s1403] sm:$0xf]
        %v1405 = vld [vmem:[%s1403 + $0x4] sm:$0xf]
        %v1406 = vld [vmem:[%s1403 + $0x8] sm:$0xf]
        %v1407 = vld [vmem:[%s1403 + $0xc] sm:$0xf]
        %v1408 = vld [vmem:[%s1403 + $0x10] sm:$0xf]
        %v1409 = vld [vmem:[%s1403 + $0x14] sm:$0xf]
        %v1410 = vld [vmem:[%s1403 + $0x18] sm:$0xf]
        %v1411 = vld [vmem:[%s1403 + $0x1c] sm:$0xf]
        %v1412 = vld [vmem:[%s1403 + $0x20] sm:$0xf]
        %v1413 = vld [vmem:[%s1403 + $0x24] sm:$0xf]
        %v1414 = vld [vmem:[%s1403 + $0x28] sm:$0xf]
        %v1415 = vld [vmem:[%s1403 + $0x2c] sm:$0xf]
        %v1416 = vld [vmem:[%s1403 + $0x30] sm:$0xf]
        %v1417 = vld [vmem:[%s1403 + $0x34] sm:$0xf]
        %v1418 = vld [vmem:[%s1403 + $0x38] sm:$0xf]
        %v1419 = vld [vmem:[%s1403 + $0x3c] sm:$0xf]
        %s1420 = scalar_lea.vmem %s4, 4
        %v1421 = vld [vmem:[%s1420] sm:$0x1]
        %v1423 = vlaneseq
        %v1424 = vshrl.u32 %v1423, 7
        %v1425 = vsub.s32 0, %v1424
        %v1426 = vrot.slane %v1421, %v1425
        %v1444 = vunpack.c.l.b16 %v1404
        %v1445 = vunpack.c.l.b16 %v1405
        %v1446 = vunpack.c.l.b16 %v1406
        %v1447 = vunpack.c.l.b16 %v1407
        %v1448 = vunpack.c.l.b16 %v1408
        %v1449 = vunpack.c.l.b16 %v1409
        %v1450 = vunpack.c.l.b16 %v1410
        %v1451 = vunpack.c.l.b16 %v1411
        %v1452 = vunpack.c.l.b16 %v1412
        %v1453 = vunpack.c.l.b16 %v1413
        %v1454 = vunpack.c.l.b16 %v1414
        %v1455 = vunpack.c.l.b16 %v1415
        %v1456 = vunpack.c.l.b16 %v1416
        %v1457 = vunpack.c.l.b16 %v1417
        %v1458 = vunpack.c.l.b16 %v1418
        %v1459 = vunpack.c.l.b16 %v1419
        %v1460 = vpack.c.b16 %v1445, %v1444
        %v1461 = vpack.c.b16 %v1447, %v1446
        %v1462 = vpack.c.b16 %v1449, %v1448
        %v1463 = vpack.c.b16 %v1451, %v1450
        %v1464 = vpack.c.b16 %v1453, %v1452
        %v1465 = vpack.c.b16 %v1455, %v1454
        %v1466 = vpack.c.b16 %v1457, %v1456
        %v1467 = vpack.c.b16 %v1459, %v1458
        %1476 = vmatprep.subr.bf16.mxu0 0
        %1477 = vmatpush1.bf16.msra.mxu0 %v1467
        %1478 = vmatprep.subr.bf16.mxu0 0
        %1479 = vmatpush1.bf16.msra.mxu0 %v1466
        %1480 = vmatprep.subr.bf16.mxu0 0
        %1481 = vmatpush1.bf16.msra.mxu0 %v1465
        %1482 = vmatprep.subr.bf16.mxu0 0
        %1483 = vmatpush1.bf16.msra.mxu0 %v1464
        %1484 = vmatprep.subr.bf16.mxu0 0
        %1485 = vmatpush1.bf16.msra.mxu0 %v1463
        %1486 = vmatprep.subr.bf16.mxu0 0
        %1487 = vmatpush1.bf16.msra.mxu0 %v1462
        %1488 = vmatprep.subr.bf16.mxu0 0
        %1489 = vmatpush1.bf16.msra.mxu0 %v1461
        %1490 = vmatprep.subr.bf16.mxu0 0
        %1491 = vmatpush1.bf16.msra.mxu0 %v1460
        %1492 = vmatprep.subr.bf16.mxu0 0
        %1493 = vmatpush2.bf16.msra.mxu0 0
        %1494 = vmatprep.subr.bf16.mxu0 0
        %1495 = vmatpush2.bf16.msra.mxu0 0
        %1496 = vmatprep.subr.bf16.mxu0 0
        %1497 = vmatpush2.bf16.msra.mxu0 0
        %1498 = vmatprep.subr.bf16.mxu0 0
        %1499 = vmatpush2.bf16.msra.mxu0 0
        %1500 = vmatprep.subr.bf16.mxu0 0
        %1501 = vmatpush2.bf16.msra.mxu0 0
        %1502 = vmatprep.subr.bf16.mxu0 0
        %1503 = vmatpush2.bf16.msra.mxu0 0
        %1504 = vmatprep.subr.bf16.mxu0 0
        %1505 = vmatpush2.bf16.msra.mxu0 0
        %1506 = vmatprep.subr.bf16.mxu0 0
        %1507 = vmatpush2.bf16.msra.mxu0 0
        %1508 = vmatprep.mubr.bf16.mxu0 0
        %1509 = vmatmul.mubr.bf16.gmra.mxu0 %v1393
        %v1510 = vpop.f32.mrf.mxu0
        %v1511 = vadd.f32 %v1426, %v1510
        %v1512 = vpop.f32.mrf.mxu0
        %v1513 = vpop.f32.mrf.mxu0
        %v1514 = vadd.f32 %v1426, %v1513
        %v1515 = vpop.f32.mrf.mxu0
        %1516 = vmatprep.mubr.bf16.mxu0 0
        %1517 = vmatmul.mubr.bf16.gmra.mxu0 %v1394
        %v1518 = vpop.f32.mrf.mxu0
        %v1519 = vadd.f32 %v1426, %v1518
        %v1520 = vpop.f32.mrf.mxu0
        %v1521 = vpop.f32.mrf.mxu0
        %v1522 = vadd.f32 %v1426, %v1521
        %v1523 = vpop.f32.mrf.mxu0
        %1524 = vmatprep.mubr.bf16.mxu0 0
        %1525 = vmatmul.mubr.bf16.gmra.mxu0 %v1395
        %v1526 = vpop.f32.mrf.mxu0
        %v1527 = vadd.f32 %v1426, %v1526
        %v1528 = vpop.f32.mrf.mxu0
        %v1529 = vpop.f32.mrf.mxu0
        %v1530 = vadd.f32 %v1426, %v1529
        %v1531 = vpop.f32.mrf.mxu0
        %1532 = vmatprep.mubr.bf16.mxu0 0
        %1533 = vmatmul.mubr.bf16.gmra.mxu0 %v1396
        %v1534 = vpop.f32.mrf.mxu0
        %v1535 = vadd.f32 %v1426, %v1534
        %v1536 = vpop.f32.mrf.mxu0
        %v1537 = vpop.f32.mrf.mxu0
        %v1538 = vadd.f32 %v1426, %v1537
        %v1539 = vpop.f32.mrf.mxu0
        %1540 = vmatprep.mubr.bf16.mxu0 0
        %1541 = vmatmul.mubr.bf16.gmra.mxu0 %v1397
        %v1542 = vpop.f32.mrf.mxu0
        %v1543 = vadd.f32 %v1426, %v1542
        %v1544 = vpop.f32.mrf.mxu0
        %v1545 = vpop.f32.mrf.mxu0
        %v1546 = vadd.f32 %v1426, %v1545
        %v1547 = vpop.f32.mrf.mxu0
        %1548 = vmatprep.mubr.bf16.mxu0 0
        %1549 = vmatmul.mubr.bf16.gmra.mxu0 %v1398
        %v1550 = vpop.f32.mrf.mxu0
        %v1551 = vadd.f32 %v1426, %v1550
        %v1552 = vpop.f32.mrf.mxu0
        %v1553 = vpop.f32.mrf.mxu0
        %v1554 = vadd.f32 %v1426, %v1553
        %v1555 = vpop.f32.mrf.mxu0
        %1556 = vmatprep.mubr.bf16.mxu0 0
        %1557 = vmatmul.mubr.bf16.gmra.mxu0 %v1399
        %v1558 = vpop.f32.mrf.mxu0
        %v1559 = vadd.f32 %v1426, %v1558
        %v1560 = vpop.f32.mrf.mxu0
        %v1561 = vpop.f32.mrf.mxu0
        %v1562 = vadd.f32 %v1426, %v1561
        %v1563 = vpop.f32.mrf.mxu0
        %1564 = vmatprep.mubr.bf16.mxu0 0
        %1565 = vmatmul.mubr.bf16.gmra.mxu0 %v1400
        %v1566 = vpop.f32.mrf.mxu0
        %v1567 = vadd.f32 %v1426, %v1566
        %v1568 = vpop.f32.mrf.mxu0
        %v1569 = vpop.f32.mrf.mxu0
        %v1570 = vadd.f32 %v1426, %v1569
        %v1571 = vpop.f32.mrf.mxu0
        %1572 = vmatprep.mubr.bf16.mxu0 0
        %1573 = vmatmul.mubr.bf16.gmra.mxu0 %v1401
        %v1574 = vpop.f32.mrf.mxu0
        %v1575 = vadd.f32 %v1426, %v1574
        %v1576 = vpop.f32.mrf.mxu0
        %v1577 = vpop.f32.mrf.mxu0
        %v1578 = vadd.f32 %v1426, %v1577
        %v1579 = vpop.f32.mrf.mxu0
        %1580 = vmatprep.mubr.bf16.mxu0 0
        %1581 = vmatmul.mubr.bf16.gmra.mxu0 %v1402
        %v1582 = vpop.f32.mrf.mxu0
        %v1583 = vadd.f32 %v1426, %v1582
        %v1584 = vpop.f32.mrf.mxu0
        %v1585 = vpop.f32.mrf.mxu0
        %v1586 = vadd.f32 %v1426, %v1585
        %v1587 = vpop.f32.mrf.mxu0
        %1588 = vdwg.mxu0
        %v1589 = vmax.f32 %v1511, 0.0
        %v1590 = vmax.f32 %v1514, 0.0
        %v1591 = vmax.f32 %v1519, 0.0
        %v1592 = vmax.f32 %v1522, 0.0
        %v1593 = vmax.f32 %v1527, 0.0
        %v1594 = vmax.f32 %v1530, 0.0
        %v1595 = vmax.f32 %v1535, 0.0
        %v1596 = vmax.f32 %v1538, 0.0
        %v1597 = vmax.f32 %v1543, 0.0
        %v1598 = vmax.f32 %v1546, 0.0
        %v1599 = vmax.f32 %v1551, 0.0
        %v1600 = vmax.f32 %v1554, 0.0
        %v1601 = vmax.f32 %v1559, 0.0
        %v1602 = vmax.f32 %v1562, 0.0
        %v1603 = vmax.f32 %v1567, 0.0
        %v1604 = vmax.f32 %v1570, 0.0
        %v1605 = vmax.f32 %v1575, 0.0
        %v1606 = vmax.f32 %v1578, 0.0
        %v1607 = vmax.f32 %v1583, 0.0
        %v1608 = vmax.f32 %v1586, 0.0
        %v1609 = vpack.c.bf16 %v1590, %v1589
        %v1610 = vpack.c.bf16 %v1592, %v1591
        %v1611 = vpack.c.bf16 %v1594, %v1593
        %v1612 = vpack.c.bf16 %v1596, %v1595
        %v1613 = vpack.c.bf16 %v1598, %v1597
        %v1614 = vpack.c.bf16 %v1600, %v1599
        %v1615 = vpack.c.bf16 %v1602, %v1601
        %v1616 = vpack.c.bf16 %v1604, %v1603
        %v1617 = vpack.c.bf16 %v1606, %v1605
        %v1618 = vpack.c.bf16 %v1608, %v1607
        %s1619 = scalar_lea.vmem [#allocation3], 256
        %v1620 = vld [vmem:[%s1619] sm:$0xf]
        %v1621 = vld [vmem:[%s1619 + $0x4] sm:$0xf]
        %v1622 = vld [vmem:[%s1619 + $0x8] sm:$0xf]
        %v1623 = vld [vmem:[%s1619 + $0xc] sm:$0xf]
        %v1624 = vld [vmem:[%s1619 + $0x10] sm:$0xf]
        %v1625 = vld [vmem:[%s1619 + $0x14] sm:$0xf]
        %v1626 = vld [vmem:[%s1619 + $0x18] sm:$0xf]
        %v1627 = vld [vmem:[%s1619 + $0x1c] sm:$0xf]
        %v1628 = vld [vmem:[%s1619 + $0x20] sm:$0xf]
        %v1629 = vld [vmem:[%s1619 + $0x24] sm:$0xf]
        %v1630 = vld [vmem:[%s1619 + $0x28] sm:$0xf]
        %v1631 = vld [vmem:[%s1619 + $0x2c] sm:$0xf]
        %v1632 = vld [vmem:[%s1619 + $0x30] sm:$0xf]
        %v1633 = vld [vmem:[%s1619 + $0x34] sm:$0xf]
        %v1634 = vld [vmem:[%s1619 + $0x38] sm:$0xf]
        %v1635 = vld [vmem:[%s1619 + $0x3c] sm:$0xf]
        %v1636 = vld [vmem:[%s3] sm:$0xf]
        %v1637 = vld [vmem:[%s3 + $0x4] sm:$0xf]
        %v1638 = vld [vmem:[%s3 + $0x8] sm:$0xf]
        %v1642 = vunpack.c.l.b16 %v1636
        %v1643 = vunpack.c.l.b16 %v1637
        %v1644 = vunpack.c.l.b16 %v1638
        %v1645 = vpack.c.b16 %v1643, %v1642
        %v1646 = vpack.c.b16 %v1644, %v1644
        %v1649 = vsel %vm609, %v1646, 0
        %1651 = vmatprep.subr.bf16.mxu0 0
        %1652 = vmatpush1.bf16.msra.mxu0 0
        %1653 = vmatprep.subr.bf16.mxu0 0
        %1654 = vmatpush1.bf16.msra.mxu0 0
        %1655 = vmatprep.subr.bf16.mxu0 0
        %1656 = vmatpush1.bf16.msra.mxu0 0
        %1657 = vmatprep.subr.bf16.mxu0 0
        %1658 = vmatpush1.bf16.msra.mxu0 0
        %1659 = vmatprep.subr.bf16.mxu0 0
        %1660 = vmatpush1.bf16.msra.mxu0 0
        %1661 = vmatprep.subr.bf16.mxu0 0
        %1662 = vmatpush1.bf16.msra.mxu0 0
        %1663 = vmatprep.subr.bf16.mxu0 0
        %1664 = vmatpush1.bf16.msra.mxu0 %v1649
        %1665 = vmatprep.subr.bf16.mxu0 0
        %1666 = vmatpush1.bf16.msra.mxu0 %v1645
        %1667 = vmatprep.subr.bf16.mxu0 0
        %1668 = vmatpush2.bf16.msra.mxu0 0
        %1669 = vmatprep.subr.bf16.mxu0 0
        %1670 = vmatpush2.bf16.msra.mxu0 0
        %1671 = vmatprep.subr.bf16.mxu0 0
        %1672 = vmatpush2.bf16.msra.mxu0 0
        %1673 = vmatprep.subr.bf16.mxu0 0
        %1674 = vmatpush2.bf16.msra.mxu0 0
        %1675 = vmatprep.subr.bf16.mxu0 0
        %1676 = vmatpush2.bf16.msra.mxu0 0
        %1677 = vmatprep.subr.bf16.mxu0 0
        %1678 = vmatpush2.bf16.msra.mxu0 0
        %1679 = vmatprep.subr.bf16.mxu0 0
        %1680 = vmatpush2.bf16.msra.mxu0 0
        %1681 = vmatprep.subr.bf16.mxu0 0
        %1682 = vmatpush2.bf16.msra.mxu0 0
        %1683 = vmatprep.mubr.bf16.mxu0 0
        %1684 = vmatmul.mubr.bf16.gmra.mxu0 %v580
        %v1685 = vpop.f32.mrf.mxu0
        %v1686 = vadd.f32 0.0, %v1685
        %v1687 = vpop.f32.mrf.mxu0
        %v1688 = vpop.f32.mrf.mxu0
        %v1689 = vadd.f32 0.0, %v1688
        %v1690 = vpop.f32.mrf.mxu0
        %1691 = vmatprep.mubr.bf16.mxu0 0
        %1692 = vmatmul.mubr.bf16.gmra.mxu0 %v583
        %v1693 = vpop.f32.mrf.mxu0
        %v1694 = vadd.f32 0.0, %v1693
        %v1695 = vpop.f32.mrf.mxu0
        %v1696 = vpop.f32.mrf.mxu0
        %v1697 = vadd.f32 0.0, %v1696
        %v1698 = vpop.f32.mrf.mxu0
        %1699 = vmatprep.mubr.bf16.mxu0 0
        %1700 = vmatmul.mubr.bf16.gmra.mxu0 %v586
        %v1701 = vpop.f32.mrf.mxu0
        %v1702 = vadd.f32 0.0, %v1701
        %v1703 = vpop.f32.mrf.mxu0
        %v1704 = vpop.f32.mrf.mxu0
        %v1705 = vadd.f32 0.0, %v1704
        %v1706 = vpop.f32.mrf.mxu0
        %1707 = vmatprep.mubr.bf16.mxu0 0
        %1708 = vmatmul.mubr.bf16.gmra.mxu0 %v589
        %v1709 = vpop.f32.mrf.mxu0
        %v1710 = vadd.f32 0.0, %v1709
        %v1711 = vpop.f32.mrf.mxu0
        %v1712 = vpop.f32.mrf.mxu0
        %v1713 = vadd.f32 0.0, %v1712
        %v1714 = vpop.f32.mrf.mxu0
        %1715 = vmatprep.mubr.bf16.mxu0 0
        %1716 = vmatmul.mubr.bf16.gmra.mxu0 %v592
        %v1717 = vpop.f32.mrf.mxu0
        %v1718 = vadd.f32 0.0, %v1717
        %v1719 = vpop.f32.mrf.mxu0
        %v1720 = vpop.f32.mrf.mxu0
        %v1721 = vadd.f32 0.0, %v1720
        %v1722 = vpop.f32.mrf.mxu0
        %1723 = vmatprep.mubr.bf16.mxu0 0
        %1724 = vmatmul.mubr.bf16.gmra.mxu0 %v595
        %v1725 = vpop.f32.mrf.mxu0
        %v1726 = vadd.f32 0.0, %v1725
        %v1727 = vpop.f32.mrf.mxu0
        %v1728 = vpop.f32.mrf.mxu0
        %v1729 = vadd.f32 0.0, %v1728
        %v1730 = vpop.f32.mrf.mxu0
        %1731 = vmatprep.mubr.bf16.mxu0 0
        %1732 = vmatmul.mubr.bf16.gmra.mxu0 %v598
        %v1733 = vpop.f32.mrf.mxu0
        %v1734 = vadd.f32 0.0, %v1733
        %v1735 = vpop.f32.mrf.mxu0
        %v1736 = vpop.f32.mrf.mxu0
        %v1737 = vadd.f32 0.0, %v1736
        %v1738 = vpop.f32.mrf.mxu0
        %1739 = vmatprep.mubr.bf16.mxu0 0
        %1740 = vmatmul.mubr.bf16.gmra.mxu0 %v601
        %v1741 = vpop.f32.mrf.mxu0
        %v1742 = vadd.f32 0.0, %v1741
        %v1743 = vpop.f32.mrf.mxu0
        %v1744 = vpop.f32.mrf.mxu0
        %v1745 = vadd.f32 0.0, %v1744
        %v1746 = vpop.f32.mrf.mxu0
        %1747 = vmatprep.mubr.bf16.mxu0 0
        %1748 = vmatmul.mubr.bf16.gmra.mxu0 %v604
        %v1749 = vpop.f32.mrf.mxu0
        %v1750 = vadd.f32 0.0, %v1749
        %v1751 = vpop.f32.mrf.mxu0
        %v1752 = vpop.f32.mrf.mxu0
        %v1753 = vadd.f32 0.0, %v1752
        %v1754 = vpop.f32.mrf.mxu0
        %1755 = vmatprep.mubr.bf16.mxu0 0
        %1756 = vmatmul.mubr.bf16.gmra.mxu0 %v607
        %v1757 = vpop.f32.mrf.mxu0
        %v1758 = vadd.f32 0.0, %v1757
        %v1759 = vpop.f32.mrf.mxu0
        %v1760 = vpop.f32.mrf.mxu0
        %v1761 = vadd.f32 0.0, %v1760
        %v1762 = vpop.f32.mrf.mxu0
        %1763 = vdwg.mxu0
        %v1780 = vunpack.c.l.b16 %v1620
        %v1781 = vunpack.c.l.b16 %v1621
        %v1782 = vunpack.c.l.b16 %v1622
        %v1783 = vunpack.c.l.b16 %v1623
        %v1784 = vunpack.c.l.b16 %v1624
        %v1785 = vunpack.c.l.b16 %v1625
        %v1786 = vunpack.c.l.b16 %v1626
        %v1787 = vunpack.c.l.b16 %v1627
        %v1788 = vunpack.c.l.b16 %v1628
        %v1789 = vunpack.c.l.b16 %v1629
        %v1790 = vunpack.c.l.b16 %v1630
        %v1791 = vunpack.c.l.b16 %v1631
        %v1792 = vunpack.c.l.b16 %v1632
        %v1793 = vunpack.c.l.b16 %v1633
        %v1794 = vunpack.c.l.b16 %v1634
        %v1795 = vunpack.c.l.b16 %v1635
        %v1796 = vpack.c.b16 %v1781, %v1780
        %v1797 = vpack.c.b16 %v1783, %v1782
        %v1798 = vpack.c.b16 %v1785, %v1784
        %v1799 = vpack.c.b16 %v1787, %v1786
        %v1800 = vpack.c.b16 %v1789, %v1788
        %v1801 = vpack.c.b16 %v1791, %v1790
        %v1802 = vpack.c.b16 %v1793, %v1792
        %v1803 = vpack.c.b16 %v1795, %v1794
        %1812 = vmatprep.subr.bf16.mxu0 0
        %1813 = vmatpush1.bf16.msra.mxu0 %v1803
        %1814 = vmatprep.subr.bf16.mxu0 0
        %1815 = vmatpush1.bf16.msra.mxu0 %v1802
        %1816 = vmatprep.subr.bf16.mxu0 0
        %1817 = vmatpush1.bf16.msra.mxu0 %v1801
        %1818 = vmatprep.subr.bf16.mxu0 0
        %1819 = vmatpush1.bf16.msra.mxu0 %v1800
        %1820 = vmatprep.subr.bf16.mxu0 0
        %1821 = vmatpush1.bf16.msra.mxu0 %v1799
        %1822 = vmatprep.subr.bf16.mxu0 0
        %1823 = vmatpush1.bf16.msra.mxu0 %v1798
        %1824 = vmatprep.subr.bf16.mxu0 0
        %1825 = vmatpush1.bf16.msra.mxu0 %v1797
        %1826 = vmatprep.subr.bf16.mxu0 0
        %1827 = vmatpush1.bf16.msra.mxu0 %v1796
        %1828 = vmatprep.subr.bf16.mxu0 0
        %1829 = vmatpush2.bf16.msra.mxu0 0
        %1830 = vmatprep.subr.bf16.mxu0 0
        %1831 = vmatpush2.bf16.msra.mxu0 0
        %1832 = vmatprep.subr.bf16.mxu0 0
        %1833 = vmatpush2.bf16.msra.mxu0 0
        %1834 = vmatprep.subr.bf16.mxu0 0
        %1835 = vmatpush2.bf16.msra.mxu0 0
        %1836 = vmatprep.subr.bf16.mxu0 0
        %1837 = vmatpush2.bf16.msra.mxu0 0
        %1838 = vmatprep.subr.bf16.mxu0 0
        %1839 = vmatpush2.bf16.msra.mxu0 0
        %1840 = vmatprep.subr.bf16.mxu0 0
        %1841 = vmatpush2.bf16.msra.mxu0 0
        %1842 = vmatprep.subr.bf16.mxu0 0
        %1843 = vmatpush2.bf16.msra.mxu0 0
        %1844 = vmatprep.mubr.bf16.mxu0 0
        %1845 = vmatmul.mubr.bf16.gmra.mxu0 %v1609
        %v1846 = vpop.f32.mrf.mxu0
        %v1847 = vadd.f32 %v1686, %v1846
        %v1848 = vpop.f32.mrf.mxu0
        %v1849 = vpop.f32.mrf.mxu0
        %v1850 = vadd.f32 %v1689, %v1849
        %v1851 = vpop.f32.mrf.mxu0
        %1852 = vmatprep.mubr.bf16.mxu0 0
        %1853 = vmatmul.mubr.bf16.gmra.mxu0 %v1610
        %v1854 = vpop.f32.mrf.mxu0
        %v1855 = vadd.f32 %v1694, %v1854
        %v1856 = vpop.f32.mrf.mxu0
        %v1857 = vpop.f32.mrf.mxu0
        %v1858 = vadd.f32 %v1697, %v1857
        %v1859 = vpop.f32.mrf.mxu0
        %1860 = vmatprep.mubr.bf16.mxu0 0
        %1861 = vmatmul.mubr.bf16.gmra.mxu0 %v1611
        %v1862 = vpop.f32.mrf.mxu0
        %v1863 = vadd.f32 %v1702, %v1862
        %v1864 = vpop.f32.mrf.mxu0
        %v1865 = vpop.f32.mrf.mxu0
        %v1866 = vadd.f32 %v1705, %v1865
        %v1867 = vpop.f32.mrf.mxu0
        %1868 = vmatprep.mubr.bf16.mxu0 0
        %1869 = vmatmul.mubr.bf16.gmra.mxu0 %v1612
        %v1870 = vpop.f32.mrf.mxu0
        %v1871 = vadd.f32 %v1710, %v1870
        %v1872 = vpop.f32.mrf.mxu0
        %v1873 = vpop.f32.mrf.mxu0
        %v1874 = vadd.f32 %v1713, %v1873
        %v1875 = vpop.f32.mrf.mxu0
        %1876 = vmatprep.mubr.bf16.mxu0 0
        %1877 = vmatmul.mubr.bf16.gmra.mxu0 %v1613
        %v1878 = vpop.f32.mrf.mxu0
        %v1879 = vadd.f32 %v1718, %v1878
        %v1880 = vpop.f32.mrf.mxu0
        %v1881 = vpop.f32.mrf.mxu0
        %v1882 = vadd.f32 %v1721, %v1881
        %v1883 = vpop.f32.mrf.mxu0
        %1884 = vmatprep.mubr.bf16.mxu0 0
        %1885 = vmatmul.mubr.bf16.gmra.mxu0 %v1614
        %v1886 = vpop.f32.mrf.mxu0
        %v1887 = vadd.f32 %v1726, %v1886
        %v1888 = vpop.f32.mrf.mxu0
        %v1889 = vpop.f32.mrf.mxu0
        %v1890 = vadd.f32 %v1729, %v1889
        %v1891 = vpop.f32.mrf.mxu0
        %1892 = vmatprep.mubr.bf16.mxu0 0
        %1893 = vmatmul.mubr.bf16.gmra.mxu0 %v1615
        %v1894 = vpop.f32.mrf.mxu0
        %v1895 = vadd.f32 %v1734, %v1894
        %v1896 = vpop.f32.mrf.mxu0
        %v1897 = vpop.f32.mrf.mxu0
        %v1898 = vadd.f32 %v1737, %v1897
        %v1899 = vpop.f32.mrf.mxu0
        %1900 = vmatprep.mubr.bf16.mxu0 0
        %1901 = vmatmul.mubr.bf16.gmra.mxu0 %v1616
        %v1902 = vpop.f32.mrf.mxu0
        %v1903 = vadd.f32 %v1742, %v1902
        %v1904 = vpop.f32.mrf.mxu0
        %v1905 = vpop.f32.mrf.mxu0
        %v1906 = vadd.f32 %v1745, %v1905
        %v1907 = vpop.f32.mrf.mxu0
        %1908 = vmatprep.mubr.bf16.mxu0 0
        %1909 = vmatmul.mubr.bf16.gmra.mxu0 %v1617
        %v1910 = vpop.f32.mrf.mxu0
        %v1911 = vadd.f32 %v1750, %v1910
        %v1912 = vpop.f32.mrf.mxu0
        %v1913 = vpop.f32.mrf.mxu0
        %v1914 = vadd.f32 %v1753, %v1913
        %v1915 = vpop.f32.mrf.mxu0
        %1916 = vmatprep.mubr.bf16.mxu0 0
        %1917 = vmatmul.mubr.bf16.gmra.mxu0 %v1618
        %v1918 = vpop.f32.mrf.mxu0
        %v1919 = vadd.f32 %v1758, %v1918
        %v1920 = vpop.f32.mrf.mxu0
        %v1921 = vpop.f32.mrf.mxu0
        %v1922 = vadd.f32 %v1761, %v1921
        %v1923 = vpop.f32.mrf.mxu0
        %1924 = vdwg.mxu0
        %s1925 = scalar_lea.vmem %s4, 5
        %v1926 = vld [vmem:[%s1925] sm:$0x1]
        %v1928 = vlaneseq
        %v1929 = vshrl.u32 %v1928, 7
        %v1930 = vsub.s32 0, %v1929
        %v1931 = vrot.slane %v1926, %v1930
        %v1933 = vadd.f32 %v1847, %v1931
        %v1934 = vadd.f32 %v1850, %v1931
        %v1935 = vadd.f32 %v1855, %v1931
        %v1936 = vadd.f32 %v1858, %v1931
        %v1937 = vadd.f32 %v1863, %v1931
        %v1938 = vadd.f32 %v1866, %v1931
        %v1939 = vadd.f32 %v1871, %v1931
        %v1940 = vadd.f32 %v1874, %v1931
        %v1941 = vadd.f32 %v1879, %v1931
        %v1942 = vadd.f32 %v1882, %v1931
        %v1943 = vadd.f32 %v1887, %v1931
        %v1944 = vadd.f32 %v1890, %v1931
        %v1945 = vadd.f32 %v1895, %v1931
        %v1946 = vadd.f32 %v1898, %v1931
        %v1947 = vadd.f32 %v1903, %v1931
        %v1948 = vadd.f32 %v1906, %v1931
        %v1949 = vadd.f32 %v1911, %v1931
        %v1950 = vadd.f32 %v1914, %v1931
        %v1951 = vadd.f32 %v1919, %v1931
        %v1952 = vadd.f32 %v1922, %v1931
        %v1953 = vmax.f32 %v1933, 0.0
        %v1954 = vmax.f32 %v1934, 0.0
        %v1955 = vmax.f32 %v1935, 0.0
        %v1956 = vmax.f32 %v1936, 0.0
        %v1957 = vmax.f32 %v1937, 0.0
        %v1958 = vmax.f32 %v1938, 0.0
        %v1959 = vmax.f32 %v1939, 0.0
        %v1960 = vmax.f32 %v1940, 0.0
        %v1961 = vmax.f32 %v1941, 0.0
        %v1962 = vmax.f32 %v1942, 0.0
        %v1963 = vmax.f32 %v1943, 0.0
        %v1964 = vmax.f32 %v1944, 0.0
        %v1965 = vmax.f32 %v1945, 0.0
        %v1966 = vmax.f32 %v1946, 0.0
        %v1967 = vmax.f32 %v1947, 0.0
        %v1968 = vmax.f32 %v1948, 0.0
        %v1969 = vmax.f32 %v1949, 0.0
        %v1970 = vmax.f32 %v1950, 0.0
        %v1971 = vmax.f32 %v1951, 0.0
        %v1972 = vmax.f32 %v1952, 0.0
        %v1973 = vpack.c.bf16 %v1954, %v1953
        %v1974 = vpack.c.bf16 %v1956, %v1955
        %v1975 = vpack.c.bf16 %v1958, %v1957
        %v1976 = vpack.c.bf16 %v1960, %v1959
        %v1977 = vpack.c.bf16 %v1962, %v1961
        %v1978 = vpack.c.bf16 %v1964, %v1963
        %v1979 = vpack.c.bf16 %v1966, %v1965
        %v1980 = vpack.c.bf16 %v1968, %v1967
        %v1981 = vpack.c.bf16 %v1970, %v1969
        %v1982 = vpack.c.bf16 %v1972, %v1971
        %s1983 = scalar_lea.vmem [#allocation3], 320
        %v1984 = vld [vmem:[%s1983] sm:$0xf]
        %v1985 = vld [vmem:[%s1983 + $0x4] sm:$0xf]
        %v1986 = vld [vmem:[%s1983 + $0x8] sm:$0xf]
        %v1987 = vld [vmem:[%s1983 + $0xc] sm:$0xf]
        %v1988 = vld [vmem:[%s1983 + $0x10] sm:$0xf]
        %v1989 = vld [vmem:[%s1983 + $0x14] sm:$0xf]
        %v1990 = vld [vmem:[%s1983 + $0x18] sm:$0xf]
        %v1991 = vld [vmem:[%s1983 + $0x1c] sm:$0xf]
        %v1992 = vld [vmem:[%s1983 + $0x20] sm:$0xf]
        %v1993 = vld [vmem:[%s1983 + $0x24] sm:$0xf]
        %v1994 = vld [vmem:[%s1983 + $0x28] sm:$0xf]
        %v1995 = vld [vmem:[%s1983 + $0x2c] sm:$0xf]
        %v1996 = vld [vmem:[%s1983 + $0x30] sm:$0xf]
        %v1997 = vld [vmem:[%s1983 + $0x34] sm:$0xf]
        %v1998 = vld [vmem:[%s1983 + $0x38] sm:$0xf]
        %v1999 = vld [vmem:[%s1983 + $0x3c] sm:$0xf]
        %s2000 = scalar_lea.vmem %s4, 6
        %v2001 = vld [vmem:[%s2000] sm:$0x1]
        %v2003 = vlaneseq
        %v2004 = vshrl.u32 %v2003, 7
        %v2005 = vsub.s32 0, %v2004
        %v2006 = vrot.slane %v2001, %v2005
        %v2024 = vunpack.c.l.b16 %v1984
        %v2025 = vunpack.c.l.b16 %v1985
        %v2026 = vunpack.c.l.b16 %v1986
        %v2027 = vunpack.c.l.b16 %v1987
        %v2028 = vunpack.c.l.b16 %v1988
        %v2029 = vunpack.c.l.b16 %v1989
        %v2030 = vunpack.c.l.b16 %v1990
        %v2031 = vunpack.c.l.b16 %v1991
        %v2032 = vunpack.c.l.b16 %v1992
        %v2033 = vunpack.c.l.b16 %v1993
        %v2034 = vunpack.c.l.b16 %v1994
        %v2035 = vunpack.c.l.b16 %v1995
        %v2036 = vunpack.c.l.b16 %v1996
        %v2037 = vunpack.c.l.b16 %v1997
        %v2038 = vunpack.c.l.b16 %v1998
        %v2039 = vunpack.c.l.b16 %v1999
        %v2040 = vpack.c.b16 %v2025, %v2024
        %v2041 = vpack.c.b16 %v2027, %v2026
        %v2042 = vpack.c.b16 %v2029, %v2028
        %v2043 = vpack.c.b16 %v2031, %v2030
        %v2044 = vpack.c.b16 %v2033, %v2032
        %v2045 = vpack.c.b16 %v2035, %v2034
        %v2046 = vpack.c.b16 %v2037, %v2036
        %v2047 = vpack.c.b16 %v2039, %v2038
        %2056 = vmatprep.subr.bf16.mxu0 0
        %2057 = vmatpush1.bf16.msra.mxu0 %v2047
        %2058 = vmatprep.subr.bf16.mxu0 0
        %2059 = vmatpush1.bf16.msra.mxu0 %v2046
        %2060 = vmatprep.subr.bf16.mxu0 0
        %2061 = vmatpush1.bf16.msra.mxu0 %v2045
        %2062 = vmatprep.subr.bf16.mxu0 0
        %2063 = vmatpush1.bf16.msra.mxu0 %v2044
        %2064 = vmatprep.subr.bf16.mxu0 0
        %2065 = vmatpush1.bf16.msra.mxu0 %v2043
        %2066 = vmatprep.subr.bf16.mxu0 0
        %2067 = vmatpush1.bf16.msra.mxu0 %v2042
        %2068 = vmatprep.subr.bf16.mxu0 0
        %2069 = vmatpush1.bf16.msra.mxu0 %v2041
        %2070 = vmatprep.subr.bf16.mxu0 0
        %2071 = vmatpush1.bf16.msra.mxu0 %v2040
        %2072 = vmatprep.subr.bf16.mxu0 0
        %2073 = vmatpush2.bf16.msra.mxu0 0
        %2074 = vmatprep.subr.bf16.mxu0 0
        %2075 = vmatpush2.bf16.msra.mxu0 0
        %2076 = vmatprep.subr.bf16.mxu0 0
        %2077 = vmatpush2.bf16.msra.mxu0 0
        %2078 = vmatprep.subr.bf16.mxu0 0
        %2079 = vmatpush2.bf16.msra.mxu0 0
        %2080 = vmatprep.subr.bf16.mxu0 0
        %2081 = vmatpush2.bf16.msra.mxu0 0
        %2082 = vmatprep.subr.bf16.mxu0 0
        %2083 = vmatpush2.bf16.msra.mxu0 0
        %2084 = vmatprep.subr.bf16.mxu0 0
        %2085 = vmatpush2.bf16.msra.mxu0 0
        %2086 = vmatprep.subr.bf16.mxu0 0
        %2087 = vmatpush2.bf16.msra.mxu0 0
        %2088 = vmatprep.mubr.bf16.mxu0 0
        %2089 = vmatmul.mubr.bf16.gmra.mxu0 %v1973
        %v2090 = vpop.f32.mrf.mxu0
        %v2091 = vadd.f32 %v2006, %v2090
        %v2092 = vpop.f32.mrf.mxu0
        %v2093 = vpop.f32.mrf.mxu0
        %v2094 = vadd.f32 %v2006, %v2093
        %v2095 = vpop.f32.mrf.mxu0
        %2096 = vmatprep.mubr.bf16.mxu0 0
        %2097 = vmatmul.mubr.bf16.gmra.mxu0 %v1974
        %v2098 = vpop.f32.mrf.mxu0
        %v2099 = vadd.f32 %v2006, %v2098
        %v2100 = vpop.f32.mrf.mxu0
        %v2101 = vpop.f32.mrf.mxu0
        %v2102 = vadd.f32 %v2006, %v2101
        %v2103 = vpop.f32.mrf.mxu0
        %2104 = vmatprep.mubr.bf16.mxu0 0
        %2105 = vmatmul.mubr.bf16.gmra.mxu0 %v1975
        %v2106 = vpop.f32.mrf.mxu0
        %v2107 = vadd.f32 %v2006, %v2106
        %v2108 = vpop.f32.mrf.mxu0
        %v2109 = vpop.f32.mrf.mxu0
        %v2110 = vadd.f32 %v2006, %v2109
        %v2111 = vpop.f32.mrf.mxu0
        %2112 = vmatprep.mubr.bf16.mxu0 0
        %2113 = vmatmul.mubr.bf16.gmra.mxu0 %v1976
        %v2114 = vpop.f32.mrf.mxu0
        %v2115 = vadd.f32 %v2006, %v2114
        %v2116 = vpop.f32.mrf.mxu0
        %v2117 = vpop.f32.mrf.mxu0
        %v2118 = vadd.f32 %v2006, %v2117
        %v2119 = vpop.f32.mrf.mxu0
        %2120 = vmatprep.mubr.bf16.mxu0 0
        %2121 = vmatmul.mubr.bf16.gmra.mxu0 %v1977
        %v2122 = vpop.f32.mrf.mxu0
        %v2123 = vadd.f32 %v2006, %v2122
        %v2124 = vpop.f32.mrf.mxu0
        %v2125 = vpop.f32.mrf.mxu0
        %v2126 = vadd.f32 %v2006, %v2125
        %v2127 = vpop.f32.mrf.mxu0
        %2128 = vmatprep.mubr.bf16.mxu0 0
        %2129 = vmatmul.mubr.bf16.gmra.mxu0 %v1978
        %v2130 = vpop.f32.mrf.mxu0
        %v2131 = vadd.f32 %v2006, %v2130
        %v2132 = vpop.f32.mrf.mxu0
        %v2133 = vpop.f32.mrf.mxu0
        %v2134 = vadd.f32 %v2006, %v2133
        %v2135 = vpop.f32.mrf.mxu0
        %2136 = vmatprep.mubr.bf16.mxu0 0
        %2137 = vmatmul.mubr.bf16.gmra.mxu0 %v1979
        %v2138 = vpop.f32.mrf.mxu0
        %v2139 = vadd.f32 %v2006, %v2138
        %v2140 = vpop.f32.mrf.mxu0
        %v2141 = vpop.f32.mrf.mxu0
        %v2142 = vadd.f32 %v2006, %v2141
        %v2143 = vpop.f32.mrf.mxu0
        %2144 = vmatprep.mubr.bf16.mxu0 0
        %2145 = vmatmul.mubr.bf16.gmra.mxu0 %v1980
        %v2146 = vpop.f32.mrf.mxu0
        %v2147 = vadd.f32 %v2006, %v2146
        %v2148 = vpop.f32.mrf.mxu0
        %v2149 = vpop.f32.mrf.mxu0
        %v2150 = vadd.f32 %v2006, %v2149
        %v2151 = vpop.f32.mrf.mxu0
        %2152 = vmatprep.mubr.bf16.mxu0 0
        %2153 = vmatmul.mubr.bf16.gmra.mxu0 %v1981
        %v2154 = vpop.f32.mrf.mxu0
        %v2155 = vadd.f32 %v2006, %v2154
        %v2156 = vpop.f32.mrf.mxu0
        %v2157 = vpop.f32.mrf.mxu0
        %v2158 = vadd.f32 %v2006, %v2157
        %v2159 = vpop.f32.mrf.mxu0
        %2160 = vmatprep.mubr.bf16.mxu0 0
        %2161 = vmatmul.mubr.bf16.gmra.mxu0 %v1982
        %v2162 = vpop.f32.mrf.mxu0
        %v2163 = vadd.f32 %v2006, %v2162
        %v2164 = vpop.f32.mrf.mxu0
        %v2165 = vpop.f32.mrf.mxu0
        %v2166 = vadd.f32 %v2006, %v2165
        %v2167 = vpop.f32.mrf.mxu0
        %2168 = vdwg.mxu0
        %v2169 = vmax.f32 %v2091, 0.0
        %v2170 = vmax.f32 %v2094, 0.0
        %v2171 = vmax.f32 %v2099, 0.0
        %v2172 = vmax.f32 %v2102, 0.0
        %v2173 = vmax.f32 %v2107, 0.0
        %v2174 = vmax.f32 %v2110, 0.0
        %v2175 = vmax.f32 %v2115, 0.0
        %v2176 = vmax.f32 %v2118, 0.0
        %v2177 = vmax.f32 %v2123, 0.0
        %v2178 = vmax.f32 %v2126, 0.0
        %v2179 = vmax.f32 %v2131, 0.0
        %v2180 = vmax.f32 %v2134, 0.0
        %v2181 = vmax.f32 %v2139, 0.0
        %v2182 = vmax.f32 %v2142, 0.0
        %v2183 = vmax.f32 %v2147, 0.0
        %v2184 = vmax.f32 %v2150, 0.0
        %v2185 = vmax.f32 %v2155, 0.0
        %v2186 = vmax.f32 %v2158, 0.0
        %v2187 = vmax.f32 %v2163, 0.0
        %v2188 = vmax.f32 %v2166, 0.0
        %v2189 = vpack.c.bf16 %v2170, %v2169
        %v2190 = vpack.c.bf16 %v2172, %v2171
        %v2191 = vpack.c.bf16 %v2174, %v2173
        %v2192 = vpack.c.bf16 %v2176, %v2175
        %v2193 = vpack.c.bf16 %v2178, %v2177
        %v2194 = vpack.c.bf16 %v2180, %v2179
        %v2195 = vpack.c.bf16 %v2182, %v2181
        %v2196 = vpack.c.bf16 %v2184, %v2183
        %v2197 = vpack.c.bf16 %v2186, %v2185
        %v2198 = vpack.c.bf16 %v2188, %v2187
        %s2199 = scalar_lea.vmem [#allocation3], 384
        %v2200 = vld [vmem:[%s2199] sm:$0xf]
        %v2201 = vld [vmem:[%s2199 + $0x4] sm:$0xf]
        %v2202 = vld [vmem:[%s2199 + $0x8] sm:$0xf]
        %v2203 = vld [vmem:[%s2199 + $0xc] sm:$0xf]
        %v2204 = vld [vmem:[%s2199 + $0x10] sm:$0xf]
        %v2205 = vld [vmem:[%s2199 + $0x14] sm:$0xf]
        %v2206 = vld [vmem:[%s2199 + $0x18] sm:$0xf]
        %v2207 = vld [vmem:[%s2199 + $0x1c] sm:$0xf]
        %v2208 = vld [vmem:[%s2199 + $0x20] sm:$0xf]
        %v2209 = vld [vmem:[%s2199 + $0x24] sm:$0xf]
        %v2210 = vld [vmem:[%s2199 + $0x28] sm:$0xf]
        %v2211 = vld [vmem:[%s2199 + $0x2c] sm:$0xf]
        %v2212 = vld [vmem:[%s2199 + $0x30] sm:$0xf]
        %v2213 = vld [vmem:[%s2199 + $0x34] sm:$0xf]
        %v2214 = vld [vmem:[%s2199 + $0x38] sm:$0xf]
        %v2215 = vld [vmem:[%s2199 + $0x3c] sm:$0xf]
        %s2216 = scalar_lea.vmem %s4, 7
        %v2217 = vld [vmem:[%s2216] sm:$0x1]
        %v2219 = vlaneseq
        %v2220 = vshrl.u32 %v2219, 7
        %v2221 = vsub.s32 0, %v2220
        %v2222 = vrot.slane %v2217, %v2221
        %v2240 = vunpack.c.l.b16 %v2200
        %v2241 = vunpack.c.l.b16 %v2201
        %v2242 = vunpack.c.l.b16 %v2202
        %v2243 = vunpack.c.l.b16 %v2203
        %v2244 = vunpack.c.l.b16 %v2204
        %v2245 = vunpack.c.l.b16 %v2205
        %v2246 = vunpack.c.l.b16 %v2206
        %v2247 = vunpack.c.l.b16 %v2207
        %v2248 = vunpack.c.l.b16 %v2208
        %v2249 = vunpack.c.l.b16 %v2209
        %v2250 = vunpack.c.l.b16 %v2210
        %v2251 = vunpack.c.l.b16 %v2211
        %v2252 = vunpack.c.l.b16 %v2212
        %v2253 = vunpack.c.l.b16 %v2213
        %v2254 = vunpack.c.l.b16 %v2214
        %v2255 = vunpack.c.l.b16 %v2215
        %v2256 = vpack.c.b16 %v2241, %v2240
        %v2257 = vpack.c.b16 %v2243, %v2242
        %v2258 = vpack.c.b16 %v2245, %v2244
        %v2259 = vpack.c.b16 %v2247, %v2246
        %v2260 = vpack.c.b16 %v2249, %v2248
        %v2261 = vpack.c.b16 %v2251, %v2250
        %v2262 = vpack.c.b16 %v2253, %v2252
        %v2263 = vpack.c.b16 %v2255, %v2254
        %2272 = vmatprep.subr.bf16.mxu0 0
        %2273 = vmatpush1.bf16.msra.mxu0 %v2263
        %2274 = vmatprep.subr.bf16.mxu0 0
        %2275 = vmatpush1.bf16.msra.mxu0 %v2262
        %2276 = vmatprep.subr.bf16.mxu0 0
        %2277 = vmatpush1.bf16.msra.mxu0 %v2261
        %2278 = vmatprep.subr.bf16.mxu0 0
        %2279 = vmatpush1.bf16.msra.mxu0 %v2260
        %2280 = vmatprep.subr.bf16.mxu0 0
        %2281 = vmatpush1.bf16.msra.mxu0 %v2259
        %2282 = vmatprep.subr.bf16.mxu0 0
        %2283 = vmatpush1.bf16.msra.mxu0 %v2258
        %2284 = vmatprep.subr.bf16.mxu0 0
        %2285 = vmatpush1.bf16.msra.mxu0 %v2257
        %2286 = vmatprep.subr.bf16.mxu0 0
        %2287 = vmatpush1.bf16.msra.mxu0 %v2256
        %2288 = vmatprep.subr.bf16.mxu0 0
        %2289 = vmatpush2.bf16.msra.mxu0 0
        %2290 = vmatprep.subr.bf16.mxu0 0
        %2291 = vmatpush2.bf16.msra.mxu0 0
        %2292 = vmatprep.subr.bf16.mxu0 0
        %2293 = vmatpush2.bf16.msra.mxu0 0
        %2294 = vmatprep.subr.bf16.mxu0 0
        %2295 = vmatpush2.bf16.msra.mxu0 0
        %2296 = vmatprep.subr.bf16.mxu0 0
        %2297 = vmatpush2.bf16.msra.mxu0 0
        %2298 = vmatprep.subr.bf16.mxu0 0
        %2299 = vmatpush2.bf16.msra.mxu0 0
        %2300 = vmatprep.subr.bf16.mxu0 0
        %2301 = vmatpush2.bf16.msra.mxu0 0
        %2302 = vmatprep.subr.bf16.mxu0 0
        %2303 = vmatpush2.bf16.msra.mxu0 0
        %2304 = vmatprep.mubr.bf16.mxu0 0
        %2305 = vmatmul.mubr.bf16.gmra.mxu0 %v2189
        %v2306 = vpop.f32.mrf.mxu0
        %v2307 = vadd.f32 %v2222, %v2306
        %v2308 = vpop.f32.mrf.mxu0
        %v2309 = vpop.f32.mrf.mxu0
        %v2310 = vadd.f32 %v2222, %v2309
        %v2311 = vpop.f32.mrf.mxu0
        %2312 = vmatprep.mubr.bf16.mxu0 0
        %2313 = vmatmul.mubr.bf16.gmra.mxu0 %v2190
        %v2314 = vpop.f32.mrf.mxu0
        %v2315 = vadd.f32 %v2222, %v2314
        %v2316 = vpop.f32.mrf.mxu0
        %v2317 = vpop.f32.mrf.mxu0
        %v2318 = vadd.f32 %v2222, %v2317
        %v2319 = vpop.f32.mrf.mxu0
        %2320 = vmatprep.mubr.bf16.mxu0 0
        %2321 = vmatmul.mubr.bf16.gmra.mxu0 %v2191
        %v2322 = vpop.f32.mrf.mxu0
        %v2323 = vadd.f32 %v2222, %v2322
        %v2324 = vpop.f32.mrf.mxu0
        %v2325 = vpop.f32.mrf.mxu0
        %v2326 = vadd.f32 %v2222, %v2325
        %v2327 = vpop.f32.mrf.mxu0
        %2328 = vmatprep.mubr.bf16.mxu0 0
        %2329 = vmatmul.mubr.bf16.gmra.mxu0 %v2192
        %v2330 = vpop.f32.mrf.mxu0
        %v2331 = vadd.f32 %v2222, %v2330
        %v2332 = vpop.f32.mrf.mxu0
        %v2333 = vpop.f32.mrf.mxu0
        %v2334 = vadd.f32 %v2222, %v2333
        %v2335 = vpop.f32.mrf.mxu0
        %2336 = vmatprep.mubr.bf16.mxu0 0
        %2337 = vmatmul.mubr.bf16.gmra.mxu0 %v2193
        %v2338 = vpop.f32.mrf.mxu0
        %v2339 = vadd.f32 %v2222, %v2338
        %v2340 = vpop.f32.mrf.mxu0
        %v2341 = vpop.f32.mrf.mxu0
        %v2342 = vadd.f32 %v2222, %v2341
        %v2343 = vpop.f32.mrf.mxu0
        %2344 = vmatprep.mubr.bf16.mxu0 0
        %2345 = vmatmul.mubr.bf16.gmra.mxu0 %v2194
        %v2346 = vpop.f32.mrf.mxu0
        %v2347 = vadd.f32 %v2222, %v2346
        %v2348 = vpop.f32.mrf.mxu0
        %v2349 = vpop.f32.mrf.mxu0
        %v2350 = vadd.f32 %v2222, %v2349
        %v2351 = vpop.f32.mrf.mxu0
        %2352 = vmatprep.mubr.bf16.mxu0 0
        %2353 = vmatmul.mubr.bf16.gmra.mxu0 %v2195
        %v2354 = vpop.f32.mrf.mxu0
        %v2355 = vadd.f32 %v2222, %v2354
        %v2356 = vpop.f32.mrf.mxu0
        %v2357 = vpop.f32.mrf.mxu0
        %v2358 = vadd.f32 %v2222, %v2357
        %v2359 = vpop.f32.mrf.mxu0
        %2360 = vmatprep.mubr.bf16.mxu0 0
        %2361 = vmatmul.mubr.bf16.gmra.mxu0 %v2196
        %v2362 = vpop.f32.mrf.mxu0
        %v2363 = vadd.f32 %v2222, %v2362
        %v2364 = vpop.f32.mrf.mxu0
        %v2365 = vpop.f32.mrf.mxu0
        %v2366 = vadd.f32 %v2222, %v2365
        %v2367 = vpop.f32.mrf.mxu0
        %2368 = vmatprep.mubr.bf16.mxu0 0
        %2369 = vmatmul.mubr.bf16.gmra.mxu0 %v2197
        %v2370 = vpop.f32.mrf.mxu0
        %v2371 = vadd.f32 %v2222, %v2370
        %v2372 = vpop.f32.mrf.mxu0
        %v2373 = vpop.f32.mrf.mxu0
        %v2374 = vadd.f32 %v2222, %v2373
        %v2375 = vpop.f32.mrf.mxu0
        %2376 = vmatprep.mubr.bf16.mxu0 0
        %2377 = vmatmul.mubr.bf16.gmra.mxu0 %v2198
        %v2378 = vpop.f32.mrf.mxu0
        %v2379 = vadd.f32 %v2222, %v2378
        %v2380 = vpop.f32.mrf.mxu0
        %v2381 = vpop.f32.mrf.mxu0
        %v2382 = vadd.f32 %v2222, %v2381
        %v2383 = vpop.f32.mrf.mxu0
        %2384 = vdwg.mxu0
        %v2385 = vmax.f32 %v2307, 0.0
        %v2386 = vmax.f32 %v2310, 0.0
        %v2387 = vmax.f32 %v2315, 0.0
        %v2388 = vmax.f32 %v2318, 0.0
        %v2389 = vmax.f32 %v2323, 0.0
        %v2390 = vmax.f32 %v2326, 0.0
        %v2391 = vmax.f32 %v2331, 0.0
        %v2392 = vmax.f32 %v2334, 0.0
        %v2393 = vmax.f32 %v2339, 0.0
        %v2394 = vmax.f32 %v2342, 0.0
        %v2395 = vmax.f32 %v2347, 0.0
        %v2396 = vmax.f32 %v2350, 0.0
        %v2397 = vmax.f32 %v2355, 0.0
        %v2398 = vmax.f32 %v2358, 0.0
        %v2399 = vmax.f32 %v2363, 0.0
        %v2400 = vmax.f32 %v2366, 0.0
        %v2401 = vmax.f32 %v2371, 0.0
        %v2402 = vmax.f32 %v2374, 0.0
        %v2403 = vmax.f32 %v2379, 0.0
        %v2404 = vmax.f32 %v2382, 0.0
        %v2405 = vpack.c.bf16 %v2386, %v2385
        %v2406 = vpack.c.bf16 %v2388, %v2387
        %v2407 = vpack.c.bf16 %v2390, %v2389
        %v2408 = vpack.c.bf16 %v2392, %v2391
        %v2409 = vpack.c.bf16 %v2394, %v2393
        %v2410 = vpack.c.bf16 %v2396, %v2395
        %v2411 = vpack.c.bf16 %v2398, %v2397
        %v2412 = vpack.c.bf16 %v2400, %v2399
        %v2413 = vpack.c.bf16 %v2402, %v2401
        %v2414 = vpack.c.bf16 %v2404, %v2403
        %v2415 = vunpack.c.l.bf16 %v2405
        %v2416 = vunpack.c.h.bf16 %v2405
        %v2417 = vunpack.c.l.bf16 %v2406
        %v2418 = vunpack.c.h.bf16 %v2406
        %v2419 = vunpack.c.l.bf16 %v2407
        %v2420 = vunpack.c.h.bf16 %v2407
        %v2421 = vunpack.c.l.bf16 %v2408
        %v2422 = vunpack.c.h.bf16 %v2408
        %v2423 = vunpack.c.l.bf16 %v2409
        %v2424 = vunpack.c.h.bf16 %v2409
        %v2425 = vunpack.c.l.bf16 %v2410
        %v2426 = vunpack.c.h.bf16 %v2410
        %v2427 = vunpack.c.l.bf16 %v2411
        %v2428 = vunpack.c.h.bf16 %v2411
        %v2429 = vunpack.c.l.bf16 %v2412
        %v2430 = vunpack.c.h.bf16 %v2412
        %v2431 = vunpack.c.l.bf16 %v2413
        %v2432 = vunpack.c.h.bf16 %v2413
        %v2433 = vunpack.c.l.bf16 %v2414
        %v2434 = vunpack.c.h.bf16 %v2414
        %v2435 = vld [vmem:[%s7] sm:$0x1]
        %v2437 = vlaneseq
        %v2438 = vshrl.u32 %v2437, 7
        %v2439 = vsub.s32 0, %v2438
        %v2440 = vrot.slane %v2435, %v2439
        %v2442 = vmul.f32 %v2415, %v2440
        %v2443 = vmul.f32 %v2416, %v2440
        %v2444 = vmul.f32 %v2417, %v2440
        %v2445 = vmul.f32 %v2418, %v2440
        %v2446 = vmul.f32 %v2419, %v2440
        %v2447 = vmul.f32 %v2420, %v2440
        %v2448 = vmul.f32 %v2421, %v2440
        %v2449 = vmul.f32 %v2422, %v2440
        %v2450 = vmul.f32 %v2423, %v2440
        %v2451 = vmul.f32 %v2424, %v2440
        %v2452 = vmul.f32 %v2425, %v2440
        %v2453 = vmul.f32 %v2426, %v2440
        %v2454 = vmul.f32 %v2427, %v2440
        %v2455 = vmul.f32 %v2428, %v2440
        %v2456 = vmul.f32 %v2429, %v2440
        %v2457 = vmul.f32 %v2430, %v2440
        %v2458 = vmul.f32 %v2431, %v2440
        %v2459 = vmul.f32 %v2432, %v2440
        %v2460 = vmul.f32 %v2433, %v2440
        %v2461 = vmul.f32 %v2434, %v2440
        %2462 = vadd.xlane.f32.xlu0 %v2442
        %v2463 = vpop.xlane.xlu0 %2462
        %2464 = vadd.xlane.f32.xlu0 %v2443
        %v2465 = vpop.xlane.xlu0 %2464
        %2466 = vadd.xlane.f32.xlu0 %v2444
        %v2467 = vpop.xlane.xlu0 %2466
        %2468 = vadd.xlane.f32.xlu0 %v2445
        %v2469 = vpop.xlane.xlu0 %2468
        %2470 = vadd.xlane.f32.xlu0 %v2446
        %v2471 = vpop.xlane.xlu0 %2470
        %2472 = vadd.xlane.f32.xlu0 %v2447
        %v2473 = vpop.xlane.xlu0 %2472
        %2474 = vadd.xlane.f32.xlu0 %v2448
        %v2475 = vpop.xlane.xlu0 %2474
        %2476 = vadd.xlane.f32.xlu0 %v2449
        %v2477 = vpop.xlane.xlu0 %2476
        %2478 = vadd.xlane.f32.xlu0 %v2450
        %v2479 = vpop.xlane.xlu0 %2478
        %2480 = vadd.xlane.f32.xlu0 %v2451
        %v2481 = vpop.xlane.xlu0 %2480
        %2482 = vadd.xlane.f32.xlu0 %v2452
        %v2483 = vpop.xlane.xlu0 %2482
        %2484 = vadd.xlane.f32.xlu0 %v2453
        %v2485 = vpop.xlane.xlu0 %2484
        %2486 = vadd.xlane.f32.xlu0 %v2454
        %v2487 = vpop.xlane.xlu0 %2486
        %2488 = vadd.xlane.f32.xlu0 %v2455
        %v2489 = vpop.xlane.xlu0 %2488
        %2490 = vadd.xlane.f32.xlu0 %v2456
        %v2491 = vpop.xlane.xlu0 %2490
        %2492 = vadd.xlane.f32.xlu0 %v2457
        %v2493 = vpop.xlane.xlu0 %2492
        %2494 = vadd.xlane.f32.xlu0 %v2458
        %v2495 = vpop.xlane.xlu0 %2494
        %2496 = vadd.xlane.f32.xlu0 %v2459
        %v2497 = vpop.xlane.xlu0 %2496
        %2498 = vadd.xlane.f32.xlu0 %v2460
        %v2499 = vpop.xlane.xlu0 %2498
        %2500 = vadd.xlane.f32.xlu0 %v2461
        %v2501 = vpop.xlane.xlu0 %2500
        %v2502 = vld [vmem:[#allocation2] sm:$0x1]
        %v2504 = vlaneseq
        %v2505 = vshrl.u32 %v2504, 7
        %v2506 = vsub.s32 0, %v2505
        %v2507 = vrot.slane %v2502, %v2506
        %v2509 = vadd.f32 %v2463, %v2507
        %v2510 = vadd.f32 %v2465, %v2507
        %v2511 = vadd.f32 %v2467, %v2507
        %v2512 = vadd.f32 %v2469, %v2507
        %v2513 = vadd.f32 %v2471, %v2507
        %v2514 = vadd.f32 %v2473, %v2507
        %v2515 = vadd.f32 %v2475, %v2507
        %v2516 = vadd.f32 %v2477, %v2507
        %v2517 = vadd.f32 %v2479, %v2507
        %v2518 = vadd.f32 %v2481, %v2507
        %v2519 = vadd.f32 %v2483, %v2507
        %v2520 = vadd.f32 %v2485, %v2507
        %v2521 = vadd.f32 %v2487, %v2507
        %v2522 = vadd.f32 %v2489, %v2507
        %v2523 = vadd.f32 %v2491, %v2507
        %v2524 = vadd.f32 %v2493, %v2507
        %v2525 = vadd.f32 %v2495, %v2507
        %v2526 = vadd.f32 %v2497, %v2507
        %v2527 = vadd.f32 %v2499, %v2507
        %v2528 = vadd.f32 %v2501, %v2507
        %v2529 = vld [vmem:[%s5] sm:$0xf]
        %v2530 = vld [vmem:[%s5 + $0x4] sm:$0xf]
        %v2531 = vld [vmem:[%s5 + $0x8] sm:$0xf]
        %v2532 = vld [vmem:[%s5 + $0xc] sm:$0xf]
        %v2533 = vld [vmem:[%s5 + $0x10] sm:$0xf]
        %v2534 = vld [vmem:[%s5 + $0x14] sm:$0xf]
        %v2535 = vld [vmem:[%s5 + $0x18] sm:$0xf]
        %v2536 = vld [vmem:[%s5 + $0x1c] sm:$0xf]
        %v2537 = vld [vmem:[%s5 + $0x20] sm:$0xf]
        %v2538 = vld [vmem:[%s5 + $0x24] sm:$0xf]
        %v2539 = vld [vmem:[%s5 + $0x28] sm:$0xf]
        %v2540 = vld [vmem:[%s5 + $0x2c] sm:$0xf]
        %v2541 = vld [vmem:[%s5 + $0x30] sm:$0xf]
        %v2542 = vld [vmem:[%s5 + $0x34] sm:$0xf]
        %v2543 = vld [vmem:[%s5 + $0x38] sm:$0xf]
        %v2544 = vld [vmem:[%s5 + $0x3c] sm:$0xf]
        %v2545 = vld [vmem:[%s6] sm:$0x1]
        %v2547 = vlaneseq
        %v2548 = vshrl.u32 %v2547, 7
        %v2549 = vsub.s32 0, %v2548
        %v2550 = vrot.slane %v2545, %v2549
        %v2568 = vunpack.c.l.b16 %v2529
        %v2569 = vunpack.c.l.b16 %v2530
        %v2570 = vunpack.c.l.b16 %v2531
        %v2571 = vunpack.c.l.b16 %v2532
        %v2572 = vunpack.c.l.b16 %v2533
        %v2573 = vunpack.c.l.b16 %v2534
        %v2574 = vunpack.c.l.b16 %v2535
        %v2575 = vunpack.c.l.b16 %v2536
        %v2576 = vunpack.c.l.b16 %v2537
        %v2577 = vunpack.c.l.b16 %v2538
        %v2578 = vunpack.c.l.b16 %v2539
        %v2579 = vunpack.c.l.b16 %v2540
        %v2580 = vunpack.c.l.b16 %v2541
        %v2581 = vunpack.c.l.b16 %v2542
        %v2582 = vunpack.c.l.b16 %v2543
        %v2583 = vunpack.c.l.b16 %v2544
        %v2584 = vpack.c.b16 %v2569, %v2568
        %v2585 = vpack.c.b16 %v2571, %v2570
        %v2586 = vpack.c.b16 %v2573, %v2572
        %v2587 = vpack.c.b16 %v2575, %v2574
        %v2588 = vpack.c.b16 %v2577, %v2576
        %v2589 = vpack.c.b16 %v2579, %v2578
        %v2590 = vpack.c.b16 %v2581, %v2580
        %v2591 = vpack.c.b16 %v2583, %v2582
        %2600 = vmatprep.subr.bf16.mxu0 0
        %2601 = vmatpush1.bf16.msra.mxu0 %v2591
        %2602 = vmatprep.subr.bf16.mxu0 0
        %2603 = vmatpush1.bf16.msra.mxu0 %v2590
        %2604 = vmatprep.subr.bf16.mxu0 0
        %2605 = vmatpush1.bf16.msra.mxu0 %v2589
        %2606 = vmatprep.subr.bf16.mxu0 0
        %2607 = vmatpush1.bf16.msra.mxu0 %v2588
        %2608 = vmatprep.subr.bf16.mxu0 0
        %2609 = vmatpush1.bf16.msra.mxu0 %v2587
        %2610 = vmatprep.subr.bf16.mxu0 0
        %2611 = vmatpush1.bf16.msra.mxu0 %v2586
        %2612 = vmatprep.subr.bf16.mxu0 0
        %2613 = vmatpush1.bf16.msra.mxu0 %v2585
        %2614 = vmatprep.subr.bf16.mxu0 0
        %2615 = vmatpush1.bf16.msra.mxu0 %v2584
        %2616 = vmatprep.subr.bf16.mxu0 0
        %2617 = vmatpush2.bf16.msra.mxu0 0
        %2618 = vmatprep.subr.bf16.mxu0 0
        %2619 = vmatpush2.bf16.msra.mxu0 0
        %2620 = vmatprep.subr.bf16.mxu0 0
        %2621 = vmatpush2.bf16.msra.mxu0 0
        %2622 = vmatprep.subr.bf16.mxu0 0
        %2623 = vmatpush2.bf16.msra.mxu0 0
        %2624 = vmatprep.subr.bf16.mxu0 0
        %2625 = vmatpush2.bf16.msra.mxu0 0
        %2626 = vmatprep.subr.bf16.mxu0 0
        %2627 = vmatpush2.bf16.msra.mxu0 0
        %2628 = vmatprep.subr.bf16.mxu0 0
        %2629 = vmatpush2.bf16.msra.mxu0 0
        %2630 = vmatprep.subr.bf16.mxu0 0
        %2631 = vmatpush2.bf16.msra.mxu0 0
        %2632 = vmatprep.mubr.bf16.mxu0 0
        %2633 = vmatmul.mubr.bf16.gmra.mxu0 %v2405
        %v2634 = vpop.f32.mrf.mxu0
        %v2635 = vadd.f32 %v2550, %v2634
        %v2636 = vpop.f32.mrf.mxu0
        %v2637 = vpop.f32.mrf.mxu0
        %v2638 = vadd.f32 %v2550, %v2637
        %v2639 = vpop.f32.mrf.mxu0
        %2640 = vmatprep.mubr.bf16.mxu0 0
        %2641 = vmatmul.mubr.bf16.gmra.mxu0 %v2406
        %v2642 = vpop.f32.mrf.mxu0
        %v2643 = vadd.f32 %v2550, %v2642
        %v2644 = vpop.f32.mrf.mxu0
        %v2645 = vpop.f32.mrf.mxu0
        %v2646 = vadd.f32 %v2550, %v2645
        %v2647 = vpop.f32.mrf.mxu0
        %2648 = vmatprep.mubr.bf16.mxu0 0
        %2649 = vmatmul.mubr.bf16.gmra.mxu0 %v2407
        %v2650 = vpop.f32.mrf.mxu0
        %v2651 = vadd.f32 %v2550, %v2650
        %v2652 = vpop.f32.mrf.mxu0
        %v2653 = vpop.f32.mrf.mxu0
        %v2654 = vadd.f32 %v2550, %v2653
        %v2655 = vpop.f32.mrf.mxu0
        %2656 = vmatprep.mubr.bf16.mxu0 0
        %2657 = vmatmul.mubr.bf16.gmra.mxu0 %v2408
        %v2658 = vpop.f32.mrf.mxu0
        %v2659 = vadd.f32 %v2550, %v2658
        %v2660 = vpop.f32.mrf.mxu0
        %v2661 = vpop.f32.mrf.mxu0
        %v2662 = vadd.f32 %v2550, %v2661
        %v2663 = vpop.f32.mrf.mxu0
        %2664 = vmatprep.mubr.bf16.mxu0 0
        %2665 = vmatmul.mubr.bf16.gmra.mxu0 %v2409
        %v2666 = vpop.f32.mrf.mxu0
        %v2667 = vadd.f32 %v2550, %v2666
        %v2668 = vpop.f32.mrf.mxu0
        %v2669 = vpop.f32.mrf.mxu0
        %v2670 = vadd.f32 %v2550, %v2669
        %v2671 = vpop.f32.mrf.mxu0
        %2672 = vmatprep.mubr.bf16.mxu0 0
        %2673 = vmatmul.mubr.bf16.gmra.mxu0 %v2410
        %v2674 = vpop.f32.mrf.mxu0
        %v2675 = vadd.f32 %v2550, %v2674
        %v2676 = vpop.f32.mrf.mxu0
        %v2677 = vpop.f32.mrf.mxu0
        %v2678 = vadd.f32 %v2550, %v2677
        %v2679 = vpop.f32.mrf.mxu0
        %2680 = vmatprep.mubr.bf16.mxu0 0
        %2681 = vmatmul.mubr.bf16.gmra.mxu0 %v2411
        %v2682 = vpop.f32.mrf.mxu0
        %v2683 = vadd.f32 %v2550, %v2682
        %v2684 = vpop.f32.mrf.mxu0
        %v2685 = vpop.f32.mrf.mxu0
        %v2686 = vadd.f32 %v2550, %v2685
        %v2687 = vpop.f32.mrf.mxu0
        %2688 = vmatprep.mubr.bf16.mxu0 0
        %2689 = vmatmul.mubr.bf16.gmra.mxu0 %v2412
        %v2690 = vpop.f32.mrf.mxu0
        %v2691 = vadd.f32 %v2550, %v2690
        %v2692 = vpop.f32.mrf.mxu0
        %v2693 = vpop.f32.mrf.mxu0
        %v2694 = vadd.f32 %v2550, %v2693
        %v2695 = vpop.f32.mrf.mxu0
        %2696 = vmatprep.mubr.bf16.mxu0 0
        %2697 = vmatmul.mubr.bf16.gmra.mxu0 %v2413
        %v2698 = vpop.f32.mrf.mxu0
        %v2699 = vadd.f32 %v2550, %v2698
        %v2700 = vpop.f32.mrf.mxu0
        %v2701 = vpop.f32.mrf.mxu0
        %v2702 = vadd.f32 %v2550, %v2701
        %v2703 = vpop.f32.mrf.mxu0
        %2704 = vmatprep.mubr.bf16.mxu0 0
        %2705 = vmatmul.mubr.bf16.gmra.mxu0 %v2414
        %v2706 = vpop.f32.mrf.mxu0
        %v2707 = vadd.f32 %v2550, %v2706
        %v2708 = vpop.f32.mrf.mxu0
        %v2709 = vpop.f32.mrf.mxu0
        %v2710 = vadd.f32 %v2550, %v2709
        %v2711 = vpop.f32.mrf.mxu0
        %2712 = vdwg.mxu0
        %v2713 = vpack.c.bf16 %v2638, %v2635
        %v2714 = vpack.c.bf16 %v2646, %v2643
        %v2715 = vpack.c.bf16 %v2654, %v2651
        %v2716 = vpack.c.bf16 %v2662, %v2659
        %v2717 = vpack.c.bf16 %v2670, %v2667
        %v2718 = vpack.c.bf16 %v2678, %v2675
        %v2719 = vpack.c.bf16 %v2686, %v2683
        %v2720 = vpack.c.bf16 %v2694, %v2691
        %v2721 = vpack.c.bf16 %v2702, %v2699
        %v2722 = vpack.c.bf16 %v2710, %v2707
        %v2723 = vld [vmem:[%s9] sm:$0xf]
        %v2724 = vld [vmem:[%s9 + $0x4] sm:$0xf]
        %v2725 = vld [vmem:[%s9 + $0x8] sm:$0xf]
        %v2726 = vld [vmem:[%s9 + $0xc] sm:$0xf]
        %v2727 = vld [vmem:[%s9 + $0x10] sm:$0xf]
        %v2728 = vld [vmem:[%s9 + $0x14] sm:$0xf]
        %v2729 = vld [vmem:[%s9 + $0x18] sm:$0xf]
        %v2730 = vld [vmem:[%s9 + $0x1c] sm:$0xf]
        %v2731 = vld [vmem:[%s9 + $0x20] sm:$0xf]
        %v2732 = vld [vmem:[%s9 + $0x24] sm:$0xf]
        %v2733 = vld [vmem:[%s9 + $0x28] sm:$0xf]
        %v2734 = vld [vmem:[%s9 + $0x2c] sm:$0xf]
        %v2735 = vld [vmem:[%s9 + $0x30] sm:$0xf]
        %v2736 = vld [vmem:[%s9 + $0x34] sm:$0xf]
        %v2737 = vld [vmem:[%s9 + $0x38] sm:$0xf]
        %v2738 = vld [vmem:[%s9 + $0x3c] sm:$0xf]
        %v2739 = vld [vmem:[%s10] sm:$0xf]
        %v2740 = vld [vmem:[%s10 + $0x4] sm:$0xf]
        %v2741 = vld [vmem:[%s10 + $0x8] sm:$0xf]
        %v2745 = vunpack.c.l.b16 %v2739
        %v2746 = vunpack.c.l.b16 %v2740
        %v2747 = vunpack.c.l.b16 %v2741
        %v2748 = vpack.c.b16 %v2746, %v2745
        %v2749 = vpack.c.b16 %v2747, %v2747
        %v2752 = vsel %vm609, %v2749, 0
        %2754 = vmatprep.subr.bf16.mxu0 0
        %2755 = vmatpush1.bf16.msra.mxu0 0
        %2756 = vmatprep.subr.bf16.mxu0 0
        %2757 = vmatpush1.bf16.msra.mxu0 0
        %2758 = vmatprep.subr.bf16.mxu0 0
        %2759 = vmatpush1.bf16.msra.mxu0 0
        %2760 = vmatprep.subr.bf16.mxu0 0
        %2761 = vmatpush1.bf16.msra.mxu0 0
        %2762 = vmatprep.subr.bf16.mxu0 0
        %2763 = vmatpush1.bf16.msra.mxu0 0
        %2764 = vmatprep.subr.bf16.mxu0 0
        %2765 = vmatpush1.bf16.msra.mxu0 0
        %2766 = vmatprep.subr.bf16.mxu0 0
        %2767 = vmatpush1.bf16.msra.mxu0 %v2752
        %2768 = vmatprep.subr.bf16.mxu0 0
        %2769 = vmatpush1.bf16.msra.mxu0 %v2748
        %2770 = vmatprep.subr.bf16.mxu0 0
        %2771 = vmatpush2.bf16.msra.mxu0 0
        %2772 = vmatprep.subr.bf16.mxu0 0
        %2773 = vmatpush2.bf16.msra.mxu0 0
        %2774 = vmatprep.subr.bf16.mxu0 0
        %2775 = vmatpush2.bf16.msra.mxu0 0
        %2776 = vmatprep.subr.bf16.mxu0 0
        %2777 = vmatpush2.bf16.msra.mxu0 0
        %2778 = vmatprep.subr.bf16.mxu0 0
        %2779 = vmatpush2.bf16.msra.mxu0 0
        %2780 = vmatprep.subr.bf16.mxu0 0
        %2781 = vmatpush2.bf16.msra.mxu0 0
        %2782 = vmatprep.subr.bf16.mxu0 0
        %2783 = vmatpush2.bf16.msra.mxu0 0
        %2784 = vmatprep.subr.bf16.mxu0 0
        %2785 = vmatpush2.bf16.msra.mxu0 0
        %2786 = vmatprep.mubr.bf16.mxu0 0
        %2787 = vmatmul.mubr.bf16.gmra.mxu0 %v580
        %v2788 = vpop.f32.mrf.mxu0
        %v2789 = vadd.f32 0.0, %v2788
        %v2790 = vpop.f32.mrf.mxu0
        %v2791 = vpop.f32.mrf.mxu0
        %v2792 = vadd.f32 0.0, %v2791
        %v2793 = vpop.f32.mrf.mxu0
        %2794 = vmatprep.mubr.bf16.mxu0 0
        %2795 = vmatmul.mubr.bf16.gmra.mxu0 %v583
        %v2796 = vpop.f32.mrf.mxu0
        %v2797 = vadd.f32 0.0, %v2796
        %v2798 = vpop.f32.mrf.mxu0
        %v2799 = vpop.f32.mrf.mxu0
        %v2800 = vadd.f32 0.0, %v2799
        %v2801 = vpop.f32.mrf.mxu0
        %2802 = vmatprep.mubr.bf16.mxu0 0
        %2803 = vmatmul.mubr.bf16.gmra.mxu0 %v586
        %v2804 = vpop.f32.mrf.mxu0
        %v2805 = vadd.f32 0.0, %v2804
        %v2806 = vpop.f32.mrf.mxu0
        %v2807 = vpop.f32.mrf.mxu0
        %v2808 = vadd.f32 0.0, %v2807
        %v2809 = vpop.f32.mrf.mxu0
        %2810 = vmatprep.mubr.bf16.mxu0 0
        %2811 = vmatmul.mubr.bf16.gmra.mxu0 %v589
        %v2812 = vpop.f32.mrf.mxu0
        %v2813 = vadd.f32 0.0, %v2812
        %v2814 = vpop.f32.mrf.mxu0
        %v2815 = vpop.f32.mrf.mxu0
        %v2816 = vadd.f32 0.0, %v2815
        %v2817 = vpop.f32.mrf.mxu0
        %2818 = vmatprep.mubr.bf16.mxu0 0
        %2819 = vmatmul.mubr.bf16.gmra.mxu0 %v592
        %v2820 = vpop.f32.mrf.mxu0
        %v2821 = vadd.f32 0.0, %v2820
        %v2822 = vpop.f32.mrf.mxu0
        %v2823 = vpop.f32.mrf.mxu0
        %v2824 = vadd.f32 0.0, %v2823
        %v2825 = vpop.f32.mrf.mxu0
        %2826 = vmatprep.mubr.bf16.mxu0 0
        %2827 = vmatmul.mubr.bf16.gmra.mxu0 %v595
        %v2828 = vpop.f32.mrf.mxu0
        %v2829 = vadd.f32 0.0, %v2828
        %v2830 = vpop.f32.mrf.mxu0
        %v2831 = vpop.f32.mrf.mxu0
        %v2832 = vadd.f32 0.0, %v2831
        %v2833 = vpop.f32.mrf.mxu0
        %2834 = vmatprep.mubr.bf16.mxu0 0
        %2835 = vmatmul.mubr.bf16.gmra.mxu0 %v598
        %v2836 = vpop.f32.mrf.mxu0
        %v2837 = vadd.f32 0.0, %v2836
        %v2838 = vpop.f32.mrf.mxu0
        %v2839 = vpop.f32.mrf.mxu0
        %v2840 = vadd.f32 0.0, %v2839
        %v2841 = vpop.f32.mrf.mxu0
        %2842 = vmatprep.mubr.bf16.mxu0 0
        %2843 = vmatmul.mubr.bf16.gmra.mxu0 %v601
        %v2844 = vpop.f32.mrf.mxu0
        %v2845 = vadd.f32 0.0, %v2844
        %v2846 = vpop.f32.mrf.mxu0
        %v2847 = vpop.f32.mrf.mxu0
        %v2848 = vadd.f32 0.0, %v2847
        %v2849 = vpop.f32.mrf.mxu0
        %2850 = vmatprep.mubr.bf16.mxu0 0
        %2851 = vmatmul.mubr.bf16.gmra.mxu0 %v604
        %v2852 = vpop.f32.mrf.mxu0
        %v2853 = vadd.f32 0.0, %v2852
        %v2854 = vpop.f32.mrf.mxu0
        %v2855 = vpop.f32.mrf.mxu0
        %v2856 = vadd.f32 0.0, %v2855
        %v2857 = vpop.f32.mrf.mxu0
        %2858 = vmatprep.mubr.bf16.mxu0 0
        %2859 = vmatmul.mubr.bf16.gmra.mxu0 %v607
        %v2860 = vpop.f32.mrf.mxu0
        %v2861 = vadd.f32 0.0, %v2860
        %v2862 = vpop.f32.mrf.mxu0
        %v2863 = vpop.f32.mrf.mxu0
        %v2864 = vadd.f32 0.0, %v2863
        %v2865 = vpop.f32.mrf.mxu0
        %2866 = vdwg.mxu0
        %v2883 = vunpack.c.l.b16 %v2723
        %v2884 = vunpack.c.l.b16 %v2724
        %v2885 = vunpack.c.l.b16 %v2725
        %v2886 = vunpack.c.l.b16 %v2726
        %v2887 = vunpack.c.l.b16 %v2727
        %v2888 = vunpack.c.l.b16 %v2728
        %v2889 = vunpack.c.l.b16 %v2729
        %v2890 = vunpack.c.l.b16 %v2730
        %v2891 = vunpack.c.l.b16 %v2731
        %v2892 = vunpack.c.l.b16 %v2732
        %v2893 = vunpack.c.l.b16 %v2733
        %v2894 = vunpack.c.l.b16 %v2734
        %v2895 = vunpack.c.l.b16 %v2735
        %v2896 = vunpack.c.l.b16 %v2736
        %v2897 = vunpack.c.l.b16 %v2737
        %v2898 = vunpack.c.l.b16 %v2738
        %v2899 = vpack.c.b16 %v2884, %v2883
        %v2900 = vpack.c.b16 %v2886, %v2885
        %v2901 = vpack.c.b16 %v2888, %v2887
        %v2902 = vpack.c.b16 %v2890, %v2889
        %v2903 = vpack.c.b16 %v2892, %v2891
        %v2904 = vpack.c.b16 %v2894, %v2893
        %v2905 = vpack.c.b16 %v2896, %v2895
        %v2906 = vpack.c.b16 %v2898, %v2897
        %2915 = vmatprep.subr.bf16.mxu0 0
        %2916 = vmatpush1.bf16.msra.mxu0 %v2906
        %2917 = vmatprep.subr.bf16.mxu0 0
        %2918 = vmatpush1.bf16.msra.mxu0 %v2905
        %2919 = vmatprep.subr.bf16.mxu0 0
        %2920 = vmatpush1.bf16.msra.mxu0 %v2904
        %2921 = vmatprep.subr.bf16.mxu0 0
        %2922 = vmatpush1.bf16.msra.mxu0 %v2903
        %2923 = vmatprep.subr.bf16.mxu0 0
        %2924 = vmatpush1.bf16.msra.mxu0 %v2902
        %2925 = vmatprep.subr.bf16.mxu0 0
        %2926 = vmatpush1.bf16.msra.mxu0 %v2901
        %2927 = vmatprep.subr.bf16.mxu0 0
        %2928 = vmatpush1.bf16.msra.mxu0 %v2900
        %2929 = vmatprep.subr.bf16.mxu0 0
        %2930 = vmatpush1.bf16.msra.mxu0 %v2899
        %2931 = vmatprep.subr.bf16.mxu0 0
        %2932 = vmatpush2.bf16.msra.mxu0 0
        %2933 = vmatprep.subr.bf16.mxu0 0
        %2934 = vmatpush2.bf16.msra.mxu0 0
        %2935 = vmatprep.subr.bf16.mxu0 0
        %2936 = vmatpush2.bf16.msra.mxu0 0
        %2937 = vmatprep.subr.bf16.mxu0 0
        %2938 = vmatpush2.bf16.msra.mxu0 0
        %2939 = vmatprep.subr.bf16.mxu0 0
        %2940 = vmatpush2.bf16.msra.mxu0 0
        %2941 = vmatprep.subr.bf16.mxu0 0
        %2942 = vmatpush2.bf16.msra.mxu0 0
        %2943 = vmatprep.subr.bf16.mxu0 0
        %2944 = vmatpush2.bf16.msra.mxu0 0
        %2945 = vmatprep.subr.bf16.mxu0 0
        %2946 = vmatpush2.bf16.msra.mxu0 0
        %2947 = vmatprep.mubr.bf16.mxu0 0
        %2948 = vmatmul.mubr.bf16.gmra.mxu0 %v2713
        %v2949 = vpop.f32.mrf.mxu0
        %v2950 = vadd.f32 %v2789, %v2949
        %v2951 = vpop.f32.mrf.mxu0
        %v2952 = vpop.f32.mrf.mxu0
        %v2953 = vadd.f32 %v2792, %v2952
        %v2954 = vpop.f32.mrf.mxu0
        %2955 = vmatprep.mubr.bf16.mxu0 0
        %2956 = vmatmul.mubr.bf16.gmra.mxu0 %v2714
        %v2957 = vpop.f32.mrf.mxu0
        %v2958 = vadd.f32 %v2797, %v2957
        %v2959 = vpop.f32.mrf.mxu0
        %v2960 = vpop.f32.mrf.mxu0
        %v2961 = vadd.f32 %v2800, %v2960
        %v2962 = vpop.f32.mrf.mxu0
        %2963 = vmatprep.mubr.bf16.mxu0 0
        %2964 = vmatmul.mubr.bf16.gmra.mxu0 %v2715
        %v2965 = vpop.f32.mrf.mxu0
        %v2966 = vadd.f32 %v2805, %v2965
        %v2967 = vpop.f32.mrf.mxu0
        %v2968 = vpop.f32.mrf.mxu0
        %v2969 = vadd.f32 %v2808, %v2968
        %v2970 = vpop.f32.mrf.mxu0
        %2971 = vmatprep.mubr.bf16.mxu0 0
        %2972 = vmatmul.mubr.bf16.gmra.mxu0 %v2716
        %v2973 = vpop.f32.mrf.mxu0
        %v2974 = vadd.f32 %v2813, %v2973
        %v2975 = vpop.f32.mrf.mxu0
        %v2976 = vpop.f32.mrf.mxu0
        %v2977 = vadd.f32 %v2816, %v2976
        %v2978 = vpop.f32.mrf.mxu0
        %2979 = vmatprep.mubr.bf16.mxu0 0
        %2980 = vmatmul.mubr.bf16.gmra.mxu0 %v2717
        %v2981 = vpop.f32.mrf.mxu0
        %v2982 = vadd.f32 %v2821, %v2981
        %v2983 = vpop.f32.mrf.mxu0
        %v2984 = vpop.f32.mrf.mxu0
        %v2985 = vadd.f32 %v2824, %v2984
        %v2986 = vpop.f32.mrf.mxu0
        %2987 = vmatprep.mubr.bf16.mxu0 0
        %2988 = vmatmul.mubr.bf16.gmra.mxu0 %v2718
        %v2989 = vpop.f32.mrf.mxu0
        %v2990 = vadd.f32 %v2829, %v2989
        %v2991 = vpop.f32.mrf.mxu0
        %v2992 = vpop.f32.mrf.mxu0
        %v2993 = vadd.f32 %v2832, %v2992
        %v2994 = vpop.f32.mrf.mxu0
        %2995 = vmatprep.mubr.bf16.mxu0 0
        %2996 = vmatmul.mubr.bf16.gmra.mxu0 %v2719
        %v2997 = vpop.f32.mrf.mxu0
        %v2998 = vadd.f32 %v2837, %v2997
        %v2999 = vpop.f32.mrf.mxu0
        %v3000 = vpop.f32.mrf.mxu0
        %v3001 = vadd.f32 %v2840, %v3000
        %v3002 = vpop.f32.mrf.mxu0
        %3003 = vmatprep.mubr.bf16.mxu0 0
        %3004 = vmatmul.mubr.bf16.gmra.mxu0 %v2720
        %v3005 = vpop.f32.mrf.mxu0
        %v3006 = vadd.f32 %v2845, %v3005
        %v3007 = vpop.f32.mrf.mxu0
        %v3008 = vpop.f32.mrf.mxu0
        %v3009 = vadd.f32 %v2848, %v3008
        %v3010 = vpop.f32.mrf.mxu0
        %3011 = vmatprep.mubr.bf16.mxu0 0
        %3012 = vmatmul.mubr.bf16.gmra.mxu0 %v2721
        %v3013 = vpop.f32.mrf.mxu0
        %v3014 = vadd.f32 %v2853, %v3013
        %v3015 = vpop.f32.mrf.mxu0
        %v3016 = vpop.f32.mrf.mxu0
        %v3017 = vadd.f32 %v2856, %v3016
        %v3018 = vpop.f32.mrf.mxu0
        %3019 = vmatprep.mubr.bf16.mxu0 0
        %3020 = vmatmul.mubr.bf16.gmra.mxu0 %v2722
        %v3021 = vpop.f32.mrf.mxu0
        %v3022 = vadd.f32 %v2861, %v3021
        %v3023 = vpop.f32.mrf.mxu0
        %v3024 = vpop.f32.mrf.mxu0
        %v3025 = vadd.f32 %v2864, %v3024
        %v3026 = vpop.f32.mrf.mxu0
        %3027 = vdwg.mxu0
        %v3028 = vld [vmem:[%s11] sm:$0x1]
        %v3030 = vlaneseq
        %v3031 = vshrl.u32 %v3030, 7
        %v3032 = vsub.s32 0, %v3031
        %v3033 = vrot.slane %v3028, %v3032
        %v3035 = vadd.f32 %v2950, %v3033
        %v3036 = vadd.f32 %v2953, %v3033
        %v3037 = vadd.f32 %v2958, %v3033
        %v3038 = vadd.f32 %v2961, %v3033
        %v3039 = vadd.f32 %v2966, %v3033
        %v3040 = vadd.f32 %v2969, %v3033
        %v3041 = vadd.f32 %v2974, %v3033
        %v3042 = vadd.f32 %v2977, %v3033
        %v3043 = vadd.f32 %v2982, %v3033
        %v3044 = vadd.f32 %v2985, %v3033
        %v3045 = vadd.f32 %v2990, %v3033
        %v3046 = vadd.f32 %v2993, %v3033
        %v3047 = vadd.f32 %v2998, %v3033
        %v3048 = vadd.f32 %v3001, %v3033
        %v3049 = vadd.f32 %v3006, %v3033
        %v3050 = vadd.f32 %v3009, %v3033
        %v3051 = vadd.f32 %v3014, %v3033
        %v3052 = vadd.f32 %v3017, %v3033
        %v3053 = vadd.f32 %v3022, %v3033
        %v3054 = vadd.f32 %v3025, %v3033
        %v3055 = vmax.f32 %v3035, 0.0
        %v3056 = vmax.f32 %v3036, 0.0
        %v3057 = vmax.f32 %v3037, 0.0
        %v3058 = vmax.f32 %v3038, 0.0
        %v3059 = vmax.f32 %v3039, 0.0
        %v3060 = vmax.f32 %v3040, 0.0
        %v3061 = vmax.f32 %v3041, 0.0
        %v3062 = vmax.f32 %v3042, 0.0
        %v3063 = vmax.f32 %v3043, 0.0
        %v3064 = vmax.f32 %v3044, 0.0
        %v3065 = vmax.f32 %v3045, 0.0
        %v3066 = vmax.f32 %v3046, 0.0
        %v3067 = vmax.f32 %v3047, 0.0
        %v3068 = vmax.f32 %v3048, 0.0
        %v3069 = vmax.f32 %v3049, 0.0
        %v3070 = vmax.f32 %v3050, 0.0
        %v3071 = vmax.f32 %v3051, 0.0
        %v3072 = vmax.f32 %v3052, 0.0
        %v3073 = vmax.f32 %v3053, 0.0
        %v3074 = vmax.f32 %v3054, 0.0
        %v3075 = vpack.c.bf16 %v3056, %v3055
        %v3076 = vpack.c.bf16 %v3058, %v3057
        %v3077 = vpack.c.bf16 %v3060, %v3059
        %v3078 = vpack.c.bf16 %v3062, %v3061
        %v3079 = vpack.c.bf16 %v3064, %v3063
        %v3080 = vpack.c.bf16 %v3066, %v3065
        %v3081 = vpack.c.bf16 %v3068, %v3067
        %v3082 = vpack.c.bf16 %v3070, %v3069
        %v3083 = vpack.c.bf16 %v3072, %v3071
        %v3084 = vpack.c.bf16 %v3074, %v3073
        %v3085 = vld [vmem:[%s12] sm:$0xf]
        %v3086 = vld [vmem:[%s12 + $0x4] sm:$0xf]
        %v3087 = vld [vmem:[%s12 + $0x8] sm:$0xf]
        %v3088 = vld [vmem:[%s12 + $0xc] sm:$0xf]
        %v3089 = vld [vmem:[%s12 + $0x10] sm:$0xf]
        %v3090 = vld [vmem:[%s12 + $0x14] sm:$0xf]
        %v3091 = vld [vmem:[%s12 + $0x18] sm:$0xf]
        %v3092 = vld [vmem:[%s12 + $0x1c] sm:$0xf]
        %v3093 = vld [vmem:[%s12 + $0x20] sm:$0xf]
        %v3094 = vld [vmem:[%s12 + $0x24] sm:$0xf]
        %v3095 = vld [vmem:[%s12 + $0x28] sm:$0xf]
        %v3096 = vld [vmem:[%s12 + $0x2c] sm:$0xf]
        %v3097 = vld [vmem:[%s12 + $0x30] sm:$0xf]
        %v3098 = vld [vmem:[%s12 + $0x34] sm:$0xf]
        %v3099 = vld [vmem:[%s12 + $0x38] sm:$0xf]
        %v3100 = vld [vmem:[%s12 + $0x3c] sm:$0xf]
        %v3101 = vld [vmem:[%s13] sm:$0x1]
        %v3103 = vlaneseq
        %v3104 = vshrl.u32 %v3103, 7
        %v3105 = vsub.s32 0, %v3104
        %v3106 = vrot.slane %v3101, %v3105
        %v3124 = vunpack.c.l.b16 %v3085
        %v3125 = vunpack.c.l.b16 %v3086
        %v3126 = vunpack.c.l.b16 %v3087
        %v3127 = vunpack.c.l.b16 %v3088
        %v3128 = vunpack.c.l.b16 %v3089
        %v3129 = vunpack.c.l.b16 %v3090
        %v3130 = vunpack.c.l.b16 %v3091
        %v3131 = vunpack.c.l.b16 %v3092
        %v3132 = vunpack.c.l.b16 %v3093
        %v3133 = vunpack.c.l.b16 %v3094
        %v3134 = vunpack.c.l.b16 %v3095
        %v3135 = vunpack.c.l.b16 %v3096
        %v3136 = vunpack.c.l.b16 %v3097
        %v3137 = vunpack.c.l.b16 %v3098
        %v3138 = vunpack.c.l.b16 %v3099
        %v3139 = vunpack.c.l.b16 %v3100
        %v3140 = vpack.c.b16 %v3125, %v3124
        %v3141 = vpack.c.b16 %v3127, %v3126
        %v3142 = vpack.c.b16 %v3129, %v3128
        %v3143 = vpack.c.b16 %v3131, %v3130
        %v3144 = vpack.c.b16 %v3133, %v3132
        %v3145 = vpack.c.b16 %v3135, %v3134
        %v3146 = vpack.c.b16 %v3137, %v3136
        %v3147 = vpack.c.b16 %v3139, %v3138
        %3156 = vmatprep.subr.bf16.mxu0 0
        %3157 = vmatpush1.bf16.msra.mxu0 %v3147
        %3158 = vmatprep.subr.bf16.mxu0 0
        %3159 = vmatpush1.bf16.msra.mxu0 %v3146
        %3160 = vmatprep.subr.bf16.mxu0 0
        %3161 = vmatpush1.bf16.msra.mxu0 %v3145
        %3162 = vmatprep.subr.bf16.mxu0 0
        %3163 = vmatpush1.bf16.msra.mxu0 %v3144
        %3164 = vmatprep.subr.bf16.mxu0 0
        %3165 = vmatpush1.bf16.msra.mxu0 %v3143
        %3166 = vmatprep.subr.bf16.mxu0 0
        %3167 = vmatpush1.bf16.msra.mxu0 %v3142
        %3168 = vmatprep.subr.bf16.mxu0 0
        %3169 = vmatpush1.bf16.msra.mxu0 %v3141
        %3170 = vmatprep.subr.bf16.mxu0 0
        %3171 = vmatpush1.bf16.msra.mxu0 %v3140
        %3172 = vmatprep.subr.bf16.mxu0 0
        %3173 = vmatpush2.bf16.msra.mxu0 0
        %3174 = vmatprep.subr.bf16.mxu0 0
        %3175 = vmatpush2.bf16.msra.mxu0 0
        %3176 = vmatprep.subr.bf16.mxu0 0
        %3177 = vmatpush2.bf16.msra.mxu0 0
        %3178 = vmatprep.subr.bf16.mxu0 0
        %3179 = vmatpush2.bf16.msra.mxu0 0
        %3180 = vmatprep.subr.bf16.mxu0 0
        %3181 = vmatpush2.bf16.msra.mxu0 0
        %3182 = vmatprep.subr.bf16.mxu0 0
        %3183 = vmatpush2.bf16.msra.mxu0 0
        %3184 = vmatprep.subr.bf16.mxu0 0
        %3185 = vmatpush2.bf16.msra.mxu0 0
        %3186 = vmatprep.subr.bf16.mxu0 0
        %3187 = vmatpush2.bf16.msra.mxu0 0
        %3188 = vmatprep.mubr.bf16.mxu0 0
        %3189 = vmatmul.mubr.bf16.gmra.mxu0 %v3075
        %v3190 = vpop.f32.mrf.mxu0
        %v3191 = vadd.f32 %v3106, %v3190
        %v3192 = vpop.f32.mrf.mxu0
        %v3193 = vpop.f32.mrf.mxu0
        %v3194 = vadd.f32 %v3106, %v3193
        %v3195 = vpop.f32.mrf.mxu0
        %3196 = vmatprep.mubr.bf16.mxu0 0
        %3197 = vmatmul.mubr.bf16.gmra.mxu0 %v3076
        %v3198 = vpop.f32.mrf.mxu0
        %v3199 = vadd.f32 %v3106, %v3198
        %v3200 = vpop.f32.mrf.mxu0
        %v3201 = vpop.f32.mrf.mxu0
        %v3202 = vadd.f32 %v3106, %v3201
        %v3203 = vpop.f32.mrf.mxu0
        %3204 = vmatprep.mubr.bf16.mxu0 0
        %3205 = vmatmul.mubr.bf16.gmra.mxu0 %v3077
        %v3206 = vpop.f32.mrf.mxu0
        %v3207 = vadd.f32 %v3106, %v3206
        %v3208 = vpop.f32.mrf.mxu0
        %v3209 = vpop.f32.mrf.mxu0
        %v3210 = vadd.f32 %v3106, %v3209
        %v3211 = vpop.f32.mrf.mxu0
        %3212 = vmatprep.mubr.bf16.mxu0 0
        %3213 = vmatmul.mubr.bf16.gmra.mxu0 %v3078
        %v3214 = vpop.f32.mrf.mxu0
        %v3215 = vadd.f32 %v3106, %v3214
        %v3216 = vpop.f32.mrf.mxu0
        %v3217 = vpop.f32.mrf.mxu0
        %v3218 = vadd.f32 %v3106, %v3217
        %v3219 = vpop.f32.mrf.mxu0
        %3220 = vmatprep.mubr.bf16.mxu0 0
        %3221 = vmatmul.mubr.bf16.gmra.mxu0 %v3079
        %v3222 = vpop.f32.mrf.mxu0
        %v3223 = vadd.f32 %v3106, %v3222
        %v3224 = vpop.f32.mrf.mxu0
        %v3225 = vpop.f32.mrf.mxu0
        %v3226 = vadd.f32 %v3106, %v3225
        %v3227 = vpop.f32.mrf.mxu0
        %3228 = vmatprep.mubr.bf16.mxu0 0
        %3229 = vmatmul.mubr.bf16.gmra.mxu0 %v3080
        %v3230 = vpop.f32.mrf.mxu0
        %v3231 = vadd.f32 %v3106, %v3230
        %v3232 = vpop.f32.mrf.mxu0
        %v3233 = vpop.f32.mrf.mxu0
        %v3234 = vadd.f32 %v3106, %v3233
        %v3235 = vpop.f32.mrf.mxu0
        %3236 = vmatprep.mubr.bf16.mxu0 0
        %3237 = vmatmul.mubr.bf16.gmra.mxu0 %v3081
        %v3238 = vpop.f32.mrf.mxu0
        %v3239 = vadd.f32 %v3106, %v3238
        %v3240 = vpop.f32.mrf.mxu0
        %v3241 = vpop.f32.mrf.mxu0
        %v3242 = vadd.f32 %v3106, %v3241
        %v3243 = vpop.f32.mrf.mxu0
        %3244 = vmatprep.mubr.bf16.mxu0 0
        %3245 = vmatmul.mubr.bf16.gmra.mxu0 %v3082
        %v3246 = vpop.f32.mrf.mxu0
        %v3247 = vadd.f32 %v3106, %v3246
        %v3248 = vpop.f32.mrf.mxu0
        %v3249 = vpop.f32.mrf.mxu0
        %v3250 = vadd.f32 %v3106, %v3249
        %v3251 = vpop.f32.mrf.mxu0
        %3252 = vmatprep.mubr.bf16.mxu0 0
        %3253 = vmatmul.mubr.bf16.gmra.mxu0 %v3083
        %v3254 = vpop.f32.mrf.mxu0
        %v3255 = vadd.f32 %v3106, %v3254
        %v3256 = vpop.f32.mrf.mxu0
        %v3257 = vpop.f32.mrf.mxu0
        %v3258 = vadd.f32 %v3106, %v3257
        %v3259 = vpop.f32.mrf.mxu0
        %3260 = vmatprep.mubr.bf16.mxu0 0
        %3261 = vmatmul.mubr.bf16.gmra.mxu0 %v3084
        %v3262 = vpop.f32.mrf.mxu0
        %v3263 = vadd.f32 %v3106, %v3262
        %v3264 = vpop.f32.mrf.mxu0
        %v3265 = vpop.f32.mrf.mxu0
        %v3266 = vadd.f32 %v3106, %v3265
        %v3267 = vpop.f32.mrf.mxu0
        %3268 = vdwg.mxu0
        %v3269 = vlaneseq
        %v3270 = vand.u32 %v3269, 127
        %vm3271 = vcmp.eq.s32.totalorder %v3270, 3
        %3273 = vset.pattern.permute.xlu0 0
        %3274 = vperm.xlu0 %3273, %v2509
        %v3275 = vpop.permute.xlu0 %3274
        %3278 = vset.pattern.permute.xlu0 0
        %3279 = vperm.xlu0 %3278, %v2510
        %v3280 = vpop.permute.xlu0 %3279
        %3283 = vset.pattern.permute.xlu0 0
        %3284 = vperm.xlu0 %3283, %v2511
        %v3285 = vpop.permute.xlu0 %3284
        %3288 = vset.pattern.permute.xlu0 0
        %3289 = vperm.xlu0 %3288, %v2512
        %v3290 = vpop.permute.xlu0 %3289
        %3293 = vset.pattern.permute.xlu0 0
        %3294 = vperm.xlu0 %3293, %v2513
        %v3295 = vpop.permute.xlu0 %3294
        %3298 = vset.pattern.permute.xlu0 0
        %3299 = vperm.xlu0 %3298, %v2514
        %v3300 = vpop.permute.xlu0 %3299
        %3303 = vset.pattern.permute.xlu0 0
        %3304 = vperm.xlu0 %3303, %v2515
        %v3305 = vpop.permute.xlu0 %3304
        %3308 = vset.pattern.permute.xlu0 0
        %3309 = vperm.xlu0 %3308, %v2516
        %v3310 = vpop.permute.xlu0 %3309
        %3313 = vset.pattern.permute.xlu0 0
        %3314 = vperm.xlu0 %3313, %v2517
        %v3315 = vpop.permute.xlu0 %3314
        %3318 = vset.pattern.permute.xlu0 0
        %3319 = vperm.xlu0 %3318, %v2518
        %v3320 = vpop.permute.xlu0 %3319
        %3323 = vset.pattern.permute.xlu0 0
        %3324 = vperm.xlu0 %3323, %v2519
        %v3325 = vpop.permute.xlu0 %3324
        %3328 = vset.pattern.permute.xlu0 0
        %3329 = vperm.xlu0 %3328, %v2520
        %v3330 = vpop.permute.xlu0 %3329
        %3333 = vset.pattern.permute.xlu0 0
        %3334 = vperm.xlu0 %3333, %v2521
        %v3335 = vpop.permute.xlu0 %3334
        %3338 = vset.pattern.permute.xlu0 0
        %3339 = vperm.xlu0 %3338, %v2522
        %v3340 = vpop.permute.xlu0 %3339
        %3343 = vset.pattern.permute.xlu0 0
        %3344 = vperm.xlu0 %3343, %v2523
        %v3345 = vpop.permute.xlu0 %3344
        %3348 = vset.pattern.permute.xlu0 0
        %3349 = vperm.xlu0 %3348, %v2524
        %v3350 = vpop.permute.xlu0 %3349
        %3353 = vset.pattern.permute.xlu0 0
        %3354 = vperm.xlu0 %3353, %v2525
        %v3355 = vpop.permute.xlu0 %3354
        %3358 = vset.pattern.permute.xlu0 0
        %3359 = vperm.xlu0 %3358, %v2526
        %v3360 = vpop.permute.xlu0 %3359
        %3363 = vset.pattern.permute.xlu0 0
        %3364 = vperm.xlu0 %3363, %v2527
        %v3365 = vpop.permute.xlu0 %3364
        %3368 = vset.pattern.permute.xlu0 0
        %3369 = vperm.xlu0 %3368, %v2528
        %v3370 = vpop.permute.xlu0 %3369
        %v3372 = vsel %vm3271, %v3275, %v3191
        %v3373 = vsel %vm3271, %v3280, %v3194
        %v3374 = vsel %vm3271, %v3285, %v3199
        %v3375 = vsel %vm3271, %v3290, %v3202
        %v3376 = vsel %vm3271, %v3295, %v3207
        %v3377 = vsel %vm3271, %v3300, %v3210
        %v3378 = vsel %vm3271, %v3305, %v3215
        %v3379 = vsel %vm3271, %v3310, %v3218
        %v3380 = vsel %vm3271, %v3315, %v3223
        %v3381 = vsel %vm3271, %v3320, %v3226
        %v3382 = vsel %vm3271, %v3325, %v3231
        %v3383 = vsel %vm3271, %v3330, %v3234
        %v3384 = vsel %vm3271, %v3335, %v3239
        %v3385 = vsel %vm3271, %v3340, %v3242
        %v3386 = vsel %vm3271, %v3345, %v3247
        %v3387 = vsel %vm3271, %v3350, %v3250
        %v3388 = vsel %vm3271, %v3355, %v3255
        %v3389 = vsel %vm3271, %v3360, %v3258
        %v3390 = vsel %vm3271, %v3365, %v3263
        %v3391 = vsel %vm3271, %v3370, %v3266
        %vm3392 = vcmask 31744
        %3393 = vst.msk [vmem:[%s486] sm:$0xff] %vm3392, %v3372
        %3394 = vst.msk [vmem:[%s486 + $0x8] sm:$0xff] %vm3392, %v3373
        %3395 = vst.msk [vmem:[%s486 + $0x10] sm:$0xff] %vm3392, %v3374
        %3396 = vst.msk [vmem:[%s486 + $0x18] sm:$0xff] %vm3392, %v3375
        %3397 = vst.msk [vmem:[%s486 + $0x20] sm:$0xff] %vm3392, %v3376
        %3398 = vst.msk [vmem:[%s486 + $0x28] sm:$0xff] %vm3392, %v3377
        %3399 = vst.msk [vmem:[%s486 + $0x30] sm:$0xff] %vm3392, %v3378
        %3400 = vst.msk [vmem:[%s486 + $0x38] sm:$0xff] %vm3392, %v3379
        %3401 = vst.msk [vmem:[%s486 + $0x40] sm:$0xff] %vm3392, %v3380
        %3402 = vst.msk [vmem:[%s486 + $0x48] sm:$0xff] %vm3392, %v3381
        %3403 = vst.msk [vmem:[%s486 + $0x50] sm:$0xff] %vm3392, %v3382
        %3404 = vst.msk [vmem:[%s486 + $0x58] sm:$0xff] %vm3392, %v3383
        %3405 = vst.msk [vmem:[%s486 + $0x60] sm:$0xff] %vm3392, %v3384
        %3406 = vst.msk [vmem:[%s486 + $0x68] sm:$0xff] %vm3392, %v3385
        %3407 = vst.msk [vmem:[%s486 + $0x70] sm:$0xff] %vm3392, %v3386
        %3408 = vst.msk [vmem:[%s486 + $0x78] sm:$0xff] %vm3392, %v3387
        %3409 = vst.msk [vmem:[%s486 + $0x80] sm:$0xff] %vm3392, %v3388
        %3410 = vst.msk [vmem:[%s486 + $0x88] sm:$0xff] %vm3392, %v3389
        %3411 = vst.msk [vmem:[%s486 + $0x90] sm:$0xff] %vm3392, %v3390
        %3412 = vst.msk [vmem:[%s486 + $0x98] sm:$0xff] %vm3392, %v3391
        %s3413 = smul.u32 20, %s28
        %p3414 = scmp.lt.s32.totalorder %s3413, 39
        %s3415 = scalar_select %p3414, %s3413, 39
        %s3416 = smul.addr %s3415, 8
        %s3417 = scalar_lea.vmem %s14, %s3416
        // Predicated region
        $region81: #{tpu_custom_call.1} parent=75 // pred_check
          %p3418 = pneg %p345
        $region82: #{tpu_custom_call.1} parent=75 // pred_check_branch
          %3420 = sbr.rel (%p3418) target = $region84
        $region83: #{tpu_custom_call.1} parent=75 // pred_region
          %s3421 = smul.u32 20, %s28
        $region84: #{tpu_custom_call.1} parent=75 // pred_fallthru
          _
      $region76: #{tpu_custom_call.1} parent=5 // pred_fallthru
        _
      %p3422 = scmp.le.s32.totalorder 2, %s23
      // Predicated region
      $region85: #{tpu_custom_call.1} parent=5 // pred_check
        %p3423 = pneg %p3422
      $region86: #{tpu_custom_call.1} parent=5 // pred_check_branch
        %3425 = sbr.rel (%p3423) target = $region88
      $region87: #{tpu_custom_call.1} parent=5 // pred_region
        %s3426 = ssub.s32 %s23, 2
        // Predicated region
        $region89: #{tpu_custom_call.1} parent=87 // pred_check
          %p3427 = pneg %p351
        $region90: #{tpu_custom_call.1} parent=87 // pred_check_branch
          %3429 = sbr.rel (%p3427) target = $region92
        $region91: #{tpu_custom_call.1} parent=87 // pred_region
          %s3430 = smul.u32 20, %s29
          %p3431 = scmp.lt.s32.totalorder %s3430, 39
          %s3432 = scalar_select %p3431, %s3430, 39
          %s3433 = smul.addr %s3432, 8
          %s3434 = scalar_lea.vmem %s14, %s3433
        $region92: #{tpu_custom_call.1} parent=87 // pred_fallthru
          _
      $region88: #{tpu_custom_call.1} parent=5 // pred_fallthru
        _
    $region6: #{tpu_custom_call.1} parent=1 // loop_footer
      %s27 = sadd.s32 1, %s23
    $region7: #{tpu_custom_call.1} parent=1 // loop_footer_branch
      %22 = sbr.rel target = $region3
    $region8: #{tpu_custom_call.1} parent=1 // loop_exit
      _
    %3435 = vsyncpa [#allocation4], 1
    %s3436 = scalar_lea.sflag [#allocation4], 1
    %3437 = vsyncpa %s3436, 1

</llo_original>
